<compile_context>
chip_gen: v6e
topology: v6e:2x2x1
jax: 0.10.0
libtpu: 0.0.40
codegen_flags: <defaults>
</compile_context>

<pallas_src>
import functools

import jax
import jax.numpy as jnp
from jax import lax
from jax.experimental import pallas as pl
from jax.experimental.pallas import tpu as pltpu

EPS = 1e-5
NEG_SLOPE = 0.01   # F.leaky_relu default
LANE = 128


def _round_up(x, m):
    return ((x + m - 1) // m) * m


def _conv_stats_kernel(xa_ref, xb_ref, xc_ref, w_ref, y_ref, mom_ref, *,
                       W, Wo, HoW, HoW_pad, RB, Cout):
    """Pass 1: valid 3x3x3 conv for one (n, do) slice + per-(n, do) partial moments.

    xa/xb/xc_ref : (HWp, Cin)      input depth slices d, d+1, d+2 (flattened H*W rows, zero-padded)
    w_ref        : (27, Cin, Cpad) weights, tap-major, Cout zero-padded to a 128-lane multiple
    y_ref        : (HoW_pad, Cout) conv output rows (W-strided; cols wo>=Wo and rows>=HoW are garbage)
    mom_ref      : (2, Cout)       this slice's [sum, sum_sq] over valid output positions
    """
    nblk = HoW_pad // RB
    x_refs = (xa_ref, xb_ref, xc_ref)
    Cpad = w_ref.shape[-1]

    def body(b, carry):
        s1, s2 = carry
        row0 = pl.multiple_of(b * RB, 8)

        # 27-tap accumulation; each tap is fed directly from a dynamic ref slice so the
        # only large live value is the bounded (RB, Cpad) accumulator (no full-slab SSA).
        acc = jnp.zeros((RB, Cpad), jnp.float32)
        for kd in range(3):
            x_ref = x_refs[kd]
            for kh in range(3):
                for kw in range(3):
                    off = kh * W + kw
                    t = kd * 9 + kh * 3 + kw
                    acc = acc + jnp.dot(x_ref[pl.ds(row0 + off, RB), :], w_ref[t],
                                        preferred_element_type=jnp.float32)
        out_val = acc[:, :Cout]                       # drop padded lanes before any HBM traffic

        # Moments over valid positions only (row < HoW and (row % W) < Wo); the trailing
        # 2 W-columns per row and any padded rows are wrap-around garbage by construction.
        p = row0 + lax.broadcasted_iota(jnp.int32, (RB, 1), 0)
        valid = (p < HoW) & ((p % W) < Wo)
        m = jnp.where(valid, out_val, 0.0)
        s1 = s1 + jnp.sum(m, axis=0, keepdims=True)
        s2 = s2 + jnp.sum(m * m, axis=0, keepdims=True)

        y_ref[pl.ds(row0, RB), :] = out_val
        return s1, s2

    zero = jnp.zeros((1, Cout), jnp.float32)
    s1, s2 = lax.fori_loop(0, nblk, body, (zero, zero))
    mom_ref[...] = jnp.concatenate([s1, s2], axis=0)


def _norm_act_kernel(y_ref, ss_ref, o_ref):
    """Pass 2: per-channel FMA (folded BN) + LeakyReLU on one flat row tile."""
    ss = ss_ref[...]                                   # (2, Cout): row0 scale, row1 shift
    z = y_ref[...] * ss[0:1, :] + ss[1:2, :]
    o_ref[...] = jnp.where(z >= 0, z, NEG_SLOPE * z)


@jax.jit
def conv3_block(x_ncdhw, weight, bias, gamma, beta):
    """Forward pass of Conv3_Block.

    x_ncdhw: (N, Cin, D, H, W)
    weight : (Cout, Cin, 3, 3, 3)   (PyTorch OIDHW)
    bias, gamma, beta: (Cout,)
    returns: (N, Cout, D-2, H-2, W-2)
    """
    N, Cin, D, H, W = x_ncdhw.shape
    Cout = weight.shape[0]
    Do, Ho, Wo = D - 2, H - 2, W - 2
    HoW = Ho * W
    Cpad = _round_up(Cout, LANE)                       # MXU operand lanes only

    # Row-block size for the in-kernel accumulator (bounds vreg live range / spill).
    RB = min(128, _round_up(HoW, 8))
    nblk = -(-HoW // RB)
    HoW_pad = nblk * RB

    # NCDHW -> (N, D, H*W, Cin); zero-pad rows so every shifted window (max off 2W+2)
    # of every row block stays in bounds.
    x = jnp.transpose(x_ncdhw, (0, 2, 3, 4, 1)).astype(jnp.float32)
    x2 = x.reshape(N, D, H * W, Cin)
    HWp = _round_up(max(H * W, HoW_pad + 2 * W + 2), 8)
    x2 = jnp.pad(x2, ((0, 0), (0, 0), (0, HWp - H * W), (0, 0)))

    # (Cout, Cin, kd, kh, kw) -> (27, Cin, Cpad); only the weight is lane-padded.
    w = jnp.transpose(weight, (2, 3, 4, 1, 0)).reshape(27, Cin, Cout).astype(jnp.float32)
    w = jnp.pad(w, ((0, 0), (0, 0), (0, Cpad - Cout)))

    kern1 = functools.partial(_conv_stats_kernel, W=W, Wo=Wo, HoW=HoW,
                              HoW_pad=HoW_pad, RB=RB, Cout=Cout)
    y, mom = pl.pallas_call(
        kern1,
        out_shape=(
            jax.ShapeDtypeStruct((N, Do, HoW_pad, Cout), jnp.float32),   # Cout-wide conv output
            jax.ShapeDtypeStruct((N, Do, 2, Cout), jnp.float32),         # per-(n,d) sum / sumsq
        ),
        grid=(N, Do),
        in_specs=[
            pl.BlockSpec((None, None, HWp, Cin), lambda n, d: (n, d, 0, 0)),
            pl.BlockSpec((None, None, HWp, Cin), lambda n, d: (n, d + 1, 0, 0)),
            pl.BlockSpec((None, None, HWp, Cin), lambda n, d: (n, d + 2, 0, 0)),
            pl.BlockSpec((27, Cin, Cpad), lambda n, d: (0, 0, 0)),
        ],
        out_specs=(
            pl.BlockSpec((None, None, HoW_pad, Cout), lambda n, d: (n, d, 0, 0)),
            pl.BlockSpec((None, None, 2, Cout), lambda n, d: (n, d, 0, 0)),
        ),
        compiler_params=pltpu.CompilerParams(
            dimension_semantics=("parallel", "parallel"),   # no revisit: both axes megacore-shardable
            vmem_limit_bytes=32 * 1024 * 1024,              # per-step footprint is small; v7x-safe
        ),
    )(x2, x2, x2, w)

    # Fold BN into one per-channel scale/shift (tiny host math).  The conv bias cancels
    # under training-mode BN mean subtraction, so it is unused for the forward output.
    del bias
    count = jnp.float32(N * Do * Ho * Wo)
    s = jnp.sum(mom, axis=(0, 1))                      # combine per-(n,d) partial moments
    mean = s[0] / count
    var = jnp.maximum(s[1] / count - mean * mean, 0.0)  # biased variance (training-mode BN)
    scale = gamma.astype(jnp.float32) * lax.rsqrt(var + EPS)
    shift = beta.astype(jnp.float32) - mean * scale
    ss = jnp.stack([scale, shift], axis=0)             # (2, Cout)

    # Pass 2: geometry-independent 1-D streaming over flat rows, written in place of y.
    total_rows = N * Do * HoW_pad
    y_flat = y.reshape(total_rows, Cout)               # merges leading dims only (free)
    rows2 = 8
    for cand in range(min(2048, total_rows) // 8 * 8, 7, -8):
        if total_rows % cand == 0:
            rows2 = cand
            break

    out_flat = pl.pallas_call(
        _norm_act_kernel,
        out_shape=jax.ShapeDtypeStruct((total_rows, Cout), jnp.float32),
        grid=(total_rows // rows2,),
        in_specs=[
            pl.BlockSpec((rows2, Cout), lambda i: (i, 0)),
            pl.BlockSpec((2, Cout), lambda i: (0, 0)),
        ],
        out_specs=pl.BlockSpec((rows2, Cout), lambda i: (i, 0)),
        input_output_aliases={0: 0},                    # reuse y's buffer, no 2nd full HBM alloc
        compiler_params=pltpu.CompilerParams(
            dimension_semantics=("parallel",),
            vmem_limit_bytes=32 * 1024 * 1024,
        ),
    )(y_flat, ss)

    # Epilogue: drop wrap-around W columns / padded rows (no channel padding to move
    # anymore), back to NCDHW for module parity.
    out = out_flat.reshape(N, Do, HoW_pad, Cout)[:, :, :HoW, :]
    out = out.reshape(N, Do, Ho, W, Cout)[:, :, :, :Wo, :]
    return jnp.transpose(out, (0, 4, 1, 2, 3))


def reference(x, weight, bias, gamma, beta):
    """Pure-JAX reference (matches PyTorch Conv3d + training-mode BN + leaky_relu)."""
    y = lax.conv_general_dilated(
        x.astype(jnp.float32), weight.astype(jnp.float32),
        window_strides=(1, 1, 1), padding="VALID",
        dimension_numbers=("NCDHW", "OIDHW", "NCDHW"),
    )
    y = y + bias.reshape(1, -1, 1, 1, 1)
    mean = jnp.mean(y, axis=(0, 2, 3, 4), keepdims=True)
    var = jnp.mean((y - mean) ** 2, axis=(0, 2, 3, 4), keepdims=True)
    y_hat = (y - mean) / jnp.sqrt(var + EPS)
    z = y_hat * gamma.reshape(1, -1, 1, 1, 1) + beta.reshape(1, -1, 1, 1, 1)
    return jnp.where(z >= 0, z, NEG_SLOPE * z)


if __name__ == "__main__":
    # Small shapes: N=2, C_in=4, D=H=W=8, C_out=8
    N, Cin, D, H, W, Cout = 2, 4, 8, 8, 8, 8

    key = jax.random.PRNGKey(0)
    kx, kw, kb, kg, kbeta = jax.random.split(key, 5)

    x = jax.random.normal(kx, (N, Cin, D, H, W), dtype=jnp.float32)
    fan_in = Cin * 27
    weight = jax.random.normal(kw, (Cout, Cin, 3, 3, 3), dtype=jnp.float32) * (1.0 / fan_in) ** 0.5
    bias = jax.random.normal(kb, (Cout,), dtype=jnp.float32) * 0.1
    gamma = 1.0 + 0.1 * jax.random.normal(kg, (Cout,), dtype=jnp.float32)
    beta = 0.1 * jax.random.normal(kbeta, (Cout,), dtype=jnp.float32)

    out = conv3_block(x, weight, bias, gamma, beta)
    out = jax.block_until_ready(out)

    ref = jax.block_until_ready(reference(x, weight, bias, gamma, beta))
    assert out.shape == (N, Cout, D - 2, H - 2, W - 2), out.shape
    assert jnp.allclose(out, ref, atol=1e-4, rtol=1e-4), float(jnp.max(jnp.abs(out - ref)))

    print("KERNEL_OK")
</pallas_src>

<mosaic_0001>
module attributes {stable_mosaic.version = 11 : i64} {
  func.func @_conv_stats_kernel(%arg0: i32, %arg1: i32, %arg2: memref<1x1x72x4xf32, #tpu.memory_space<vmem>>, %arg3: memref<1x1x72x4xf32, #tpu.memory_space<vmem>>, %arg4: memref<1x1x72x4xf32, #tpu.memory_space<vmem>>, %arg5: memref<27x4x128xf32, #tpu.memory_space<vmem>>, %arg6: memref<1x1x48x8xf32, #tpu.memory_space<vmem>>, %arg7: memref<1x1x2x8xf32, #tpu.memory_space<vmem>>) attributes {dimension_semantics = [#tpu.dimension_semantics<parallel>, #tpu.dimension_semantics<parallel>], iteration_bounds = array<i64: 2, 6>, scalar_prefetch = 0 : i64, scratch_operands = 0 : i64, tpu.core_type = #tpu.core_type<tc>, window_params = [{transform_indices = @transform_0, window_bounds = array<i64: 1, 1, 72, 4>}, {transform_indices = @transform_1, window_bounds = array<i64: 1, 1, 72, 4>}, {transform_indices = @transform_2, window_bounds = array<i64: 1, 1, 72, 4>}, {pipeline_mode = #tpu.pipeline_mode<synchronous>, transform_indices = @transform_3, window_bounds = array<i64: 27, 4, 128>}, {transform_indices = @transform_4, window_bounds = array<i64: 1, 1, 48, 8>}, {transform_indices = @transform_5, window_bounds = array<i64: 1, 1, 2, 8>}]} {
    %cst = arith.constant 0.000000e+00 : f32
    %0 = vector.broadcast %cst : f32 to vector<1x8xf32>
    %c0_i32 = arith.constant 0 : i32
    %c48_i32 = arith.constant 48 : i32
    %1 = arith.muli %c0_i32, %c48_i32 : i32
    %2 = tpu.assume_multiple %1, 8 : i32
    %cst_0 = arith.constant 0.000000e+00 : f32
    %3 = vector.broadcast %cst_0 : f32 to vector<48x128xf32>
    %c0_i32_1 = arith.constant 0 : i32
    %4 = arith.addi %2, %c0_i32_1 : i32
    %c0 = arith.constant 0 : index
    %c0_2 = arith.constant 0 : index
    %5 = arith.index_cast %4 : i32 to index
    %c0_3 = arith.constant 0 : index
    %6 = vector.load %arg2[%c0, %c0_2, %5, %c0_3] : memref<1x1x72x4xf32, #tpu.memory_space<vmem>>, vector<1x1x48x4xf32>
    %7 = vector.shape_cast %6 : vector<1x1x48x4xf32> to vector<48x4xf32>
    %c0_4 = arith.constant 0 : index
    %c0_5 = arith.constant 0 : index
    %c0_6 = arith.constant 0 : index
    %8 = vector.load %arg5[%c0_4, %c0_5, %c0_6] : memref<27x4x128xf32, #tpu.memory_space<vmem>>, vector<1x4x128xf32>
    %9 = vector.shape_cast %8 : vector<1x4x128xf32> to vector<4x128xf32>
    %cst_7 = arith.constant dense<0.000000e+00> : vector<48x128xf32>
    %10 = tpu.matmul %7, %9, %cst_7 {dimension_numbers = #tpu.dot_dimension_numbers<[1], [0], [0], [1], [0, 0, 1, 1], [], []>} : vector<48x4xf32>, vector<4x128xf32>, vector<48x128xf32> -> vector<48x128xf32>
    %11 = arith.addf %3, %10 : vector<48x128xf32>
    %c1_i32 = arith.constant 1 : i32
    %12 = arith.addi %2, %c1_i32 : i32
    %c0_8 = arith.constant 0 : index
    %c0_9 = arith.constant 0 : index
    %13 = arith.index_cast %12 : i32 to index
    %c0_10 = arith.constant 0 : index
    %14 = vector.load %arg2[%c0_8, %c0_9, %13, %c0_10] : memref<1x1x72x4xf32, #tpu.memory_space<vmem>>, vector<1x1x48x4xf32>
    %15 = vector.shape_cast %14 : vector<1x1x48x4xf32> to vector<48x4xf32>
    %c1 = arith.constant 1 : index
    %c0_11 = arith.constant 0 : index
    %c0_12 = arith.constant 0 : index
    %16 = vector.load %arg5[%c1, %c0_11, %c0_12] : memref<27x4x128xf32, #tpu.memory_space<vmem>>, vector<1x4x128xf32>
    %17 = vector.shape_cast %16 : vector<1x4x128xf32> to vector<4x128xf32>
    %cst_13 = arith.constant dense<0.000000e+00> : vector<48x128xf32>
    %18 = tpu.matmul %15, %17, %cst_13 {dimension_numbers = #tpu.dot_dimension_numbers<[1], [0], [0], [1], [0, 0, 1, 1], [], []>} : vector<48x4xf32>, vector<4x128xf32>, vector<48x128xf32> -> vector<48x128xf32>
    %19 = arith.addf %11, %18 : vector<48x128xf32>
    %c2_i32 = arith.constant 2 : i32
    %20 = arith.addi %2, %c2_i32 : i32
    %c0_14 = arith.constant 0 : index
    %c0_15 = arith.constant 0 : index
    %21 = arith.index_cast %20 : i32 to index
    %c0_16 = arith.constant 0 : index
    %22 = vector.load %arg2[%c0_14, %c0_15, %21, %c0_16] : memref<1x1x72x4xf32, #tpu.memory_space<vmem>>, vector<1x1x48x4xf32>
    %23 = vector.shape_cast %22 : vector<1x1x48x4xf32> to vector<48x4xf32>
    %c2 = arith.constant 2 : index
    %c0_17 = arith.constant 0 : index
    %c0_18 = arith.constant 0 : index
    %24 = vector.load %arg5[%c2, %c0_17, %c0_18] : memref<27x4x128xf32, #tpu.memory_space<vmem>>, vector<1x4x128xf32>
    %25 = vector.shape_cast %24 : vector<1x4x128xf32> to vector<4x128xf32>
    %cst_19 = arith.constant dense<0.000000e+00> : vector<48x128xf32>
    %26 = tpu.matmul %23, %25, %cst_19 {dimension_numbers = #tpu.dot_dimension_numbers<[1], [0], [0], [1], [0, 0, 1, 1], [], []>} : vector<48x4xf32>, vector<4x128xf32>, vector<48x128xf32> -> vector<48x128xf32>
    %27 = arith.addf %19, %26 : vector<48x128xf32>
    %c8_i32 = arith.constant 8 : i32
    %28 = arith.addi %2, %c8_i32 : i32
    %c0_20 = arith.constant 0 : index
    %c0_21 = arith.constant 0 : index
    %29 = arith.index_cast %28 : i32 to index
    %c0_22 = arith.constant 0 : index
    %30 = vector.load %arg2[%c0_20, %c0_21, %29, %c0_22] : memref<1x1x72x4xf32, #tpu.memory_space<vmem>>, vector<1x1x48x4xf32>
    %31 = vector.shape_cast %30 : vector<1x1x48x4xf32> to vector<48x4xf32>
    %c3 = arith.constant 3 : index
    %c0_23 = arith.constant 0 : index
    %c0_24 = arith.constant 0 : index
    %32 = vector.load %arg5[%c3, %c0_23, %c0_24] : memref<27x4x128xf32, #tpu.memory_space<vmem>>, vector<1x4x128xf32>
    %33 = vector.shape_cast %32 : vector<1x4x128xf32> to vector<4x128xf32>
    %cst_25 = arith.constant dense<0.000000e+00> : vector<48x128xf32>
    %34 = tpu.matmul %31, %33, %cst_25 {dimension_numbers = #tpu.dot_dimension_numbers<[1], [0], [0], [1], [0, 0, 1, 1], [], []>} : vector<48x4xf32>, vector<4x128xf32>, vector<48x128xf32> -> vector<48x128xf32>
    %35 = arith.addf %27, %34 : vector<48x128xf32>
    %c9_i32 = arith.constant 9 : i32
    %36 = arith.addi %2, %c9_i32 : i32
    %c0_26 = arith.constant 0 : index
    %c0_27 = arith.constant 0 : index
    %37 = arith.index_cast %36 : i32 to index
    %c0_28 = arith.constant 0 : index
    %38 = vector.load %arg2[%c0_26, %c0_27, %37, %c0_28] : memref<1x1x72x4xf32, #tpu.memory_space<vmem>>, vector<1x1x48x4xf32>
    %39 = vector.shape_cast %38 : vector<1x1x48x4xf32> to vector<48x4xf32>
    %c4 = arith.constant 4 : index
    %c0_29 = arith.constant 0 : index
    %c0_30 = arith.constant 0 : index
    %40 = vector.load %arg5[%c4, %c0_29, %c0_30] : memref<27x4x128xf32, #tpu.memory_space<vmem>>, vector<1x4x128xf32>
    %41 = vector.shape_cast %40 : vector<1x4x128xf32> to vector<4x128xf32>
    %cst_31 = arith.constant dense<0.000000e+00> : vector<48x128xf32>
    %42 = tpu.matmul %39, %41, %cst_31 {dimension_numbers = #tpu.dot_dimension_numbers<[1], [0], [0], [1], [0, 0, 1, 1], [], []>} : vector<48x4xf32>, vector<4x128xf32>, vector<48x128xf32> -> vector<48x128xf32>
    %43 = arith.addf %35, %42 : vector<48x128xf32>
    %c10_i32 = arith.constant 10 : i32
    %44 = arith.addi %2, %c10_i32 : i32
    %c0_32 = arith.constant 0 : index
    %c0_33 = arith.constant 0 : index
    %45 = arith.index_cast %44 : i32 to index
    %c0_34 = arith.constant 0 : index
    %46 = vector.load %arg2[%c0_32, %c0_33, %45, %c0_34] : memref<1x1x72x4xf32, #tpu.memory_space<vmem>>, vector<1x1x48x4xf32>
    %47 = vector.shape_cast %46 : vector<1x1x48x4xf32> to vector<48x4xf32>
    %c5 = arith.constant 5 : index
    %c0_35 = arith.constant 0 : index
    %c0_36 = arith.constant 0 : index
    %48 = vector.load %arg5[%c5, %c0_35, %c0_36] : memref<27x4x128xf32, #tpu.memory_space<vmem>>, vector<1x4x128xf32>
    %49 = vector.shape_cast %48 : vector<1x4x128xf32> to vector<4x128xf32>
    %cst_37 = arith.constant dense<0.000000e+00> : vector<48x128xf32>
    %50 = tpu.matmul %47, %49, %cst_37 {dimension_numbers = #tpu.dot_dimension_numbers<[1], [0], [0], [1], [0, 0, 1, 1], [], []>} : vector<48x4xf32>, vector<4x128xf32>, vector<48x128xf32> -> vector<48x128xf32>
    %51 = arith.addf %43, %50 : vector<48x128xf32>
    %c16_i32 = arith.constant 16 : i32
    %52 = arith.addi %2, %c16_i32 : i32
    %c0_38 = arith.constant 0 : index
    %c0_39 = arith.constant 0 : index
    %53 = arith.index_cast %52 : i32 to index
    %c0_40 = arith.constant 0 : index
    %54 = vector.load %arg2[%c0_38, %c0_39, %53, %c0_40] : memref<1x1x72x4xf32, #tpu.memory_space<vmem>>, vector<1x1x48x4xf32>
    %55 = vector.shape_cast %54 : vector<1x1x48x4xf32> to vector<48x4xf32>
    %c6 = arith.constant 6 : index
    %c0_41 = arith.constant 0 : index
    %c0_42 = arith.constant 0 : index
    %56 = vector.load %arg5[%c6, %c0_41, %c0_42] : memref<27x4x128xf32, #tpu.memory_space<vmem>>, vector<1x4x128xf32>
    %57 = vector.shape_cast %56 : vector<1x4x128xf32> to vector<4x128xf32>
    %cst_43 = arith.constant dense<0.000000e+00> : vector<48x128xf32>
    %58 = tpu.matmul %55, %57, %cst_43 {dimension_numbers = #tpu.dot_dimension_numbers<[1], [0], [0], [1], [0, 0, 1, 1], [], []>} : vector<48x4xf32>, vector<4x128xf32>, vector<48x128xf32> -> vector<48x128xf32>
    %59 = arith.addf %51, %58 : vector<48x128xf32>
    %c17_i32 = arith.constant 17 : i32
    %60 = arith.addi %2, %c17_i32 : i32
    %c0_44 = arith.constant 0 : index
    %c0_45 = arith.constant 0 : index
    %61 = arith.index_cast %60 : i32 to index
    %c0_46 = arith.constant 0 : index
    %62 = vector.load %arg2[%c0_44, %c0_45, %61, %c0_46] : memref<1x1x72x4xf32, #tpu.memory_space<vmem>>, vector<1x1x48x4xf32>
    %63 = vector.shape_cast %62 : vector<1x1x48x4xf32> to vector<48x4xf32>
    %c7 = arith.constant 7 : index
    %c0_47 = arith.constant 0 : index
    %c0_48 = arith.constant 0 : index
    %64 = vector.load %arg5[%c7, %c0_47, %c0_48] : memref<27x4x128xf32, #tpu.memory_space<vmem>>, vector<1x4x128xf32>
    %65 = vector.shape_cast %64 : vector<1x4x128xf32> to vector<4x128xf32>
    %cst_49 = arith.constant dense<0.000000e+00> : vector<48x128xf32>
    %66 = tpu.matmul %63, %65, %cst_49 {dimension_numbers = #tpu.dot_dimension_numbers<[1], [0], [0], [1], [0, 0, 1, 1], [], []>} : vector<48x4xf32>, vector<4x128xf32>, vector<48x128xf32> -> vector<48x128xf32>
    %67 = arith.addf %59, %66 : vector<48x128xf32>
    %c18_i32 = arith.constant 18 : i32
    %68 = arith.addi %2, %c18_i32 : i32
    %c0_50 = arith.constant 0 : index
    %c0_51 = arith.constant 0 : index
    %69 = arith.index_cast %68 : i32 to index
    %c0_52 = arith.constant 0 : index
    %70 = vector.load %arg2[%c0_50, %c0_51, %69, %c0_52] : memref<1x1x72x4xf32, #tpu.memory_space<vmem>>, vector<1x1x48x4xf32>
    %71 = vector.shape_cast %70 : vector<1x1x48x4xf32> to vector<48x4xf32>
    %c8 = arith.constant 8 : index
    %c0_53 = arith.constant 0 : index
    %c0_54 = arith.constant 0 : index
    %72 = vector.load %arg5[%c8, %c0_53, %c0_54] : memref<27x4x128xf32, #tpu.memory_space<vmem>>, vector<1x4x128xf32>
    %73 = vector.shape_cast %72 : vector<1x4x128xf32> to vector<4x128xf32>
    %cst_55 = arith.constant dense<0.000000e+00> : vector<48x128xf32>
    %74 = tpu.matmul %71, %73, %cst_55 {dimension_numbers = #tpu.dot_dimension_numbers<[1], [0], [0], [1], [0, 0, 1, 1], [], []>} : vector<48x4xf32>, vector<4x128xf32>, vector<48x128xf32> -> vector<48x128xf32>
    %75 = arith.addf %67, %74 : vector<48x128xf32>
    %c0_i32_56 = arith.constant 0 : i32
    %76 = arith.addi %2, %c0_i32_56 : i32
    %c0_57 = arith.constant 0 : index
    %c0_58 = arith.constant 0 : index
    %77 = arith.index_cast %76 : i32 to index
    %c0_59 = arith.constant 0 : index
    %78 = vector.load %arg3[%c0_57, %c0_58, %77, %c0_59] : memref<1x1x72x4xf32, #tpu.memory_space<vmem>>, vector<1x1x48x4xf32>
    %79 = vector.shape_cast %78 : vector<1x1x48x4xf32> to vector<48x4xf32>
    %c9 = arith.constant 9 : index
    %c0_60 = arith.constant 0 : index
    %c0_61 = arith.constant 0 : index
    %80 = vector.load %arg5[%c9, %c0_60, %c0_61] : memref<27x4x128xf32, #tpu.memory_space<vmem>>, vector<1x4x128xf32>
    %81 = vector.shape_cast %80 : vector<1x4x128xf32> to vector<4x128xf32>
    %cst_62 = arith.constant dense<0.000000e+00> : vector<48x128xf32>
    %82 = tpu.matmul %79, %81, %cst_62 {dimension_numbers = #tpu.dot_dimension_numbers<[1], [0], [0], [1], [0, 0, 1, 1], [], []>} : vector<48x4xf32>, vector<4x128xf32>, vector<48x128xf32> -> vector<48x128xf32>
    %83 = arith.addf %75, %82 : vector<48x128xf32>
    %c1_i32_63 = arith.constant 1 : i32
    %84 = arith.addi %2, %c1_i32_63 : i32
    %c0_64 = arith.constant 0 : index
    %c0_65 = arith.constant 0 : index
    %85 = arith.index_cast %84 : i32 to index
    %c0_66 = arith.constant 0 : index
    %86 = vector.load %arg3[%c0_64, %c0_65, %85, %c0_66] : memref<1x1x72x4xf32, #tpu.memory_space<vmem>>, vector<1x1x48x4xf32>
    %87 = vector.shape_cast %86 : vector<1x1x48x4xf32> to vector<48x4xf32>
    %c10 = arith.constant 10 : index
    %c0_67 = arith.constant 0 : index
    %c0_68 = arith.constant 0 : index
    %88 = vector.load %arg5[%c10, %c0_67, %c0_68] : memref<27x4x128xf32, #tpu.memory_space<vmem>>, vector<1x4x128xf32>
    %89 = vector.shape_cast %88 : vector<1x4x128xf32> to vector<4x128xf32>
    %cst_69 = arith.constant dense<0.000000e+00> : vector<48x128xf32>
    %90 = tpu.matmul %87, %89, %cst_69 {dimension_numbers = #tpu.dot_dimension_numbers<[1], [0], [0], [1], [0, 0, 1, 1], [], []>} : vector<48x4xf32>, vector<4x128xf32>, vector<48x128xf32> -> vector<48x128xf32>
    %91 = arith.addf %83, %90 : vector<48x128xf32>
    %c2_i32_70 = arith.constant 2 : i32
    %92 = arith.addi %2, %c2_i32_70 : i32
    %c0_71 = arith.constant 0 : index
    %c0_72 = arith.constant 0 : index
    %93 = arith.index_cast %92 : i32 to index
    %c0_73 = arith.constant 0 : index
    %94 = vector.load %arg3[%c0_71, %c0_72, %93, %c0_73] : memref<1x1x72x4xf32, #tpu.memory_space<vmem>>, vector<1x1x48x4xf32>
    %95 = vector.shape_cast %94 : vector<1x1x48x4xf32> to vector<48x4xf32>
    %c11 = arith.constant 11 : index
    %c0_74 = arith.constant 0 : index
    %c0_75 = arith.constant 0 : index
    %96 = vector.load %arg5[%c11, %c0_74, %c0_75] : memref<27x4x128xf32, #tpu.memory_space<vmem>>, vector<1x4x128xf32>
    %97 = vector.shape_cast %96 : vector<1x4x128xf32> to vector<4x128xf32>
    %cst_76 = arith.constant dense<0.000000e+00> : vector<48x128xf32>
    %98 = tpu.matmul %95, %97, %cst_76 {dimension_numbers = #tpu.dot_dimension_numbers<[1], [0], [0], [1], [0, 0, 1, 1], [], []>} : vector<48x4xf32>, vector<4x128xf32>, vector<48x128xf32> -> vector<48x128xf32>
    %99 = arith.addf %91, %98 : vector<48x128xf32>
    %c8_i32_77 = arith.constant 8 : i32
    %100 = arith.addi %2, %c8_i32_77 : i32
    %c0_78 = arith.constant 0 : index
    %c0_79 = arith.constant 0 : index
    %101 = arith.index_cast %100 : i32 to index
    %c0_80 = arith.constant 0 : index
    %102 = vector.load %arg3[%c0_78, %c0_79, %101, %c0_80] : memref<1x1x72x4xf32, #tpu.memory_space<vmem>>, vector<1x1x48x4xf32>
    %103 = vector.shape_cast %102 : vector<1x1x48x4xf32> to vector<48x4xf32>
    %c12 = arith.constant 12 : index
    %c0_81 = arith.constant 0 : index
    %c0_82 = arith.constant 0 : index
    %104 = vector.load %arg5[%c12, %c0_81, %c0_82] : memref<27x4x128xf32, #tpu.memory_space<vmem>>, vector<1x4x128xf32>
    %105 = vector.shape_cast %104 : vector<1x4x128xf32> to vector<4x128xf32>
    %cst_83 = arith.constant dense<0.000000e+00> : vector<48x128xf32>
    %106 = tpu.matmul %103, %105, %cst_83 {dimension_numbers = #tpu.dot_dimension_numbers<[1], [0], [0], [1], [0, 0, 1, 1], [], []>} : vector<48x4xf32>, vector<4x128xf32>, vector<48x128xf32> -> vector<48x128xf32>
    %107 = arith.addf %99, %106 : vector<48x128xf32>
    %c9_i32_84 = arith.constant 9 : i32
    %108 = arith.addi %2, %c9_i32_84 : i32
    %c0_85 = arith.constant 0 : index
    %c0_86 = arith.constant 0 : index
    %109 = arith.index_cast %108 : i32 to index
    %c0_87 = arith.constant 0 : index
    %110 = vector.load %arg3[%c0_85, %c0_86, %109, %c0_87] : memref<1x1x72x4xf32, #tpu.memory_space<vmem>>, vector<1x1x48x4xf32>
    %111 = vector.shape_cast %110 : vector<1x1x48x4xf32> to vector<48x4xf32>
    %c13 = arith.constant 13 : index
    %c0_88 = arith.constant 0 : index
    %c0_89 = arith.constant 0 : index
    %112 = vector.load %arg5[%c13, %c0_88, %c0_89] : memref<27x4x128xf32, #tpu.memory_space<vmem>>, vector<1x4x128xf32>
    %113 = vector.shape_cast %112 : vector<1x4x128xf32> to vector<4x128xf32>
    %cst_90 = arith.constant dense<0.000000e+00> : vector<48x128xf32>
    %114 = tpu.matmul %111, %113, %cst_90 {dimension_numbers = #tpu.dot_dimension_numbers<[1], [0], [0], [1], [0, 0, 1, 1], [], []>} : vector<48x4xf32>, vector<4x128xf32>, vector<48x128xf32> -> vector<48x128xf32>
    %115 = arith.addf %107, %114 : vector<48x128xf32>
    %c10_i32_91 = arith.constant 10 : i32
    %116 = arith.addi %2, %c10_i32_91 : i32
    %c0_92 = arith.constant 0 : index
    %c0_93 = arith.constant 0 : index
    %117 = arith.index_cast %116 : i32 to index
    %c0_94 = arith.constant 0 : index
    %118 = vector.load %arg3[%c0_92, %c0_93, %117, %c0_94] : memref<1x1x72x4xf32, #tpu.memory_space<vmem>>, vector<1x1x48x4xf32>
    %119 = vector.shape_cast %118 : vector<1x1x48x4xf32> to vector<48x4xf32>
    %c14 = arith.constant 14 : index
    %c0_95 = arith.constant 0 : index
    %c0_96 = arith.constant 0 : index
    %120 = vector.load %arg5[%c14, %c0_95, %c0_96] : memref<27x4x128xf32, #tpu.memory_space<vmem>>, vector<1x4x128xf32>
    %121 = vector.shape_cast %120 : vector<1x4x128xf32> to vector<4x128xf32>
    %cst_97 = arith.constant dense<0.000000e+00> : vector<48x128xf32>
    %122 = tpu.matmul %119, %121, %cst_97 {dimension_numbers = #tpu.dot_dimension_numbers<[1], [0], [0], [1], [0, 0, 1, 1], [], []>} : vector<48x4xf32>, vector<4x128xf32>, vector<48x128xf32> -> vector<48x128xf32>
    %123 = arith.addf %115, %122 : vector<48x128xf32>
    %c16_i32_98 = arith.constant 16 : i32
    %124 = arith.addi %2, %c16_i32_98 : i32
    %c0_99 = arith.constant 0 : index
    %c0_100 = arith.constant 0 : index
    %125 = arith.index_cast %124 : i32 to index
    %c0_101 = arith.constant 0 : index
    %126 = vector.load %arg3[%c0_99, %c0_100, %125, %c0_101] : memref<1x1x72x4xf32, #tpu.memory_space<vmem>>, vector<1x1x48x4xf32>
    %127 = vector.shape_cast %126 : vector<1x1x48x4xf32> to vector<48x4xf32>
    %c15 = arith.constant 15 : index
    %c0_102 = arith.constant 0 : index
    %c0_103 = arith.constant 0 : index
    %128 = vector.load %arg5[%c15, %c0_102, %c0_103] : memref<27x4x128xf32, #tpu.memory_space<vmem>>, vector<1x4x128xf32>
    %129 = vector.shape_cast %128 : vector<1x4x128xf32> to vector<4x128xf32>
    %cst_104 = arith.constant dense<0.000000e+00> : vector<48x128xf32>
    %130 = tpu.matmul %127, %129, %cst_104 {dimension_numbers = #tpu.dot_dimension_numbers<[1], [0], [0], [1], [0, 0, 1, 1], [], []>} : vector<48x4xf32>, vector<4x128xf32>, vector<48x128xf32> -> vector<48x128xf32>
    %131 = arith.addf %123, %130 : vector<48x128xf32>
    %c17_i32_105 = arith.constant 17 : i32
    %132 = arith.addi %2, %c17_i32_105 : i32
    %c0_106 = arith.constant 0 : index
    %c0_107 = arith.constant 0 : index
    %133 = arith.index_cast %132 : i32 to index
    %c0_108 = arith.constant 0 : index
    %134 = vector.load %arg3[%c0_106, %c0_107, %133, %c0_108] : memref<1x1x72x4xf32, #tpu.memory_space<vmem>>, vector<1x1x48x4xf32>
    %135 = vector.shape_cast %134 : vector<1x1x48x4xf32> to vector<48x4xf32>
    %c16 = arith.constant 16 : index
    %c0_109 = arith.constant 0 : index
    %c0_110 = arith.constant 0 : index
    %136 = vector.load %arg5[%c16, %c0_109, %c0_110] : memref<27x4x128xf32, #tpu.memory_space<vmem>>, vector<1x4x128xf32>
    %137 = vector.shape_cast %136 : vector<1x4x128xf32> to vector<4x128xf32>
    %cst_111 = arith.constant dense<0.000000e+00> : vector<48x128xf32>
    %138 = tpu.matmul %135, %137, %cst_111 {dimension_numbers = #tpu.dot_dimension_numbers<[1], [0], [0], [1], [0, 0, 1, 1], [], []>} : vector<48x4xf32>, vector<4x128xf32>, vector<48x128xf32> -> vector<48x128xf32>
    %139 = arith.addf %131, %138 : vector<48x128xf32>
    %c18_i32_112 = arith.constant 18 : i32
    %140 = arith.addi %2, %c18_i32_112 : i32
    %c0_113 = arith.constant 0 : index
    %c0_114 = arith.constant 0 : index
    %141 = arith.index_cast %140 : i32 to index
    %c0_115 = arith.constant 0 : index
    %142 = vector.load %arg3[%c0_113, %c0_114, %141, %c0_115] : memref<1x1x72x4xf32, #tpu.memory_space<vmem>>, vector<1x1x48x4xf32>
    %143 = vector.shape_cast %142 : vector<1x1x48x4xf32> to vector<48x4xf32>
    %c17 = arith.constant 17 : index
    %c0_116 = arith.constant 0 : index
    %c0_117 = arith.constant 0 : index
    %144 = vector.load %arg5[%c17, %c0_116, %c0_117] : memref<27x4x128xf32, #tpu.memory_space<vmem>>, vector<1x4x128xf32>
    %145 = vector.shape_cast %144 : vector<1x4x128xf32> to vector<4x128xf32>
    %cst_118 = arith.constant dense<0.000000e+00> : vector<48x128xf32>
    %146 = tpu.matmul %143, %145, %cst_118 {dimension_numbers = #tpu.dot_dimension_numbers<[1], [0], [0], [1], [0, 0, 1, 1], [], []>} : vector<48x4xf32>, vector<4x128xf32>, vector<48x128xf32> -> vector<48x128xf32>
    %147 = arith.addf %139, %146 : vector<48x128xf32>
    %c0_i32_119 = arith.constant 0 : i32
    %148 = arith.addi %2, %c0_i32_119 : i32
    %c0_120 = arith.constant 0 : index
    %c0_121 = arith.constant 0 : index
    %149 = arith.index_cast %148 : i32 to index
    %c0_122 = arith.constant 0 : index
    %150 = vector.load %arg4[%c0_120, %c0_121, %149, %c0_122] : memref<1x1x72x4xf32, #tpu.memory_space<vmem>>, vector<1x1x48x4xf32>
    %151 = vector.shape_cast %150 : vector<1x1x48x4xf32> to vector<48x4xf32>
    %c18 = arith.constant 18 : index
    %c0_123 = arith.constant 0 : index
    %c0_124 = arith.constant 0 : index
    %152 = vector.load %arg5[%c18, %c0_123, %c0_124] : memref<27x4x128xf32, #tpu.memory_space<vmem>>, vector<1x4x128xf32>
    %153 = vector.shape_cast %152 : vector<1x4x128xf32> to vector<4x128xf32>
    %cst_125 = arith.constant dense<0.000000e+00> : vector<48x128xf32>
    %154 = tpu.matmul %151, %153, %cst_125 {dimension_numbers = #tpu.dot_dimension_numbers<[1], [0], [0], [1], [0, 0, 1, 1], [], []>} : vector<48x4xf32>, vector<4x128xf32>, vector<48x128xf32> -> vector<48x128xf32>
    %155 = arith.addf %147, %154 : vector<48x128xf32>
    %c1_i32_126 = arith.constant 1 : i32
    %156 = arith.addi %2, %c1_i32_126 : i32
    %c0_127 = arith.constant 0 : index
    %c0_128 = arith.constant 0 : index
    %157 = arith.index_cast %156 : i32 to index
    %c0_129 = arith.constant 0 : index
    %158 = vector.load %arg4[%c0_127, %c0_128, %157, %c0_129] : memref<1x1x72x4xf32, #tpu.memory_space<vmem>>, vector<1x1x48x4xf32>
    %159 = vector.shape_cast %158 : vector<1x1x48x4xf32> to vector<48x4xf32>
    %c19 = arith.constant 19 : index
    %c0_130 = arith.constant 0 : index
    %c0_131 = arith.constant 0 : index
    %160 = vector.load %arg5[%c19, %c0_130, %c0_131] : memref<27x4x128xf32, #tpu.memory_space<vmem>>, vector<1x4x128xf32>
    %161 = vector.shape_cast %160 : vector<1x4x128xf32> to vector<4x128xf32>
    %cst_132 = arith.constant dense<0.000000e+00> : vector<48x128xf32>
    %162 = tpu.matmul %159, %161, %cst_132 {dimension_numbers = #tpu.dot_dimension_numbers<[1], [0], [0], [1], [0, 0, 1, 1], [], []>} : vector<48x4xf32>, vector<4x128xf32>, vector<48x128xf32> -> vector<48x128xf32>
    %163 = arith.addf %155, %162 : vector<48x128xf32>
    %c2_i32_133 = arith.constant 2 : i32
    %164 = arith.addi %2, %c2_i32_133 : i32
    %c0_134 = arith.constant 0 : index
    %c0_135 = arith.constant 0 : index
    %165 = arith.index_cast %164 : i32 to index
    %c0_136 = arith.constant 0 : index
    %166 = vector.load %arg4[%c0_134, %c0_135, %165, %c0_136] : memref<1x1x72x4xf32, #tpu.memory_space<vmem>>, vector<1x1x48x4xf32>
    %167 = vector.shape_cast %166 : vector<1x1x48x4xf32> to vector<48x4xf32>
    %c20 = arith.constant 20 : index
    %c0_137 = arith.constant 0 : index
    %c0_138 = arith.constant 0 : index
    %168 = vector.load %arg5[%c20, %c0_137, %c0_138] : memref<27x4x128xf32, #tpu.memory_space<vmem>>, vector<1x4x128xf32>
    %169 = vector.shape_cast %168 : vector<1x4x128xf32> to vector<4x128xf32>
    %cst_139 = arith.constant dense<0.000000e+00> : vector<48x128xf32>
    %170 = tpu.matmul %167, %169, %cst_139 {dimension_numbers = #tpu.dot_dimension_numbers<[1], [0], [0], [1], [0, 0, 1, 1], [], []>} : vector<48x4xf32>, vector<4x128xf32>, vector<48x128xf32> -> vector<48x128xf32>
    %171 = arith.addf %163, %170 : vector<48x128xf32>
    %c8_i32_140 = arith.constant 8 : i32
    %172 = arith.addi %2, %c8_i32_140 : i32
    %c0_141 = arith.constant 0 : index
    %c0_142 = arith.constant 0 : index
    %173 = arith.index_cast %172 : i32 to index
    %c0_143 = arith.constant 0 : index
    %174 = vector.load %arg4[%c0_141, %c0_142, %173, %c0_143] : memref<1x1x72x4xf32, #tpu.memory_space<vmem>>, vector<1x1x48x4xf32>
    %175 = vector.shape_cast %174 : vector<1x1x48x4xf32> to vector<48x4xf32>
    %c21 = arith.constant 21 : index
    %c0_144 = arith.constant 0 : index
    %c0_145 = arith.constant 0 : index
    %176 = vector.load %arg5[%c21, %c0_144, %c0_145] : memref<27x4x128xf32, #tpu.memory_space<vmem>>, vector<1x4x128xf32>
    %177 = vector.shape_cast %176 : vector<1x4x128xf32> to vector<4x128xf32>
    %cst_146 = arith.constant dense<0.000000e+00> : vector<48x128xf32>
    %178 = tpu.matmul %175, %177, %cst_146 {dimension_numbers = #tpu.dot_dimension_numbers<[1], [0], [0], [1], [0, 0, 1, 1], [], []>} : vector<48x4xf32>, vector<4x128xf32>, vector<48x128xf32> -> vector<48x128xf32>
    %179 = arith.addf %171, %178 : vector<48x128xf32>
    %c9_i32_147 = arith.constant 9 : i32
    %180 = arith.addi %2, %c9_i32_147 : i32
    %c0_148 = arith.constant 0 : index
    %c0_149 = arith.constant 0 : index
    %181 = arith.index_cast %180 : i32 to index
    %c0_150 = arith.constant 0 : index
    %182 = vector.load %arg4[%c0_148, %c0_149, %181, %c0_150] : memref<1x1x72x4xf32, #tpu.memory_space<vmem>>, vector<1x1x48x4xf32>
    %183 = vector.shape_cast %182 : vector<1x1x48x4xf32> to vector<48x4xf32>
    %c22 = arith.constant 22 : index
    %c0_151 = arith.constant 0 : index
    %c0_152 = arith.constant 0 : index
    %184 = vector.load %arg5[%c22, %c0_151, %c0_152] : memref<27x4x128xf32, #tpu.memory_space<vmem>>, vector<1x4x128xf32>
    %185 = vector.shape_cast %184 : vector<1x4x128xf32> to vector<4x128xf32>
    %cst_153 = arith.constant dense<0.000000e+00> : vector<48x128xf32>
    %186 = tpu.matmul %183, %185, %cst_153 {dimension_numbers = #tpu.dot_dimension_numbers<[1], [0], [0], [1], [0, 0, 1, 1], [], []>} : vector<48x4xf32>, vector<4x128xf32>, vector<48x128xf32> -> vector<48x128xf32>
    %187 = arith.addf %179, %186 : vector<48x128xf32>
    %c10_i32_154 = arith.constant 10 : i32
    %188 = arith.addi %2, %c10_i32_154 : i32
    %c0_155 = arith.constant 0 : index
    %c0_156 = arith.constant 0 : index
    %189 = arith.index_cast %188 : i32 to index
    %c0_157 = arith.constant 0 : index
    %190 = vector.load %arg4[%c0_155, %c0_156, %189, %c0_157] : memref<1x1x72x4xf32, #tpu.memory_space<vmem>>, vector<1x1x48x4xf32>
    %191 = vector.shape_cast %190 : vector<1x1x48x4xf32> to vector<48x4xf32>
    %c23 = arith.constant 23 : index
    %c0_158 = arith.constant 0 : index
    %c0_159 = arith.constant 0 : index
    %192 = vector.load %arg5[%c23, %c0_158, %c0_159] : memref<27x4x128xf32, #tpu.memory_space<vmem>>, vector<1x4x128xf32>
    %193 = vector.shape_cast %192 : vector<1x4x128xf32> to vector<4x128xf32>
    %cst_160 = arith.constant dense<0.000000e+00> : vector<48x128xf32>
    %194 = tpu.matmul %191, %193, %cst_160 {dimension_numbers = #tpu.dot_dimension_numbers<[1], [0], [0], [1], [0, 0, 1, 1], [], []>} : vector<48x4xf32>, vector<4x128xf32>, vector<48x128xf32> -> vector<48x128xf32>
    %195 = arith.addf %187, %194 : vector<48x128xf32>
    %c16_i32_161 = arith.constant 16 : i32
    %196 = arith.addi %2, %c16_i32_161 : i32
    %c0_162 = arith.constant 0 : index
    %c0_163 = arith.constant 0 : index
    %197 = arith.index_cast %196 : i32 to index
    %c0_164 = arith.constant 0 : index
    %198 = vector.load %arg4[%c0_162, %c0_163, %197, %c0_164] : memref<1x1x72x4xf32, #tpu.memory_space<vmem>>, vector<1x1x48x4xf32>
    %199 = vector.shape_cast %198 : vector<1x1x48x4xf32> to vector<48x4xf32>
    %c24 = arith.constant 24 : index
    %c0_165 = arith.constant 0 : index
    %c0_166 = arith.constant 0 : index
    %200 = vector.load %arg5[%c24, %c0_165, %c0_166] : memref<27x4x128xf32, #tpu.memory_space<vmem>>, vector<1x4x128xf32>
    %201 = vector.shape_cast %200 : vector<1x4x128xf32> to vector<4x128xf32>
    %cst_167 = arith.constant dense<0.000000e+00> : vector<48x128xf32>
    %202 = tpu.matmul %199, %201, %cst_167 {dimension_numbers = #tpu.dot_dimension_numbers<[1], [0], [0], [1], [0, 0, 1, 1], [], []>} : vector<48x4xf32>, vector<4x128xf32>, vector<48x128xf32> -> vector<48x128xf32>
    %203 = arith.addf %195, %202 : vector<48x128xf32>
    %c17_i32_168 = arith.constant 17 : i32
    %204 = arith.addi %2, %c17_i32_168 : i32
    %c0_169 = arith.constant 0 : index
    %c0_170 = arith.constant 0 : index
    %205 = arith.index_cast %204 : i32 to index
    %c0_171 = arith.constant 0 : index
    %206 = vector.load %arg4[%c0_169, %c0_170, %205, %c0_171] : memref<1x1x72x4xf32, #tpu.memory_space<vmem>>, vector<1x1x48x4xf32>
    %207 = vector.shape_cast %206 : vector<1x1x48x4xf32> to vector<48x4xf32>
    %c25 = arith.constant 25 : index
    %c0_172 = arith.constant 0 : index
    %c0_173 = arith.constant 0 : index
    %208 = vector.load %arg5[%c25, %c0_172, %c0_173] : memref<27x4x128xf32, #tpu.memory_space<vmem>>, vector<1x4x128xf32>
    %209 = vector.shape_cast %208 : vector<1x4x128xf32> to vector<4x128xf32>
    %cst_174 = arith.constant dense<0.000000e+00> : vector<48x128xf32>
    %210 = tpu.matmul %207, %209, %cst_174 {dimension_numbers = #tpu.dot_dimension_numbers<[1], [0], [0], [1], [0, 0, 1, 1], [], []>} : vector<48x4xf32>, vector<4x128xf32>, vector<48x128xf32> -> vector<48x128xf32>
    %211 = arith.addf %203, %210 : vector<48x128xf32>
    %c18_i32_175 = arith.constant 18 : i32
    %212 = arith.addi %2, %c18_i32_175 : i32
    %c0_176 = arith.constant 0 : index
    %c0_177 = arith.constant 0 : index
    %213 = arith.index_cast %212 : i32 to index
    %c0_178 = arith.constant 0 : index
    %214 = vector.load %arg4[%c0_176, %c0_177, %213, %c0_178] : memref<1x1x72x4xf32, #tpu.memory_space<vmem>>, vector<1x1x48x4xf32>
    %215 = vector.shape_cast %214 : vector<1x1x48x4xf32> to vector<48x4xf32>
    %c26 = arith.constant 26 : index
    %c0_179 = arith.constant 0 : index
    %c0_180 = arith.constant 0 : index
    %216 = vector.load %arg5[%c26, %c0_179, %c0_180] : memref<27x4x128xf32, #tpu.memory_space<vmem>>, vector<1x4x128xf32>
    %217 = vector.shape_cast %216 : vector<1x4x128xf32> to vector<4x128xf32>
    %cst_181 = arith.constant dense<0.000000e+00> : vector<48x128xf32>
    %218 = tpu.matmul %215, %217, %cst_181 {dimension_numbers = #tpu.dot_dimension_numbers<[1], [0], [0], [1], [0, 0, 1, 1], [], []>} : vector<48x4xf32>, vector<4x128xf32>, vector<48x128xf32> -> vector<48x128xf32>
    %219 = arith.addf %211, %218 : vector<48x128xf32>
    %220 = vector.extract_strided_slice %219 {offsets = [0, 0], sizes = [48, 8], strides = [1, 1]} : vector<48x128xf32> to vector<48x8xf32>
    %221 = tpu.iota {dimensions = array<i32: 0>} : vector<48x1xi32>
    %222 = vector.broadcast %2 : i32 to vector<48x1xi32>
    %223 = arith.addi %222, %221 : vector<48x1xi32>
    %c48_i32_182 = arith.constant 48 : i32
    %224 = vector.broadcast %c48_i32_182 : i32 to vector<48x1xi32>
    %225 = arith.cmpi slt, %223, %224 : vector<48x1xi32>
    %c8_i32_183 = arith.constant 8 : i32
    %c0_i32_184 = arith.constant 0 : i32
    %226 = arith.cmpi eq, %c8_i32_183, %c0_i32_184 : i32
    %c1_i32_185 = arith.constant 1 : i32
    %227 = arith.select %226, %c1_i32_185, %c8_i32_183 : i32
    %228 = vector.broadcast %227 : i32 to vector<48x1xi32>
    %229 = arith.remsi %223, %228 : vector<48x1xi32>
    %c0_i32_186 = arith.constant 0 : i32
    %230 = vector.broadcast %c0_i32_186 : i32 to vector<48x1xi32>
    %231 = arith.cmpi ne, %229, %230 : vector<48x1xi32>
    %c0_i32_187 = arith.constant 0 : i32
    %232 = vector.broadcast %c0_i32_187 : i32 to vector<48x1xi32>
    %233 = arith.cmpi slt, %229, %232 : vector<48x1xi32>
    %c0_i32_188 = arith.constant 0 : i32
    %234 = arith.cmpi slt, %227, %c0_i32_188 : i32
    %235 = vector.broadcast %234 : i1 to vector<48x1xi1>
    %236 = vector.broadcast %235 : vector<48x1xi1> to vector<48x1xi1>
    %237 = arith.xori %233, %236 : vector<48x1xi1>
    %238 = arith.andi %237, %231 : vector<48x1xi1>
    %239 = vector.broadcast %227 : i32 to vector<48x1xi32>
    %240 = arith.addi %229, %239 : vector<48x1xi32>
    %241 = arith.select %238, %240, %229 : vector<48x1xi1>, vector<48x1xi32>
    %c6_i32 = arith.constant 6 : i32
    %242 = vector.broadcast %c6_i32 : i32 to vector<48x1xi32>
    %243 = arith.cmpi slt, %241, %242 : vector<48x1xi32>
    %244 = arith.andi %225, %243 : vector<48x1xi1>
    %cst_189 = arith.constant 0.000000e+00 : f32
    %245 = vector.shape_cast %244 : vector<48x1xi1> to vector<48x1xi1>
    %246 = vector.broadcast %245 : vector<48x1xi1> to vector<48x8xi1>
    %247 = vector.broadcast %cst_189 : f32 to vector<48x8xf32>
    %248 = arith.select %246, %220, %247 : vector<48x8xi1>, vector<48x8xf32>
    %cst_190 = arith.constant dense<0.000000e+00> : vector<8xf32>
    %249 = vector.multi_reduction <add>, %248, %cst_190 [0] : vector<48x8xf32> to vector<8xf32>
    %250 = vector.shape_cast %249 : vector<8xf32> to vector<1x8xf32>
    %251 = arith.addf %0, %250 : vector<1x8xf32>
    %252 = arith.mulf %248, %248 : vector<48x8xf32>
    %cst_191 = arith.constant dense<0.000000e+00> : vector<8xf32>
    %253 = vector.multi_reduction <add>, %252, %cst_191 [0] : vector<48x8xf32> to vector<8xf32>
    %254 = vector.shape_cast %253 : vector<8xf32> to vector<1x8xf32>
    %255 = arith.addf %0, %254 : vector<1x8xf32>
    %c0_192 = arith.constant 0 : index
    %c0_193 = arith.constant 0 : index
    %256 = arith.index_cast %2 : i32 to index
    %c0_194 = arith.constant 0 : index
    %257 = vector.load %arg6[%c0_192, %c0_193, %256, %c0_194] : memref<1x1x48x8xf32, #tpu.memory_space<vmem>>, vector<1x1x48x8xf32>
    %258 = vector.shape_cast %257 : vector<1x1x48x8xf32> to vector<48x8xf32>
    %259 = vector.shape_cast %220 : vector<48x8xf32> to vector<1x1x48x8xf32>
    tpu.vector_store %arg6[%c0_192, %c0_193, %256, %c0_194], %259 {strides = array<i32>} : memref<1x1x48x8xf32, #tpu.memory_space<vmem>>, vector<1x1x48x8xf32>,
    %c1_i32_195 = arith.constant 1 : i32
    %260 = tpu.concatenate %251, %255 in 0 : vector<1x8xf32>, vector<1x8xf32> -> vector<2x8xf32>
    %c0_196 = arith.constant 0 : index
    %c0_197 = arith.constant 0 : index
    %c0_198 = arith.constant 0 : index
    %c0_199 = arith.constant 0 : index
    %261 = vector.load %arg7[%c0_196, %c0_197, %c0_198, %c0_199] : memref<1x1x2x8xf32, #tpu.memory_space<vmem>>, vector<1x1x2x8xf32>
    %262 = vector.shape_cast %261 : vector<1x1x2x8xf32> to vector<2x8xf32>
    %263 = vector.shape_cast %260 : vector<2x8xf32> to vector<1x1x2x8xf32>
    tpu.vector_store %arg7[%c0_196, %c0_197, %c0_198, %c0_199], %263 {strides = array<i32>} : memref<1x1x2x8xf32, #tpu.memory_space<vmem>>, vector<1x1x2x8xf32>,
    return
  }
  func.func @transform_0(%arg0: i32, %arg1: i32) -> (i32, i32, i32, i32) {
    %c0_i32 = arith.constant 0 : i32
    %c0_i32_0 = arith.constant 0 : i32
    %c0_i32_1 = arith.constant 0 : i32
    return %arg0, %arg1, %c0_i32, %c0_i32_0 : i32, i32, i32, i32
  }
  func.func @transform_1(%arg0: i32, %arg1: i32) -> (i32, i32, i32, i32) {
    %c1_i32 = arith.constant 1 : i32
    %0 = arith.addi %arg1, %c1_i32 : i32
    %c0_i32 = arith.constant 0 : i32
    %c0_i32_0 = arith.constant 0 : i32
    %c0_i32_1 = arith.constant 0 : i32
    return %arg0, %0, %c0_i32, %c0_i32_0 : i32, i32, i32, i32
  }
  func.func @transform_2(%arg0: i32, %arg1: i32) -> (i32, i32, i32, i32) {
    %c2_i32 = arith.constant 2 : i32
    %0 = arith.addi %arg1, %c2_i32 : i32
    %c0_i32 = arith.constant 0 : i32
    %c0_i32_0 = arith.constant 0 : i32
    %c0_i32_1 = arith.constant 0 : i32
    return %arg0, %0, %c0_i32, %c0_i32_0 : i32, i32, i32, i32
  }
  func.func @transform_3(%arg0: i32, %arg1: i32) -> (i32, i32, i32) {
    %c0_i32 = arith.constant 0 : i32
    %c0_i32_0 = arith.constant 0 : i32
    %c0_i32_1 = arith.constant 0 : i32
    %c0_i32_2 = arith.constant 0 : i32
    return %c0_i32, %c0_i32_0, %c0_i32_1 : i32, i32, i32
  }
  func.func @transform_4(%arg0: i32, %arg1: i32) -> (i32, i32, i32, i32) {
    %c0_i32 = arith.constant 0 : i32
    %c0_i32_0 = arith.constant 0 : i32
    %c0_i32_1 = arith.constant 0 : i32
    return %arg0, %arg1, %c0_i32, %c0_i32_0 : i32, i32, i32, i32
  }
  func.func @transform_5(%arg0: i32, %arg1: i32) -> (i32, i32, i32, i32) {
    %c0_i32 = arith.constant 0 : i32
    %c0_i32_0 = arith.constant 0 : i32
    %c0_i32_1 = arith.constant 0 : i32
    return %arg0, %arg1, %c0_i32, %c0_i32_0 : i32, i32, i32, i32
  }
}

module attributes {stable_mosaic.version = 11 : i64} {
  func.func @_norm_act_kernel(%arg0: i32, %arg1: memref<576x8xf32, #tpu.memory_space<vmem>>, %arg2: memref<2x8xf32, #tpu.memory_space<vmem>>, %arg3: memref<576x8xf32, #tpu.memory_space<vmem>>) attributes {dimension_semantics = [#tpu.dimension_semantics<parallel>], iteration_bounds = array<i64: 1>, scalar_prefetch = 0 : i64, scratch_operands = 0 : i64, tpu.core_type = #tpu.core_type<tc>, window_params = [{transform_indices = @transform_0, window_bounds = array<i64: 576, 8>}, {pipeline_mode = #tpu.pipeline_mode<synchronous>, transform_indices = @transform_1, window_bounds = array<i64: 2, 8>}, {transform_indices = @transform_2, window_bounds = array<i64: 576, 8>}]} {
    %c0 = arith.constant 0 : index
    %c0_0 = arith.constant 0 : index
    %0 = vector.load %arg2[%c0, %c0_0] : memref<2x8xf32, #tpu.memory_space<vmem>>, vector<2x8xf32>
    %c0_1 = arith.constant 0 : index
    %c0_2 = arith.constant 0 : index
    %1 = vector.load %arg1[%c0_1, %c0_2] : memref<576x8xf32, #tpu.memory_space<vmem>>, vector<576x8xf32>
    %2 = vector.extract_strided_slice %0 {offsets = [0, 0], sizes = [1, 8], strides = [1, 1]} : vector<2x8xf32> to vector<1x8xf32>
    %3 = vector.broadcast %2 : vector<1x8xf32> to vector<576x8xf32>
    %4 = arith.mulf %1, %3 : vector<576x8xf32>
    %5 = vector.extract_strided_slice %0 {offsets = [1, 0], sizes = [1, 8], strides = [1, 1]} : vector<2x8xf32> to vector<1x8xf32>
    %6 = vector.broadcast %5 : vector<1x8xf32> to vector<576x8xf32>
    %7 = arith.addf %4, %6 : vector<576x8xf32>
    %cst = arith.constant 0.000000e+00 : f32
    %8 = vector.broadcast %cst : f32 to vector<576x8xf32>
    %9 = arith.cmpf oge, %7, %8 : vector<576x8xf32>
    %cst_3 = arith.constant 0.00999999977 : f32
    %10 = vector.broadcast %cst_3 : f32 to vector<576x8xf32>
    %11 = arith.mulf %10, %7 : vector<576x8xf32>
    %12 = arith.select %9, %7, %11 : vector<576x8xi1>, vector<576x8xf32>
    %c0_4 = arith.constant 0 : index
    %c0_5 = arith.constant 0 : index
    %13 = vector.load %arg3[%c0_4, %c0_5] : memref<576x8xf32, #tpu.memory_space<vmem>>, vector<576x8xf32>
    tpu.vector_store %arg3[%c0_4, %c0_5], %12 {strides = array<i32>} : memref<576x8xf32, #tpu.memory_space<vmem>>, vector<576x8xf32>,
    return
  }
  func.func @transform_0(%arg0: i32) -> (i32, i32) {
    %c0_i32 = arith.constant 0 : i32
    %c0_i32_0 = arith.constant 0 : i32
    return %arg0, %c0_i32 : i32, i32
  }
  func.func @transform_1(%arg0: i32) -> (i32, i32) {
    %c0_i32 = arith.constant 0 : i32
    %c0_i32_0 = arith.constant 0 : i32
    %c0_i32_1 = arith.constant 0 : i32
    return %c0_i32, %c0_i32_0 : i32, i32
  }
  func.func @transform_2(%arg0: i32) -> (i32, i32) {
    %c0_i32 = arith.constant 0 : i32
    %c0_i32_0 = arith.constant 0 : i32
    return %arg0, %c0_i32 : i32, i32
  }
}

</mosaic_0001>

<llo_original>
// kernel: conv3_block.3
$region0: #{conv3_block.3}
  #allocation0 [shape = 'u32[]', space=smem, size = 0x4, offset = 0x4, fixed_abs, tag = 'smem constant byte address 0x4 - core index']
  #allocation1 [shape = 'u32[144,128]{1,0:T(1,128)}', space=vmem, size = 0x12000, scoped, tag = 'internal scratch']
  %s0 = inlined_call_operand.vmem [shape: f32[576,8], index: 0, kind: input, shape index: {}, may-alias: {0,2}]
  %s1 = inlined_call_operand.vmem [shape: f32[2,8], index: 1, kind: input, shape index: {}]
  %s2 = inlined_call_operand.vmem [shape: f32[576,8], index: 2, kind: output, shape index: {}, may-alias: {0,2}]
  %s3 = sld [smem:[#allocation0]]
  $region18: #{conv3_block.3} parent=0
    _
  %s5 = ssub.s32 1, %s3
  %s6 = scalar_select 0, %s5, %s3
  // Predicated region
  $region2: #{conv3_block.3} parent=0 // pred_check
    _
  $region3: #{conv3_block.3} parent=0 // pred_check_branch
    %8 = sbr.rel (0) target = $region5
  $region4: #{conv3_block.3} parent=0 // pred_region
    _
  $region5: #{conv3_block.3} parent=0 // pred_fallthru
    _
  // Predicated region
  $region6: #{conv3_block.3} parent=0 // pred_check
    _
  $region7: #{conv3_block.3} parent=0 // pred_check_branch
    %10 = sbr.rel (0) target = $region9
  $region8: #{conv3_block.3} parent=0 // pred_region
    _
  $region9: #{conv3_block.3} parent=0 // pred_fallthru
    _
  %v11 = vld [vmem:[%s1] sm:$0x3]
  %v12 = vld [vmem:[%s0] sm:$0xff]
  %v13 = vld [vmem:[%s0 + $0x8] sm:$0xff]
  %v14 = vld [vmem:[%s0 + $0x10] sm:$0xff]
  %v15 = vld [vmem:[%s0 + $0x18] sm:$0xff]
  %v16 = vld [vmem:[%s0 + $0x20] sm:$0xff]
  %v17 = vld [vmem:[%s0 + $0x28] sm:$0xff]
  %v18 = vld [vmem:[%s0 + $0x30] sm:$0xff]
  %v19 = vld [vmem:[%s0 + $0x38] sm:$0xff]
  %v20 = vld [vmem:[%s0 + $0x40] sm:$0xff]
  %v21 = vld [vmem:[%s0 + $0x48] sm:$0xff]
  %v22 = vld [vmem:[%s0 + $0x50] sm:$0xff]
  %v23 = vld [vmem:[%s0 + $0x58] sm:$0xff]
  %v24 = vld [vmem:[%s0 + $0x60] sm:$0xff]
  %v25 = vld [vmem:[%s0 + $0x68] sm:$0xff]
  %v26 = vld [vmem:[%s0 + $0x70] sm:$0xff]
  %v27 = vld [vmem:[%s0 + $0x78] sm:$0xff]
  %v28 = vld [vmem:[%s0 + $0x80] sm:$0xff]
  %v29 = vld [vmem:[%s0 + $0x88] sm:$0xff]
  %v30 = vld [vmem:[%s0 + $0x90] sm:$0xff]
  %v31 = vld [vmem:[%s0 + $0x98] sm:$0xff]
  %v32 = vld [vmem:[%s0 + $0xa0] sm:$0xff]
  %v33 = vld [vmem:[%s0 + $0xa8] sm:$0xff]
  %v34 = vld [vmem:[%s0 + $0xb0] sm:$0xff]
  %v35 = vld [vmem:[%s0 + $0xb8] sm:$0xff]
  %v36 = vld [vmem:[%s0 + $0xc0] sm:$0xff]
  %v37 = vld [vmem:[%s0 + $0xc8] sm:$0xff]
  %v38 = vld [vmem:[%s0 + $0xd0] sm:$0xff]
  %v39 = vld [vmem:[%s0 + $0xd8] sm:$0xff]
  %v40 = vld [vmem:[%s0 + $0xe0] sm:$0xff]
  %v41 = vld [vmem:[%s0 + $0xe8] sm:$0xff]
  %v42 = vld [vmem:[%s0 + $0xf0] sm:$0xff]
  %v43 = vld [vmem:[%s0 + $0xf8] sm:$0xff]
  %v44 = vld [vmem:[%s0 + $0x100] sm:$0xff]
  %v45 = vld [vmem:[%s0 + $0x108] sm:$0xff]
  %v46 = vld [vmem:[%s0 + $0x110] sm:$0xff]
  %v47 = vld [vmem:[%s0 + $0x118] sm:$0xff]
  %v48 = vld [vmem:[%s0 + $0x120] sm:$0xff]
  %v49 = vld [vmem:[%s0 + $0x128] sm:$0xff]
  %v50 = vld [vmem:[%s0 + $0x130] sm:$0xff]
  %v51 = vld [vmem:[%s0 + $0x138] sm:$0xff]
  %v52 = vld [vmem:[%s0 + $0x140] sm:$0xff]
  %v53 = vld [vmem:[%s0 + $0x148] sm:$0xff]
  %v54 = vld [vmem:[%s0 + $0x150] sm:$0xff]
  %v55 = vld [vmem:[%s0 + $0x158] sm:$0xff]
  %v56 = vld [vmem:[%s0 + $0x160] sm:$0xff]
  %v57 = vld [vmem:[%s0 + $0x168] sm:$0xff]
  %v58 = vld [vmem:[%s0 + $0x170] sm:$0xff]
  %v59 = vld [vmem:[%s0 + $0x178] sm:$0xff]
  %v60 = vld [vmem:[%s0 + $0x180] sm:$0xff]
  %v61 = vld [vmem:[%s0 + $0x188] sm:$0xff]
  %v62 = vld [vmem:[%s0 + $0x190] sm:$0xff]
  %v63 = vld [vmem:[%s0 + $0x198] sm:$0xff]
  %v64 = vld [vmem:[%s0 + $0x1a0] sm:$0xff]
  %v65 = vld [vmem:[%s0 + $0x1a8] sm:$0xff]
  %v66 = vld [vmem:[%s0 + $0x1b0] sm:$0xff]
  %v67 = vld [vmem:[%s0 + $0x1b8] sm:$0xff]
  %v68 = vld [vmem:[%s0 + $0x1c0] sm:$0xff]
  %v69 = vld [vmem:[%s0 + $0x1c8] sm:$0xff]
  %v70 = vld [vmem:[%s0 + $0x1d0] sm:$0xff]
  %v71 = vld [vmem:[%s0 + $0x1d8] sm:$0xff]
  %v72 = vld [vmem:[%s0 + $0x1e0] sm:$0xff]
  %v73 = vld [vmem:[%s0 + $0x1e8] sm:$0xff]
  %v74 = vld [vmem:[%s0 + $0x1f0] sm:$0xff]
  %v75 = vld [vmem:[%s0 + $0x1f8] sm:$0xff]
  %v76 = vld [vmem:[%s0 + $0x200] sm:$0xff]
  %v77 = vld [vmem:[%s0 + $0x208] sm:$0xff]
  %v78 = vld [vmem:[%s0 + $0x210] sm:$0xff]
  %v79 = vld [vmem:[%s0 + $0x218] sm:$0xff]
  %v80 = vld [vmem:[%s0 + $0x220] sm:$0xff]
  %v81 = vld [vmem:[%s0 + $0x228] sm:$0xff]
  %v82 = vld [vmem:[%s0 + $0x230] sm:$0xff]
  %v83 = vld [vmem:[%s0 + $0x238] sm:$0xff]
  %v84 = vlaneseq
  %v85 = vshrl.u32 %v84, 7
  %v86 = vsub.s32 0, %v85
  %v87 = vrot.slane %v11, %v86
  %v88 = vmul.f32 %v12, %v87
  %v89 = vmul.f32 %v13, %v87
  %v90 = vmul.f32 %v14, %v87
  %v91 = vmul.f32 %v15, %v87
  %v92 = vmul.f32 %v16, %v87
  %v93 = vmul.f32 %v17, %v87
  %v94 = vmul.f32 %v18, %v87
  %v95 = vmul.f32 %v19, %v87
  %v96 = vmul.f32 %v20, %v87
  %v97 = vmul.f32 %v21, %v87
  %v98 = vmul.f32 %v22, %v87
  %v99 = vmul.f32 %v23, %v87
  %v100 = vmul.f32 %v24, %v87
  %v101 = vmul.f32 %v25, %v87
  %v102 = vmul.f32 %v26, %v87
  %v103 = vmul.f32 %v27, %v87
  %v104 = vmul.f32 %v28, %v87
  %v105 = vmul.f32 %v29, %v87
  %v106 = vmul.f32 %v30, %v87
  %v107 = vmul.f32 %v31, %v87
  %v108 = vmul.f32 %v32, %v87
  %v109 = vmul.f32 %v33, %v87
  %v110 = vmul.f32 %v34, %v87
  %v111 = vmul.f32 %v35, %v87
  %v112 = vmul.f32 %v36, %v87
  %v113 = vmul.f32 %v37, %v87
  %v114 = vmul.f32 %v38, %v87
  %v115 = vmul.f32 %v39, %v87
  %v116 = vmul.f32 %v40, %v87
  %v117 = vmul.f32 %v41, %v87
  %v118 = vmul.f32 %v42, %v87
  %v119 = vmul.f32 %v43, %v87
  %v120 = vmul.f32 %v44, %v87
  %v121 = vmul.f32 %v45, %v87
  %v122 = vmul.f32 %v46, %v87
  %v123 = vmul.f32 %v47, %v87
  %v124 = vmul.f32 %v48, %v87
  %v125 = vmul.f32 %v49, %v87
  %v126 = vmul.f32 %v50, %v87
  %v127 = vmul.f32 %v51, %v87
  %v128 = vmul.f32 %v52, %v87
  %v129 = vmul.f32 %v53, %v87
  %v130 = vmul.f32 %v54, %v87
  %v131 = vmul.f32 %v55, %v87
  %v132 = vmul.f32 %v56, %v87
  %v133 = vmul.f32 %v57, %v87
  %v134 = vmul.f32 %v58, %v87
  %v135 = vmul.f32 %v59, %v87
  %v136 = vmul.f32 %v60, %v87
  %v137 = vmul.f32 %v61, %v87
  %v138 = vmul.f32 %v62, %v87
  %v139 = vmul.f32 %v63, %v87
  %v140 = vmul.f32 %v64, %v87
  %v141 = vmul.f32 %v65, %v87
  %v142 = vmul.f32 %v66, %v87
  %v143 = vmul.f32 %v67, %v87
  %v144 = vmul.f32 %v68, %v87
  %v145 = vmul.f32 %v69, %v87
  %v146 = vmul.f32 %v70, %v87
  %v147 = vmul.f32 %v71, %v87
  %v148 = vmul.f32 %v72, %v87
  %v149 = vmul.f32 %v73, %v87
  %v150 = vmul.f32 %v74, %v87
  %v151 = vmul.f32 %v75, %v87
  %v152 = vmul.f32 %v76, %v87
  %v153 = vmul.f32 %v77, %v87
  %v154 = vmul.f32 %v78, %v87
  %v155 = vmul.f32 %v79, %v87
  %v156 = vmul.f32 %v80, %v87
  %v157 = vmul.f32 %v81, %v87
  %v158 = vmul.f32 %v82, %v87
  %v159 = vmul.f32 %v83, %v87
  %v160 = vlaneseq
  %v161 = vshrl.u32 %v160, 7
  %v162 = vsub.s32 1, %v161
  %v163 = vrot.slane %v11, %v162
  %v164 = vadd.f32 %v88, %v163
  %v165 = vadd.f32 %v89, %v163
  %v166 = vadd.f32 %v90, %v163
  %v167 = vadd.f32 %v91, %v163
  %v168 = vadd.f32 %v92, %v163
  %v169 = vadd.f32 %v93, %v163
  %v170 = vadd.f32 %v94, %v163
  %v171 = vadd.f32 %v95, %v163
  %v172 = vadd.f32 %v96, %v163
  %v173 = vadd.f32 %v97, %v163
  %v174 = vadd.f32 %v98, %v163
  %v175 = vadd.f32 %v99, %v163
  %v176 = vadd.f32 %v100, %v163
  %v177 = vadd.f32 %v101, %v163
  %v178 = vadd.f32 %v102, %v163
  %v179 = vadd.f32 %v103, %v163
  %v180 = vadd.f32 %v104, %v163
  %v181 = vadd.f32 %v105, %v163
  %v182 = vadd.f32 %v106, %v163
  %v183 = vadd.f32 %v107, %v163
  %v184 = vadd.f32 %v108, %v163
  %v185 = vadd.f32 %v109, %v163
  %v186 = vadd.f32 %v110, %v163
  %v187 = vadd.f32 %v111, %v163
  %v188 = vadd.f32 %v112, %v163
  %v189 = vadd.f32 %v113, %v163
  %v190 = vadd.f32 %v114, %v163
  %v191 = vadd.f32 %v115, %v163
  %v192 = vadd.f32 %v116, %v163
  %v193 = vadd.f32 %v117, %v163
  %v194 = vadd.f32 %v118, %v163
  %v195 = vadd.f32 %v119, %v163
  %v196 = vadd.f32 %v120, %v163
  %v197 = vadd.f32 %v121, %v163
  %v198 = vadd.f32 %v122, %v163
  %v199 = vadd.f32 %v123, %v163
  %v200 = vadd.f32 %v124, %v163
  %v201 = vadd.f32 %v125, %v163
  %v202 = vadd.f32 %v126, %v163
  %v203 = vadd.f32 %v127, %v163
  %v204 = vadd.f32 %v128, %v163
  %v205 = vadd.f32 %v129, %v163
  %v206 = vadd.f32 %v130, %v163
  %v207 = vadd.f32 %v131, %v163
  %v208 = vadd.f32 %v132, %v163
  %v209 = vadd.f32 %v133, %v163
  %v210 = vadd.f32 %v134, %v163
  %v211 = vadd.f32 %v135, %v163
  %v212 = vadd.f32 %v136, %v163
  %v213 = vadd.f32 %v137, %v163
  %v214 = vadd.f32 %v138, %v163
  %v215 = vadd.f32 %v139, %v163
  %v216 = vadd.f32 %v140, %v163
  %v217 = vadd.f32 %v141, %v163
  %v218 = vadd.f32 %v142, %v163
  %v219 = vadd.f32 %v143, %v163
  %v220 = vadd.f32 %v144, %v163
  %v221 = vadd.f32 %v145, %v163
  %v222 = vadd.f32 %v146, %v163
  %v223 = vadd.f32 %v147, %v163
  %v224 = vadd.f32 %v148, %v163
  %v225 = vadd.f32 %v149, %v163
  %v226 = vadd.f32 %v150, %v163
  %v227 = vadd.f32 %v151, %v163
  %v228 = vadd.f32 %v152, %v163
  %v229 = vadd.f32 %v153, %v163
  %v230 = vadd.f32 %v154, %v163
  %v231 = vadd.f32 %v155, %v163
  %v232 = vadd.f32 %v156, %v163
  %v233 = vadd.f32 %v157, %v163
  %v234 = vadd.f32 %v158, %v163
  %v235 = vadd.f32 %v159, %v163
  %vm236 = vcmp.ge.f32.partialorder %v164, 0.0
  %vm237 = vcmp.ge.f32.partialorder %v165, 0.0
  %vm238 = vcmp.ge.f32.partialorder %v166, 0.0
  %vm239 = vcmp.ge.f32.partialorder %v167, 0.0
  %vm240 = vcmp.ge.f32.partialorder %v168, 0.0
  %vm241 = vcmp.ge.f32.partialorder %v169, 0.0
  %vm242 = vcmp.ge.f32.partialorder %v170, 0.0
  %vm243 = vcmp.ge.f32.partialorder %v171, 0.0
  %vm244 = vcmp.ge.f32.partialorder %v172, 0.0
  %vm245 = vcmp.ge.f32.partialorder %v173, 0.0
  %vm246 = vcmp.ge.f32.partialorder %v174, 0.0
  %vm247 = vcmp.ge.f32.partialorder %v175, 0.0
  %vm248 = vcmp.ge.f32.partialorder %v176, 0.0
  %vm249 = vcmp.ge.f32.partialorder %v177, 0.0
  %vm250 = vcmp.ge.f32.partialorder %v178, 0.0
  %vm251 = vcmp.ge.f32.partialorder %v179, 0.0
  %vm252 = vcmp.ge.f32.partialorder %v180, 0.0
  %vm253 = vcmp.ge.f32.partialorder %v181, 0.0
  %vm254 = vcmp.ge.f32.partialorder %v182, 0.0
  %vm255 = vcmp.ge.f32.partialorder %v183, 0.0
  %vm256 = vcmp.ge.f32.partialorder %v184, 0.0
  %vm257 = vcmp.ge.f32.partialorder %v185, 0.0
  %vm258 = vcmp.ge.f32.partialorder %v186, 0.0
  %vm259 = vcmp.ge.f32.partialorder %v187, 0.0
  %vm260 = vcmp.ge.f32.partialorder %v188, 0.0
  %vm261 = vcmp.ge.f32.partialorder %v189, 0.0
  %vm262 = vcmp.ge.f32.partialorder %v190, 0.0
  %vm263 = vcmp.ge.f32.partialorder %v191, 0.0
  %vm264 = vcmp.ge.f32.partialorder %v192, 0.0
  %vm265 = vcmp.ge.f32.partialorder %v193, 0.0
  %vm266 = vcmp.ge.f32.partialorder %v194, 0.0
  %vm267 = vcmp.ge.f32.partialorder %v195, 0.0
  %vm268 = vcmp.ge.f32.partialorder %v196, 0.0
  %vm269 = vcmp.ge.f32.partialorder %v197, 0.0
  %vm270 = vcmp.ge.f32.partialorder %v198, 0.0
  %vm271 = vcmp.ge.f32.partialorder %v199, 0.0
  %vm272 = vcmp.ge.f32.partialorder %v200, 0.0
  %vm273 = vcmp.ge.f32.partialorder %v201, 0.0
  %vm274 = vcmp.ge.f32.partialorder %v202, 0.0
  %vm275 = vcmp.ge.f32.partialorder %v203, 0.0
  %vm276 = vcmp.ge.f32.partialorder %v204, 0.0
  %vm277 = vcmp.ge.f32.partialorder %v205, 0.0
  %vm278 = vcmp.ge.f32.partialorder %v206, 0.0
  %vm279 = vcmp.ge.f32.partialorder %v207, 0.0
  %vm280 = vcmp.ge.f32.partialorder %v208, 0.0
  %vm281 = vcmp.ge.f32.partialorder %v209, 0.0
  %vm282 = vcmp.ge.f32.partialorder %v210, 0.0
  %vm283 = vcmp.ge.f32.partialorder %v211, 0.0
  %vm284 = vcmp.ge.f32.partialorder %v212, 0.0
  %vm285 = vcmp.ge.f32.partialorder %v213, 0.0
  %vm286 = vcmp.ge.f32.partialorder %v214, 0.0
  %vm287 = vcmp.ge.f32.partialorder %v215, 0.0
  %vm288 = vcmp.ge.f32.partialorder %v216, 0.0
  %vm289 = vcmp.ge.f32.partialorder %v217, 0.0
  %vm290 = vcmp.ge.f32.partialorder %v218, 0.0
  %vm291 = vcmp.ge.f32.partialorder %v219, 0.0
  %vm292 = vcmp.ge.f32.partialorder %v220, 0.0
  %vm293 = vcmp.ge.f32.partialorder %v221, 0.0
  %vm294 = vcmp.ge.f32.partialorder %v222, 0.0
  %vm295 = vcmp.ge.f32.partialorder %v223, 0.0
  %vm296 = vcmp.ge.f32.partialorder %v224, 0.0
  %vm297 = vcmp.ge.f32.partialorder %v225, 0.0
  %vm298 = vcmp.ge.f32.partialorder %v226, 0.0
  %vm299 = vcmp.ge.f32.partialorder %v227, 0.0
  %vm300 = vcmp.ge.f32.partialorder %v228, 0.0
  %vm301 = vcmp.ge.f32.partialorder %v229, 0.0
  %vm302 = vcmp.ge.f32.partialorder %v230, 0.0
  %vm303 = vcmp.ge.f32.partialorder %v231, 0.0
  %vm304 = vcmp.ge.f32.partialorder %v232, 0.0
  %vm305 = vcmp.ge.f32.partialorder %v233, 0.0
  %vm306 = vcmp.ge.f32.partialorder %v234, 0.0
  %vm307 = vcmp.ge.f32.partialorder %v235, 0.0
  %v308 = vmul.f32 %v164, 0.01
  %v309 = vmul.f32 %v165, 0.01
  %v310 = vmul.f32 %v166, 0.01
  %v311 = vmul.f32 %v167, 0.01
  %v312 = vmul.f32 %v168, 0.01
  %v313 = vmul.f32 %v169, 0.01
  %v314 = vmul.f32 %v170, 0.01
  %v315 = vmul.f32 %v171, 0.01
  %v316 = vmul.f32 %v172, 0.01
  %v317 = vmul.f32 %v173, 0.01
  %v318 = vmul.f32 %v174, 0.01
  %v319 = vmul.f32 %v175, 0.01
  %v320 = vmul.f32 %v176, 0.01
  %v321 = vmul.f32 %v177, 0.01
  %v322 = vmul.f32 %v178, 0.01
  %v323 = vmul.f32 %v179, 0.01
  %v324 = vmul.f32 %v180, 0.01
  %v325 = vmul.f32 %v181, 0.01
  %v326 = vmul.f32 %v182, 0.01
  %v327 = vmul.f32 %v183, 0.01
  %v328 = vmul.f32 %v184, 0.01
  %v329 = vmul.f32 %v185, 0.01
  %v330 = vmul.f32 %v186, 0.01
  %v331 = vmul.f32 %v187, 0.01
  %v332 = vmul.f32 %v188, 0.01
  %v333 = vmul.f32 %v189, 0.01
  %v334 = vmul.f32 %v190, 0.01
  %v335 = vmul.f32 %v191, 0.01
  %v336 = vmul.f32 %v192, 0.01
  %v337 = vmul.f32 %v193, 0.01
  %v338 = vmul.f32 %v194, 0.01
  %v339 = vmul.f32 %v195, 0.01
  %v340 = vmul.f32 %v196, 0.01
  %v341 = vmul.f32 %v197, 0.01
  %v342 = vmul.f32 %v198, 0.01
  %v343 = vmul.f32 %v199, 0.01
  %v344 = vmul.f32 %v200, 0.01
  %v345 = vmul.f32 %v201, 0.01
  %v346 = vmul.f32 %v202, 0.01
  %v347 = vmul.f32 %v203, 0.01
  %v348 = vmul.f32 %v204, 0.01
  %v349 = vmul.f32 %v205, 0.01
  %v350 = vmul.f32 %v206, 0.01
  %v351 = vmul.f32 %v207, 0.01
  %v352 = vmul.f32 %v208, 0.01
  %v353 = vmul.f32 %v209, 0.01
  %v354 = vmul.f32 %v210, 0.01
  %v355 = vmul.f32 %v211, 0.01
  %v356 = vmul.f32 %v212, 0.01
  %v357 = vmul.f32 %v213, 0.01
  %v358 = vmul.f32 %v214, 0.01
  %v359 = vmul.f32 %v215, 0.01
  %v360 = vmul.f32 %v216, 0.01
  %v361 = vmul.f32 %v217, 0.01
  %v362 = vmul.f32 %v218, 0.01
  %v363 = vmul.f32 %v219, 0.01
  %v364 = vmul.f32 %v220, 0.01
  %v365 = vmul.f32 %v221, 0.01
  %v366 = vmul.f32 %v222, 0.01
  %v367 = vmul.f32 %v223, 0.01
  %v368 = vmul.f32 %v224, 0.01
  %v369 = vmul.f32 %v225, 0.01
  %v370 = vmul.f32 %v226, 0.01
  %v371 = vmul.f32 %v227, 0.01
  %v372 = vmul.f32 %v228, 0.01
  %v373 = vmul.f32 %v229, 0.01
  %v374 = vmul.f32 %v230, 0.01
  %v375 = vmul.f32 %v231, 0.01
  %v376 = vmul.f32 %v232, 0.01
  %v377 = vmul.f32 %v233, 0.01
  %v378 = vmul.f32 %v234, 0.01
  %v379 = vmul.f32 %v235, 0.01
  %v380 = vsel %vm236, %v164, %v308
  %v381 = vsel %vm237, %v165, %v309
  %v382 = vsel %vm238, %v166, %v310
  %v383 = vsel %vm239, %v167, %v311
  %v384 = vsel %vm240, %v168, %v312
  %v385 = vsel %vm241, %v169, %v313
  %v386 = vsel %vm242, %v170, %v314
  %v387 = vsel %vm243, %v171, %v315
  %v388 = vsel %vm244, %v172, %v316
  %v389 = vsel %vm245, %v173, %v317
  %v390 = vsel %vm246, %v174, %v318
  %v391 = vsel %vm247, %v175, %v319
  %v392 = vsel %vm248, %v176, %v320
  %v393 = vsel %vm249, %v177, %v321
  %v394 = vsel %vm250, %v178, %v322
  %v395 = vsel %vm251, %v179, %v323
  %v396 = vsel %vm252, %v180, %v324
  %v397 = vsel %vm253, %v181, %v325
  %v398 = vsel %vm254, %v182, %v326
  %v399 = vsel %vm255, %v183, %v327
  %v400 = vsel %vm256, %v184, %v328
  %v401 = vsel %vm257, %v185, %v329
  %v402 = vsel %vm258, %v186, %v330
  %v403 = vsel %vm259, %v187, %v331
  %v404 = vsel %vm260, %v188, %v332
  %v405 = vsel %vm261, %v189, %v333
  %v406 = vsel %vm262, %v190, %v334
  %v407 = vsel %vm263, %v191, %v335
  %v408 = vsel %vm264, %v192, %v336
  %v409 = vsel %vm265, %v193, %v337
  %v410 = vsel %vm266, %v194, %v338
  %v411 = vsel %vm267, %v195, %v339
  %v412 = vsel %vm268, %v196, %v340
  %v413 = vsel %vm269, %v197, %v341
  %v414 = vsel %vm270, %v198, %v342
  %v415 = vsel %vm271, %v199, %v343
  %v416 = vsel %vm272, %v200, %v344
  %v417 = vsel %vm273, %v201, %v345
  %v418 = vsel %vm274, %v202, %v346
  %v419 = vsel %vm275, %v203, %v347
  %v420 = vsel %vm276, %v204, %v348
  %v421 = vsel %vm277, %v205, %v349
  %v422 = vsel %vm278, %v206, %v350
  %v423 = vsel %vm279, %v207, %v351
  %v424 = vsel %vm280, %v208, %v352
  %v425 = vsel %vm281, %v209, %v353
  %v426 = vsel %vm282, %v210, %v354
  %v427 = vsel %vm283, %v211, %v355
  %v428 = vsel %vm284, %v212, %v356
  %v429 = vsel %vm285, %v213, %v357
  %v430 = vsel %vm286, %v214, %v358
  %v431 = vsel %vm287, %v215, %v359
  %v432 = vsel %vm288, %v216, %v360
  %v433 = vsel %vm289, %v217, %v361
  %v434 = vsel %vm290, %v218, %v362
  %v435 = vsel %vm291, %v219, %v363
  %v436 = vsel %vm292, %v220, %v364
  %v437 = vsel %vm293, %v221, %v365
  %v438 = vsel %vm294, %v222, %v366
  %v439 = vsel %vm295, %v223, %v367
  %v440 = vsel %vm296, %v224, %v368
  %v441 = vsel %vm297, %v225, %v369
  %v442 = vsel %vm298, %v226, %v370
  %v443 = vsel %vm299, %v227, %v371
  %v444 = vsel %vm300, %v228, %v372
  %v445 = vsel %vm301, %v229, %v373
  %v446 = vsel %vm302, %v230, %v374
  %v447 = vsel %vm303, %v231, %v375
  %v448 = vsel %vm304, %v232, %v376
  %v449 = vsel %vm305, %v233, %v377
  %v450 = vsel %vm306, %v234, %v378
  %v451 = vsel %vm307, %v235, %v379
  %vm452 = vcmask 64512
  %453 = vst.msk [vmem:[%s2] sm:$0xff] %vm452, %v380
  %454 = vst.msk [vmem:[%s2 + $0x8] sm:$0xff] %vm452, %v381
  %455 = vst.msk [vmem:[%s2 + $0x10] sm:$0xff] %vm452, %v382
  %456 = vst.msk [vmem:[%s2 + $0x18] sm:$0xff] %vm452, %v383
  %457 = vst.msk [vmem:[%s2 + $0x20] sm:$0xff] %vm452, %v384
  %458 = vst.msk [vmem:[%s2 + $0x28] sm:$0xff] %vm452, %v385
  %459 = vst.msk [vmem:[%s2 + $0x30] sm:$0xff] %vm452, %v386
  %460 = vst.msk [vmem:[%s2 + $0x38] sm:$0xff] %vm452, %v387
  %461 = vst.msk [vmem:[%s2 + $0x40] sm:$0xff] %vm452, %v388
  %462 = vst.msk [vmem:[%s2 + $0x48] sm:$0xff] %vm452, %v389
  %463 = vst.msk [vmem:[%s2 + $0x50] sm:$0xff] %vm452, %v390
  %464 = vst.msk [vmem:[%s2 + $0x58] sm:$0xff] %vm452, %v391
  %465 = vst.msk [vmem:[%s2 + $0x60] sm:$0xff] %vm452, %v392
  %466 = vst.msk [vmem:[%s2 + $0x68] sm:$0xff] %vm452, %v393
  %467 = vst.msk [vmem:[%s2 + $0x70] sm:$0xff] %vm452, %v394
  %468 = vst.msk [vmem:[%s2 + $0x78] sm:$0xff] %vm452, %v395
  %469 = vst.msk [vmem:[%s2 + $0x80] sm:$0xff] %vm452, %v396
  %470 = vst.msk [vmem:[%s2 + $0x88] sm:$0xff] %vm452, %v397
  %471 = vst.msk [vmem:[%s2 + $0x90] sm:$0xff] %vm452, %v398
  %472 = vst.msk [vmem:[%s2 + $0x98] sm:$0xff] %vm452, %v399
  %473 = vst.msk [vmem:[%s2 + $0xa0] sm:$0xff] %vm452, %v400
  %474 = vst.msk [vmem:[%s2 + $0xa8] sm:$0xff] %vm452, %v401
  %475 = vst.msk [vmem:[%s2 + $0xb0] sm:$0xff] %vm452, %v402
  %476 = vst.msk [vmem:[%s2 + $0xb8] sm:$0xff] %vm452, %v403
  %477 = vst.msk [vmem:[%s2 + $0xc0] sm:$0xff] %vm452, %v404
  %478 = vst.msk [vmem:[%s2 + $0xc8] sm:$0xff] %vm452, %v405
  %479 = vst.msk [vmem:[%s2 + $0xd0] sm:$0xff] %vm452, %v406
  %480 = vst.msk [vmem:[%s2 + $0xd8] sm:$0xff] %vm452, %v407
  %481 = vst.msk [vmem:[%s2 + $0xe0] sm:$0xff] %vm452, %v408
  %482 = vst.msk [vmem:[%s2 + $0xe8] sm:$0xff] %vm452, %v409
  %483 = vst.msk [vmem:[%s2 + $0xf0] sm:$0xff] %vm452, %v410
  %484 = vst.msk [vmem:[%s2 + $0xf8] sm:$0xff] %vm452, %v411
  %485 = vst.msk [vmem:[%s2 + $0x100] sm:$0xff] %vm452, %v412
  %486 = vst.msk [vmem:[%s2 + $0x108] sm:$0xff] %vm452, %v413
  %487 = vst.msk [vmem:[%s2 + $0x110] sm:$0xff] %vm452, %v414
  %488 = vst.msk [vmem:[%s2 + $0x118] sm:$0xff] %vm452, %v415
  %489 = vst.msk [vmem:[%s2 + $0x120] sm:$0xff] %vm452, %v416
  %490 = vst.msk [vmem:[%s2 + $0x128] sm:$0xff] %vm452, %v417
  %491 = vst.msk [vmem:[%s2 + $0x130] sm:$0xff] %vm452, %v418
  %492 = vst.msk [vmem:[%s2 + $0x138] sm:$0xff] %vm452, %v419
  %493 = vst.msk [vmem:[%s2 + $0x140] sm:$0xff] %vm452, %v420
  %494 = vst.msk [vmem:[%s2 + $0x148] sm:$0xff] %vm452, %v421
  %495 = vst.msk [vmem:[%s2 + $0x150] sm:$0xff] %vm452, %v422
  %496 = vst.msk [vmem:[%s2 + $0x158] sm:$0xff] %vm452, %v423
  %497 = vst.msk [vmem:[%s2 + $0x160] sm:$0xff] %vm452, %v424
  %498 = vst.msk [vmem:[%s2 + $0x168] sm:$0xff] %vm452, %v425
  %499 = vst.msk [vmem:[%s2 + $0x170] sm:$0xff] %vm452, %v426
  %500 = vst.msk [vmem:[%s2 + $0x178] sm:$0xff] %vm452, %v427
  %501 = vst.msk [vmem:[%s2 + $0x180] sm:$0xff] %vm452, %v428
  %502 = vst.msk [vmem:[%s2 + $0x188] sm:$0xff] %vm452, %v429
  %503 = vst.msk [vmem:[%s2 + $0x190] sm:$0xff] %vm452, %v430
  %504 = vst.msk [vmem:[%s2 + $0x198] sm:$0xff] %vm452, %v431
  %505 = vst.msk [vmem:[%s2 + $0x1a0] sm:$0xff] %vm452, %v432
  %506 = vst.msk [vmem:[%s2 + $0x1a8] sm:$0xff] %vm452, %v433
  %507 = vst.msk [vmem:[%s2 + $0x1b0] sm:$0xff] %vm452, %v434
  %508 = vst.msk [vmem:[%s2 + $0x1b8] sm:$0xff] %vm452, %v435
  %509 = vst.msk [vmem:[%s2 + $0x1c0] sm:$0xff] %vm452, %v436
  %510 = vst.msk [vmem:[%s2 + $0x1c8] sm:$0xff] %vm452, %v437
  %511 = vst.msk [vmem:[%s2 + $0x1d0] sm:$0xff] %vm452, %v438
  %512 = vst.msk [vmem:[%s2 + $0x1d8] sm:$0xff] %vm452, %v439
  %513 = vst.msk [vmem:[%s2 + $0x1e0] sm:$0xff] %vm452, %v440
  %514 = vst.msk [vmem:[%s2 + $0x1e8] sm:$0xff] %vm452, %v441
  %515 = vst.msk [vmem:[%s2 + $0x1f0] sm:$0xff] %vm452, %v442
  %516 = vst.msk [vmem:[%s2 + $0x1f8] sm:$0xff] %vm452, %v443
  %517 = vst.msk [vmem:[%s2 + $0x200] sm:$0xff] %vm452, %v444
  %518 = vst.msk [vmem:[%s2 + $0x208] sm:$0xff] %vm452, %v445
  %519 = vst.msk [vmem:[%s2 + $0x210] sm:$0xff] %vm452, %v446
  %520 = vst.msk [vmem:[%s2 + $0x218] sm:$0xff] %vm452, %v447
  %521 = vst.msk [vmem:[%s2 + $0x220] sm:$0xff] %vm452, %v448
  %522 = vst.msk [vmem:[%s2 + $0x228] sm:$0xff] %vm452, %v449
  %523 = vst.msk [vmem:[%s2 + $0x230] sm:$0xff] %vm452, %v450
  %524 = vst.msk [vmem:[%s2 + $0x238] sm:$0xff] %vm452, %v451
  // Predicated region
  $region10: #{conv3_block.3} parent=0 // pred_check
    _
  $region11: #{conv3_block.3} parent=0 // pred_check_branch
    %526 = sbr.rel (0) target = $region13
  $region12: #{conv3_block.3} parent=0 // pred_region
    _
  $region13: #{conv3_block.3} parent=0 // pred_fallthru
    _
  // Predicated region
  $region14: #{conv3_block.3} parent=0 // pred_check
    _
  $region15: #{conv3_block.3} parent=0 // pred_check_branch
    %528 = sbr.rel (0) target = $region17
  $region16: #{conv3_block.3} parent=0 // pred_region
    _
  $region17: #{conv3_block.3} parent=0 // pred_fallthru
    _

// kernel: conv3_block.2
$region0: #{conv3_block.2}
  #allocation0 [shape = 'u32[]', space=smem, size = 0x4, offset = 0x4, fixed_abs, tag = 'smem constant byte address 0x4 - core index']
  #allocation1 [shape = 'u32[144,128]{1,0:T(1,128)}', space=vmem, size = 0x12000, scoped, tag = 'internal scratch']
  %s0 = inlined_call_operand.vmem [shape: f32[2,8,72,4], index: 0, kind: input, shape index: {}, may-alias: {0,1,2}]
  %s1 = inlined_call_operand.vmem [shape: f32[2,8,72,4], index: 1, kind: input, shape index: {}, may-alias: {0,1,2}]
  %s2 = inlined_call_operand.vmem [shape: f32[2,8,72,4], index: 2, kind: input, shape index: {}, may-alias: {0,1,2}]
  %s3 = inlined_call_operand.vmem [shape: f32[27,4,128], index: 3, kind: input, shape index: {}]
  %s4 = inlined_call_operand.vmem [shape: f32[2,6,48,8], index: 4, kind: output, shape index: {0}]
  %s5 = inlined_call_operand.vmem [shape: f32[2,6,2,8], index: 5, kind: output, shape index: {1}]
  %6 = xla_tuple %s4, %s5
  %s7 = sld [smem:[#allocation0]]
  $region57: #{conv3_block.2} parent=0
    _
  %s9 = ssub.s32 1, %s7
  %s10 = scalar_select 0, %s9, %s7
  loop: start=0, step=1, limit=14
  $region2: #{conv3_block.2} parent=0 // loop_pre_header
    _
  $region3: #{conv3_block.2} parent=0 // loop_header
    %s12 = sphi 0, %s16
    %p13 = scmp.ge.s32.totalorder %s12, 14
    %s19 = sphi 0, %s31
    %s20 = sphi 0, %s27
    %s21 = sphi 0, %s19
    %s22 = sphi 0, %s20
    %s23 = sphi 0, %s21
    %s24 = sphi 0, %s22
    %s36 = sphi 0, %s38
    %s39 = sphi 0, %s36
    %s40 = sphi 0, %s39
    %s56 = sphi 0, %s40
    %s66 = sphi 0, %s68
    %s69 = sphi 0, %s66
    %s70 = sphi 0, %s69
    %s86 = sphi 0, %s70
    %s96 = sphi 0, %s98
    %s99 = sphi 0, %s96
    %s100 = sphi 0, %s99
    %s116 = sphi 0, %s100
    %s120 = sphi 0, %s120
    %s122 = sphi 0, %s120
    %s123 = sphi 0, %s122
    %s137 = sphi 0, %s123
    %s145 = sphi 0, %s147
    %s148 = sphi 0, %s145
    %s149 = sphi 0, %s148
    %s165 = sphi 0, %s149
    %s173 = sphi 0, %s175
    %s176 = sphi 0, %s173
    %s177 = sphi 0, %s176
    %s193 = sphi 0, %s177
  $region4: #{conv3_block.2} parent=0 // loop_header_branch
    %15 = sbr.rel (%p13) target = $region8
  $region5: #{conv3_block.2} parent=0 // loop_body
    %s17 = ssub.s32 %s12, 1
    %s18 = ssub.s32 %s12, 2
    %s25 = sadd.s32 1, %s20
    %p26 = scmp.ge.s32.totalorder %s25, 6
    %s27 = scalar_select %p26, 0, %s25
    %s28 = sadd.s32 1, %s19
    %s29 = scalar_select %p26, %s28, %s19
    %p30 = scmp.ge.s32.totalorder %s29, 2
    %s31 = scalar_select %p30, 0, %s29
    %s32 = ssub.s32 %s19, %s31
    %s33 = ssub.s32 %s20, %s27
    %s34 = sor.u32 %s32, %s33
    %p35 = scmp.eq.s32.totalorder %s34, 0
    %s37 = sadd.s32 %s36, 1
    %s38 = scalar_select %p35, %s36, %s37
    %p41 = pneg %p35
    %p42 = scmp.eq.s32.totalorder %s12, 11
    %p43 = por %p41, %p42
    %p44 = scmp.ne.s32.totalorder %s36, %s39
    %p45 = scmp.eq.s32.totalorder %s12, 0
    %p46 = por %p44, %p45
    %p47 = scmp.ne.s32.totalorder %s36, %s39
    %p48 = scmp.eq.s32.totalorder %s17, 11
    %p49 = por %p47, %p48
    %p50 = scmp.ne.s32.totalorder %s39, %s40
    %p51 = scmp.eq.s32.totalorder %s17, 0
    %p52 = por %p50, %p51
    %p53 = scmp.ne.s32.totalorder %s39, %s40
    %p54 = scmp.eq.s32.totalorder %s18, 11
    %p55 = por %p53, %p54
    %p57 = scmp.ne.s32.totalorder %s40, %s56
    %p58 = scmp.eq.s32.totalorder %s18, 0
    %p59 = por %p57, %p58
    %s60 = sadd.s32 %s20, 1
    %s61 = sadd.s32 %s27, 1
    %s62 = ssub.s32 %s19, %s31
    %s63 = ssub.s32 %s60, %s61
    %s64 = sor.u32 %s62, %s63
    %p65 = scmp.eq.s32.totalorder %s64, 0
    %s67 = sadd.s32 %s66, 1
    %s68 = scalar_select %p65, %s66, %s67
    %p71 = pneg %p65
    %p72 = scmp.eq.s32.totalorder %s12, 11
    %p73 = por %p71, %p72
    %p74 = scmp.ne.s32.totalorder %s66, %s69
    %p75 = scmp.eq.s32.totalorder %s12, 0
    %p76 = por %p74, %p75
    %p77 = scmp.ne.s32.totalorder %s66, %s69
    %p78 = scmp.eq.s32.totalorder %s17, 11
    %p79 = por %p77, %p78
    %p80 = scmp.ne.s32.totalorder %s69, %s70
    %p81 = scmp.eq.s32.totalorder %s17, 0
    %p82 = por %p80, %p81
    %p83 = scmp.ne.s32.totalorder %s69, %s70
    %p84 = scmp.eq.s32.totalorder %s18, 11
    %p85 = por %p83, %p84
    %p87 = scmp.ne.s32.totalorder %s70, %s86
    %p88 = scmp.eq.s32.totalorder %s18, 0
    %p89 = por %p87, %p88
    %s90 = sadd.s32 %s20, 2
    %s91 = sadd.s32 %s27, 2
    %s92 = ssub.s32 %s19, %s31
    %s93 = ssub.s32 %s90, %s91
    %s94 = sor.u32 %s92, %s93
    %p95 = scmp.eq.s32.totalorder %s94, 0
    %s97 = sadd.s32 %s96, 1
    %s98 = scalar_select %p95, %s96, %s97
    %p101 = pneg %p95
    %p102 = scmp.eq.s32.totalorder %s12, 11
    %p103 = por %p101, %p102
    %p104 = scmp.ne.s32.totalorder %s96, %s99
    %p105 = scmp.eq.s32.totalorder %s12, 0
    %p106 = por %p104, %p105
    %p107 = scmp.ne.s32.totalorder %s96, %s99
    %p108 = scmp.eq.s32.totalorder %s17, 11
    %p109 = por %p107, %p108
    %p110 = scmp.ne.s32.totalorder %s99, %s100
    %p111 = scmp.eq.s32.totalorder %s17, 0
    %p112 = por %p110, %p111
    %p113 = scmp.ne.s32.totalorder %s99, %s100
    %p114 = scmp.eq.s32.totalorder %s18, 11
    %p115 = por %p113, %p114
    %p117 = scmp.ne.s32.totalorder %s100, %s116
    %p118 = scmp.eq.s32.totalorder %s18, 0
    %p119 = por %p117, %p118
    %s121 = sadd.s32 %s120, 1
    %p124 = scmp.eq.s32.totalorder %s12, 11
    %p125 = scmp.ne.s32.totalorder %s120, %s122
    %p126 = scmp.eq.s32.totalorder %s12, 0
    %p127 = por %p125, %p126
    %p128 = scmp.ne.s32.totalorder %s120, %s122
    %p129 = scmp.eq.s32.totalorder %s17, 11
    %p130 = por %p128, %p129
    %p131 = scmp.ne.s32.totalorder %s122, %s123
    %p132 = scmp.eq.s32.totalorder %s17, 0
    %p133 = por %p131, %p132
    %p134 = scmp.ne.s32.totalorder %s122, %s123
    %p135 = scmp.eq.s32.totalorder %s18, 11
    %p136 = por %p134, %p135
    %p138 = scmp.ne.s32.totalorder %s123, %s137
    %p139 = scmp.eq.s32.totalorder %s18, 0
    %p140 = por %p138, %p139
    %s141 = ssub.s32 %s19, %s31
    %s142 = ssub.s32 %s20, %s27
    %s143 = sor.u32 %s141, %s142
    %p144 = scmp.eq.s32.totalorder %s143, 0
    %s146 = sadd.s32 %s145, 1
    %s147 = scalar_select %p144, %s145, %s146
    %p150 = pneg %p144
    %p151 = scmp.eq.s32.totalorder %s12, 11
    %p152 = por %p150, %p151
    %p153 = scmp.ne.s32.totalorder %s145, %s148
    %p154 = scmp.eq.s32.totalorder %s12, 0
    %p155 = por %p153, %p154
    %p156 = scmp.ne.s32.totalorder %s145, %s148
    %p157 = scmp.eq.s32.totalorder %s17, 11
    %p158 = por %p156, %p157
    %p159 = scmp.ne.s32.totalorder %s148, %s149
    %p160 = scmp.eq.s32.totalorder %s17, 0
    %p161 = por %p159, %p160
    %p162 = scmp.ne.s32.totalorder %s148, %s149
    %p163 = scmp.eq.s32.totalorder %s18, 11
    %p164 = por %p162, %p163
    %p166 = scmp.ne.s32.totalorder %s149, %s165
    %p167 = scmp.eq.s32.totalorder %s18, 0
    %p168 = por %p166, %p167
    %s169 = ssub.s32 %s19, %s31
    %s170 = ssub.s32 %s20, %s27
    %s171 = sor.u32 %s169, %s170
    %p172 = scmp.eq.s32.totalorder %s171, 0
    %s174 = sadd.s32 %s173, 1
    %s175 = scalar_select %p172, %s173, %s174
    %p178 = pneg %p172
    %p179 = scmp.eq.s32.totalorder %s12, 11
    %p180 = por %p178, %p179
    %p181 = scmp.ne.s32.totalorder %s173, %s176
    %p182 = scmp.eq.s32.totalorder %s12, 0
    %p183 = por %p181, %p182
    %p184 = scmp.ne.s32.totalorder %s173, %s176
    %p185 = scmp.eq.s32.totalorder %s17, 11
    %p186 = por %p184, %p185
    %p187 = scmp.ne.s32.totalorder %s176, %s177
    %p188 = scmp.eq.s32.totalorder %s17, 0
    %p189 = por %p187, %p188
    %p190 = scmp.ne.s32.totalorder %s176, %s177
    %p191 = scmp.eq.s32.totalorder %s18, 11
    %p192 = por %p190, %p191
    %p194 = scmp.ne.s32.totalorder %s177, %s193
    %p195 = scmp.eq.s32.totalorder %s18, 0
    %p196 = por %p194, %p195
    %p197 = scmp.le.s32.totalorder 1, %s12
    %p198 = scmp.lt.s32.totalorder %s12, 13
    %p199 = pnand %p197, %p198
    %p200 = pneg %p199
    // Predicated region
    $region9: #{conv3_block.2} parent=5 // pred_check
      _
    $region10: #{conv3_block.2} parent=5 // pred_check_branch
      %202 = sbr.rel (%p199) target = $region12
    $region11: #{conv3_block.2} parent=5 // pred_region
      %s203 = ssub.s32 %s12, 1
      // Predicated region
      $region13: #{conv3_block.2} parent=11 // pred_check
        %p204 = pneg %p133
      $region14: #{conv3_block.2} parent=11 // pred_check_branch
        %206 = sbr.rel (%p204) target = $region16
      $region15: #{conv3_block.2} parent=11 // pred_region
        _
      $region16: #{conv3_block.2} parent=11 // pred_fallthru
        _
    $region12: #{conv3_block.2} parent=5 // pred_fallthru
      _
    %p207 = scmp.lt.s32.totalorder %s12, 12
    // Predicated region
    $region17: #{conv3_block.2} parent=5 // pred_check
      %p208 = pneg %p207
    $region18: #{conv3_block.2} parent=5 // pred_check_branch
      %210 = sbr.rel (%p208) target = $region20
    $region19: #{conv3_block.2} parent=5 // pred_region
      // Predicated region
      $region21: #{conv3_block.2} parent=19 // pred_check
        %p211 = pneg %p46
      $region22: #{conv3_block.2} parent=19 // pred_check_branch
        %213 = sbr.rel (%p211) target = $region24
      $region23: #{conv3_block.2} parent=19 // pred_region
        %p214 = scmp.lt.s32.totalorder %s19, 1
        %s215 = scalar_select %p214, %s19, 1
        %p216 = scmp.lt.s32.totalorder %s20, 7
        %s217 = scalar_select %p216, %s20, 7
        %s218 = smul.addr %s217, 9
        %s219 = smul.addr %s215, 72
        %s220 = sadd.s32 %s218, %s219
        %s221 = smul.addr %s220, 8
        %s222 = scalar_lea.vmem %s0, %s221
      $region24: #{conv3_block.2} parent=19 // pred_fallthru
        _
      // Predicated region
      $region25: #{conv3_block.2} parent=19 // pred_check
        %p223 = pneg %p76
      $region26: #{conv3_block.2} parent=19 // pred_check_branch
        %225 = sbr.rel (%p223) target = $region28
      $region27: #{conv3_block.2} parent=19 // pred_region
        %s226 = sadd.s32 %s20, 1
        %p227 = scmp.lt.s32.totalorder %s19, 1
        %s228 = scalar_select %p227, %s19, 1
        %p229 = scmp.lt.s32.totalorder %s226, 7
        %s230 = scalar_select %p229, %s226, 7
        %s231 = smul.addr %s230, 9
        %s232 = smul.addr %s228, 72
        %s233 = sadd.s32 %s231, %s232
        %s234 = smul.addr %s233, 8
        %s235 = scalar_lea.vmem %s1, %s234
        %s236 = sadd.s32 %s20, 1
      $region28: #{conv3_block.2} parent=19 // pred_fallthru
        _
      // Predicated region
      $region29: #{conv3_block.2} parent=19 // pred_check
        %p237 = pneg %p106
      $region30: #{conv3_block.2} parent=19 // pred_check_branch
        %239 = sbr.rel (%p237) target = $region32
      $region31: #{conv3_block.2} parent=19 // pred_region
        %s240 = sadd.s32 %s20, 2
        %p241 = scmp.lt.s32.totalorder %s19, 1
        %s242 = scalar_select %p241, %s19, 1
        %p243 = scmp.lt.s32.totalorder %s240, 7
        %s244 = scalar_select %p243, %s240, 7
        %s245 = smul.addr %s244, 9
        %s246 = smul.addr %s242, 72
        %s247 = sadd.s32 %s245, %s246
        %s248 = smul.addr %s247, 8
        %s249 = scalar_lea.vmem %s2, %s248
        %s250 = sadd.s32 %s20, 2
      $region32: #{conv3_block.2} parent=19 // pred_fallthru
        _
    $region20: #{conv3_block.2} parent=5 // pred_fallthru
      _
    %p251 = scmp.le.s32.totalorder 1, %s12
    %p252 = scmp.lt.s32.totalorder %s12, 13
    %p253 = pnand %p251, %p252
    %p254 = pneg %p253
    // Predicated region
    $region33: #{conv3_block.2} parent=5 // pred_check
      _
    $region34: #{conv3_block.2} parent=5 // pred_check_branch
      %256 = sbr.rel (%p253) target = $region36
    $region35: #{conv3_block.2} parent=5 // pred_region
      %s257 = ssub.s32 %s12, 1
      %p258 = scmp.lt.s32.totalorder %s21, 1
      %s259 = scalar_select %p258, %s21, 1
      %p260 = scmp.lt.s32.totalorder %s22, 7
      %s261 = scalar_select %p260, %s22, 7
      %s262 = smul.addr %s261, 9
      %s263 = smul.addr %s259, 72
      %s264 = sadd.s32 %s262, %s263
      %s265 = smul.addr %s264, 8
      %s266 = scalar_lea.vmem %s0, %s265
      %p267 = pneg %p52
      %p268 = pneg %p49
      %s269 = sadd.s32 %s22, 1
      %p270 = scmp.lt.s32.totalorder %s21, 1
      %s271 = scalar_select %p270, %s21, 1
      %p272 = scmp.lt.s32.totalorder %s269, 7
      %s273 = scalar_select %p272, %s269, 7
      %s274 = smul.addr %s273, 9
      %s275 = smul.addr %s271, 72
      %s276 = sadd.s32 %s274, %s275
      %s277 = smul.addr %s276, 8
      %s278 = scalar_lea.vmem %s1, %s277
      %p279 = pneg %p82
      %p280 = pneg %p79
      %s281 = sadd.s32 %s22, 2
      %p282 = scmp.lt.s32.totalorder %s21, 1
      %s283 = scalar_select %p282, %s21, 1
      %p284 = scmp.lt.s32.totalorder %s281, 7
      %s285 = scalar_select %p284, %s281, 7
      %s286 = smul.addr %s285, 9
      %s287 = smul.addr %s283, 72
      %s288 = sadd.s32 %s286, %s287
      %s289 = smul.addr %s288, 8
      %s290 = scalar_lea.vmem %s2, %s289
      %p291 = pneg %p112
      %p292 = pneg %p109
      %p293 = pneg %p133
      %p294 = pneg %p130
      %p295 = pneg %p161
      %p296 = pneg %p158
      %p297 = scmp.lt.s32.totalorder %s21, 1
      %s298 = scalar_select %p297, %s21, 1
      %p299 = scmp.lt.s32.totalorder %s22, 5
      %s300 = scalar_select %p299, %s22, 5
      %s301 = smul.addr %s300, 6
      %s302 = smul.addr %s298, 36
      %s303 = sadd.s32 %s301, %s302
      %s304 = smul.addr %s303, 8
      %s305 = scalar_lea.vmem %s4, %s304
      %p306 = pneg %p189
      %p307 = pneg %p186
      %p308 = scmp.lt.s32.totalorder %s21, 1
      %s309 = scalar_select %p308, %s21, 1
      %p310 = scmp.lt.s32.totalorder %s22, 5
      %s311 = scalar_select %p310, %s22, 5
      %s312 = smul.addr %s309, 6
      %s313 = sadd.s32 %s311, %s312
      %s314 = smul.addr %s313, 2
      %s315 = scalar_lea.vmem %s5, %s314
      %p316 = scmp.lt.s32.totalorder %s21, 1
      %s317 = scalar_select %p316, %s21, 1
      %p318 = scmp.lt.s32.totalorder %s22, 7
      %s319 = scalar_select %p318, %s22, 7
      %s320 = smul.addr %s319, 9
      %s321 = smul.addr %s317, 72
      %s322 = sadd.s32 %s320, %s321
      %s323 = smul.addr %s322, 8
      %s324 = scalar_lea.vmem %s0, %s323
      %s325 = sadd.s32 %s22, 1
      %p326 = scmp.lt.s32.totalorder %s21, 1
      %s327 = scalar_select %p326, %s21, 1
      %p328 = scmp.lt.s32.totalorder %s325, 7
      %s329 = scalar_select %p328, %s325, 7
      %s330 = smul.addr %s329, 9
      %s331 = smul.addr %s327, 72
      %s332 = sadd.s32 %s330, %s331
      %s333 = smul.addr %s332, 8
      %s334 = scalar_lea.vmem %s1, %s333
      %s335 = sadd.s32 %s22, 1
      %s336 = sadd.s32 %s22, 2
      %p337 = scmp.lt.s32.totalorder %s21, 1
      %s338 = scalar_select %p337, %s21, 1
      %p339 = scmp.lt.s32.totalorder %s336, 7
      %s340 = scalar_select %p339, %s336, 7
      %s341 = smul.addr %s340, 9
      %s342 = smul.addr %s338, 72
      %s343 = sadd.s32 %s341, %s342
      %s344 = smul.addr %s343, 8
      %s345 = scalar_lea.vmem %s2, %s344
      %s346 = sadd.s32 %s22, 2
      %p347 = scmp.lt.s32.totalorder %s21, 1
      %s348 = scalar_select %p347, %s21, 1
      %p349 = scmp.lt.s32.totalorder %s22, 5
      %s350 = scalar_select %p349, %s22, 5
      %s351 = smul.addr %s350, 6
      %s352 = smul.addr %s348, 36
      %s353 = sadd.s32 %s351, %s352
      %s354 = smul.addr %s353, 8
      %s355 = scalar_lea.vmem %s4, %s354
      %p356 = scmp.lt.s32.totalorder %s21, 1
      %s357 = scalar_select %p356, %s21, 1
      %p358 = scmp.lt.s32.totalorder %s22, 5
      %s359 = scalar_select %p358, %s22, 5
      %s360 = smul.addr %s357, 6
      %s361 = sadd.s32 %s359, %s360
      %s362 = smul.addr %s361, 2
      %s363 = scalar_lea.vmem %s5, %s362
      %v364 = vld [vmem:[%s324] sm:$0xff]
      %v365 = vld [vmem:[%s324 + $0x8] sm:$0xff]
      %v366 = vld [vmem:[%s324 + $0x10] sm:$0xff]
      %v367 = vld [vmem:[%s324 + $0x18] sm:$0xff]
      %v368 = vld [vmem:[%s324 + $0x20] sm:$0xff]
      %v369 = vld [vmem:[%s324 + $0x28] sm:$0xff]
      %v370 = vld [vmem:[%s3] sm:$0xf]
      %s371 = sadd.s32 0, 1
      %s372 = scalar_lea.vmem %s324, %s371
      %v373 = vld [vmem:[%s372] sm:$0xff]
      %v374 = vld [vmem:[%s372 + $0x8] sm:$0xff]
      %v375 = vld [vmem:[%s372 + $0x10] sm:$0xff]
      %v376 = vld [vmem:[%s372 + $0x18] sm:$0xff]
      %v377 = vld [vmem:[%s372 + $0x20] sm:$0xff]
      %v378 = vld [vmem:[%s372 + $0x28] sm:$0xff]
      %s379 = scalar_lea.vmem %s3, 4
      %v380 = vld [vmem:[%s379] sm:$0xf]
      %vm381 = vcmask 31744
      %v383 = vsel %vm381, %v373, 0
      %v386 = vsel %vm381, %v374, 0
      %v389 = vsel %vm381, %v375, 0
      %v392 = vsel %vm381, %v376, 0
      %v395 = vsel %vm381, %v377, 0
      %v398 = vsel %vm381, %v378, 0
      %vm400 = vcmask 1043456
      %v402 = vsel %vm400, %v380, 0
      %404 = vmatprep.subr.mxu0 0.0
      %405 = vmatpush1.msra.mxu0 0.0
      %406 = vmatprep.subr.mxu0 0.0
      %407 = vmatpush1.msra.mxu0 0.0
      %408 = vmatprep.subr.mxu0 0.0
      %409 = vmatpush1.msra.mxu0 0.0
      %410 = vmatprep.subr.mxu0 0.0
      %411 = vmatpush1.msra.mxu0 0.0
      %412 = vmatprep.subr.mxu0 0.0
      %413 = vmatpush1.msra.mxu0 0.0
      %414 = vmatprep.subr.mxu0 0.0
      %415 = vmatpush1.msra.mxu0 0.0
      %416 = vmatprep.subr.mxu0 0.0
      %417 = vmatpush1.msra.mxu0 0.0
      %418 = vmatprep.subr.mxu0 0.0
      %419 = vmatpush1.msra.mxu0 0.0
      %420 = vmatprep.subr.mxu0 0.0
      %421 = vmatpush1.msra.mxu0 0.0
      %422 = vmatprep.subr.mxu0 0.0
      %423 = vmatpush1.msra.mxu0 0.0
      %424 = vmatprep.subr.mxu0 0.0
      %425 = vmatpush1.msra.mxu0 0.0
      %426 = vmatprep.subr.mxu0 0.0
      %427 = vmatpush1.msra.mxu0 0.0
      %428 = vmatprep.subr.mxu0 0.0
      %429 = vmatpush1.msra.mxu0 0.0
      %430 = vmatprep.subr.mxu0 0.0
      %431 = vmatpush1.msra.mxu0 0.0
      %432 = vmatprep.subr.mxu0 0.0
      %433 = vmatpush1.msra.mxu0 0.0
      %434 = vmatprep.subr.mxu0 0.0
      %435 = vmatpush1.msra.mxu0 %v402
      %436 = vmatprep.subr.mxu0 0.0
      %437 = vmatpush2.msra.mxu0 0.0
      %438 = vmatprep.subr.mxu0 0.0
      %439 = vmatpush2.msra.mxu0 0.0
      %440 = vmatprep.subr.mxu0 0.0
      %441 = vmatpush2.msra.mxu0 0.0
      %442 = vmatprep.subr.mxu0 0.0
      %443 = vmatpush2.msra.mxu0 0.0
      %444 = vmatprep.subr.mxu0 0.0
      %445 = vmatpush2.msra.mxu0 0.0
      %446 = vmatprep.subr.mxu0 0.0
      %447 = vmatpush2.msra.mxu0 0.0
      %448 = vmatprep.subr.mxu0 0.0
      %449 = vmatpush2.msra.mxu0 0.0
      %450 = vmatprep.subr.mxu0 0.0
      %451 = vmatpush2.msra.mxu0 0.0
      %452 = vmatprep.subr.mxu0 0.0
      %453 = vmatpush2.msra.mxu0 0.0
      %454 = vmatprep.subr.mxu0 0.0
      %455 = vmatpush2.msra.mxu0 0.0
      %456 = vmatprep.subr.mxu0 0.0
      %457 = vmatpush2.msra.mxu0 0.0
      %458 = vmatprep.subr.mxu0 0.0
      %459 = vmatpush2.msra.mxu0 0.0
      %460 = vmatprep.subr.mxu0 0.0
      %461 = vmatpush2.msra.mxu0 0.0
      %462 = vmatprep.subr.mxu0 0.0
      %463 = vmatpush2.msra.mxu0 0.0
      %464 = vmatprep.subr.mxu0 0.0
      %465 = vmatpush2.msra.mxu0 0.0
      %466 = vmatprep.subr.mxu0 0.0
      %467 = vmatpush2.msra.mxu0 0.0
      %468 = vmatprep.mubr.f32.mxu0 0.0
      %469 = vmatmul.mubr.f32.gmra.mxu0 %v383
      %v470 = vpop.f32.mrf.mxu0
      %v471 = vadd.f32 0.0, %v470
      %v472 = vpop.f32.mrf.mxu0
      %473 = vmatprep.mubr.f32.mxu0 0.0
      %474 = vmatmul.mubr.f32.gmra.mxu0 %v386
      %v475 = vpop.f32.mrf.mxu0
      %v476 = vadd.f32 0.0, %v475
      %v477 = vpop.f32.mrf.mxu0
      %478 = vmatprep.mubr.f32.mxu0 0.0
      %479 = vmatmul.mubr.f32.gmra.mxu0 %v389
      %v480 = vpop.f32.mrf.mxu0
      %v481 = vadd.f32 0.0, %v480
      %v482 = vpop.f32.mrf.mxu0
      %483 = vmatprep.mubr.f32.mxu0 0.0
      %484 = vmatmul.mubr.f32.gmra.mxu0 %v392
      %v485 = vpop.f32.mrf.mxu0
      %v486 = vadd.f32 0.0, %v485
      %v487 = vpop.f32.mrf.mxu0
      %488 = vmatprep.mubr.f32.mxu0 0.0
      %489 = vmatmul.mubr.f32.gmra.mxu0 %v395
      %v490 = vpop.f32.mrf.mxu0
      %v491 = vadd.f32 0.0, %v490
      %v492 = vpop.f32.mrf.mxu0
      %493 = vmatprep.mubr.f32.mxu0 0.0
      %494 = vmatmul.mubr.f32.gmra.mxu0 %v398
      %v495 = vpop.f32.mrf.mxu0
      %v496 = vadd.f32 0.0, %v495
      %v497 = vpop.f32.mrf.mxu0
      %498 = vdwg.mxu0
      %v500 = vsel %vm381, %v364, 0
      %v503 = vsel %vm381, %v365, 0
      %v506 = vsel %vm381, %v366, 0
      %v509 = vsel %vm381, %v367, 0
      %v512 = vsel %vm381, %v368, 0
      %v515 = vsel %vm381, %v369, 0
      %v518 = vsel %vm400, %v370, 0
      %520 = vmatprep.subr.mxu0 0.0
      %521 = vmatpush1.msra.mxu0 0.0
      %522 = vmatprep.subr.mxu0 0.0
      %523 = vmatpush1.msra.mxu0 0.0
      %524 = vmatprep.subr.mxu0 0.0
      %525 = vmatpush1.msra.mxu0 0.0
      %526 = vmatprep.subr.mxu0 0.0
      %527 = vmatpush1.msra.mxu0 0.0
      %528 = vmatprep.subr.mxu0 0.0
      %529 = vmatpush1.msra.mxu0 0.0
      %530 = vmatprep.subr.mxu0 0.0
      %531 = vmatpush1.msra.mxu0 0.0
      %532 = vmatprep.subr.mxu0 0.0
      %533 = vmatpush1.msra.mxu0 0.0
      %534 = vmatprep.subr.mxu0 0.0
      %535 = vmatpush1.msra.mxu0 0.0
      %536 = vmatprep.subr.mxu0 0.0
      %537 = vmatpush1.msra.mxu0 0.0
      %538 = vmatprep.subr.mxu0 0.0
      %539 = vmatpush1.msra.mxu0 0.0
      %540 = vmatprep.subr.mxu0 0.0
      %541 = vmatpush1.msra.mxu0 0.0
      %542 = vmatprep.subr.mxu0 0.0
      %543 = vmatpush1.msra.mxu0 0.0
      %544 = vmatprep.subr.mxu0 0.0
      %545 = vmatpush1.msra.mxu0 0.0
      %546 = vmatprep.subr.mxu0 0.0
      %547 = vmatpush1.msra.mxu0 0.0
      %548 = vmatprep.subr.mxu0 0.0
      %549 = vmatpush1.msra.mxu0 0.0
      %550 = vmatprep.subr.mxu0 0.0
      %551 = vmatpush1.msra.mxu0 %v518
      %552 = vmatprep.subr.mxu0 0.0
      %553 = vmatpush2.msra.mxu0 0.0
      %554 = vmatprep.subr.mxu0 0.0
      %555 = vmatpush2.msra.mxu0 0.0
      %556 = vmatprep.subr.mxu0 0.0
      %557 = vmatpush2.msra.mxu0 0.0
      %558 = vmatprep.subr.mxu0 0.0
      %559 = vmatpush2.msra.mxu0 0.0
      %560 = vmatprep.subr.mxu0 0.0
      %561 = vmatpush2.msra.mxu0 0.0
      %562 = vmatprep.subr.mxu0 0.0
      %563 = vmatpush2.msra.mxu0 0.0
      %564 = vmatprep.subr.mxu0 0.0
      %565 = vmatpush2.msra.mxu0 0.0
      %566 = vmatprep.subr.mxu0 0.0
      %567 = vmatpush2.msra.mxu0 0.0
      %568 = vmatprep.subr.mxu0 0.0
      %569 = vmatpush2.msra.mxu0 0.0
      %570 = vmatprep.subr.mxu0 0.0
      %571 = vmatpush2.msra.mxu0 0.0
      %572 = vmatprep.subr.mxu0 0.0
      %573 = vmatpush2.msra.mxu0 0.0
      %574 = vmatprep.subr.mxu0 0.0
      %575 = vmatpush2.msra.mxu0 0.0
      %576 = vmatprep.subr.mxu0 0.0
      %577 = vmatpush2.msra.mxu0 0.0
      %578 = vmatprep.subr.mxu0 0.0
      %579 = vmatpush2.msra.mxu0 0.0
      %580 = vmatprep.subr.mxu0 0.0
      %581 = vmatpush2.msra.mxu0 0.0
      %582 = vmatprep.subr.mxu0 0.0
      %583 = vmatpush2.msra.mxu0 0.0
      %584 = vmatprep.mubr.f32.mxu0 0.0
      %585 = vmatmul.mubr.f32.gmra.mxu0 %v500
      %v586 = vpop.f32.mrf.mxu0
      %v587 = vadd.f32 %v471, %v586
      %v588 = vpop.f32.mrf.mxu0
      %589 = vmatprep.mubr.f32.mxu0 0.0
      %590 = vmatmul.mubr.f32.gmra.mxu0 %v503
      %v591 = vpop.f32.mrf.mxu0
      %v592 = vadd.f32 %v476, %v591
      %v593 = vpop.f32.mrf.mxu0
      %594 = vmatprep.mubr.f32.mxu0 0.0
      %595 = vmatmul.mubr.f32.gmra.mxu0 %v506
      %v596 = vpop.f32.mrf.mxu0
      %v597 = vadd.f32 %v481, %v596
      %v598 = vpop.f32.mrf.mxu0
      %599 = vmatprep.mubr.f32.mxu0 0.0
      %600 = vmatmul.mubr.f32.gmra.mxu0 %v509
      %v601 = vpop.f32.mrf.mxu0
      %v602 = vadd.f32 %v486, %v601
      %v603 = vpop.f32.mrf.mxu0
      %604 = vmatprep.mubr.f32.mxu0 0.0
      %605 = vmatmul.mubr.f32.gmra.mxu0 %v512
      %v606 = vpop.f32.mrf.mxu0
      %v607 = vadd.f32 %v491, %v606
      %v608 = vpop.f32.mrf.mxu0
      %609 = vmatprep.mubr.f32.mxu0 0.0
      %610 = vmatmul.mubr.f32.gmra.mxu0 %v515
      %v611 = vpop.f32.mrf.mxu0
      %v612 = vadd.f32 %v496, %v611
      %v613 = vpop.f32.mrf.mxu0
      %614 = vdwg.mxu0
      %s615 = sadd.s32 0, 2
      %s616 = scalar_lea.vmem %s324, %s615
      %v617 = vld [vmem:[%s616] sm:$0xff]
      %v618 = vld [vmem:[%s616 + $0x8] sm:$0xff]
      %v619 = vld [vmem:[%s616 + $0x10] sm:$0xff]
      %v620 = vld [vmem:[%s616 + $0x18] sm:$0xff]
      %v621 = vld [vmem:[%s616 + $0x20] sm:$0xff]
      %v622 = vld [vmem:[%s616 + $0x28] sm:$0xff]
      %s623 = scalar_lea.vmem %s3, 8
      %v624 = vld [vmem:[%s623] sm:$0xf]
      %v626 = vsel %vm381, %v617, 0
      %v629 = vsel %vm381, %v618, 0
      %v632 = vsel %vm381, %v619, 0
      %v635 = vsel %vm381, %v620, 0
      %v638 = vsel %vm381, %v621, 0
      %v641 = vsel %vm381, %v622, 0
      %v644 = vsel %vm400, %v624, 0
      %646 = vmatprep.subr.mxu0 0.0
      %647 = vmatpush1.msra.mxu0 0.0
      %648 = vmatprep.subr.mxu0 0.0
      %649 = vmatpush1.msra.mxu0 0.0
      %650 = vmatprep.subr.mxu0 0.0
      %651 = vmatpush1.msra.mxu0 0.0
      %652 = vmatprep.subr.mxu0 0.0
      %653 = vmatpush1.msra.mxu0 0.0
      %654 = vmatprep.subr.mxu0 0.0
      %655 = vmatpush1.msra.mxu0 0.0
      %656 = vmatprep.subr.mxu0 0.0
      %657 = vmatpush1.msra.mxu0 0.0
      %658 = vmatprep.subr.mxu0 0.0
      %659 = vmatpush1.msra.mxu0 0.0
      %660 = vmatprep.subr.mxu0 0.0
      %661 = vmatpush1.msra.mxu0 0.0
      %662 = vmatprep.subr.mxu0 0.0
      %663 = vmatpush1.msra.mxu0 0.0
      %664 = vmatprep.subr.mxu0 0.0
      %665 = vmatpush1.msra.mxu0 0.0
      %666 = vmatprep.subr.mxu0 0.0
      %667 = vmatpush1.msra.mxu0 0.0
      %668 = vmatprep.subr.mxu0 0.0
      %669 = vmatpush1.msra.mxu0 0.0
      %670 = vmatprep.subr.mxu0 0.0
      %671 = vmatpush1.msra.mxu0 0.0
      %672 = vmatprep.subr.mxu0 0.0
      %673 = vmatpush1.msra.mxu0 0.0
      %674 = vmatprep.subr.mxu0 0.0
      %675 = vmatpush1.msra.mxu0 0.0
      %676 = vmatprep.subr.mxu0 0.0
      %677 = vmatpush1.msra.mxu0 %v644
      %678 = vmatprep.subr.mxu0 0.0
      %679 = vmatpush2.msra.mxu0 0.0
      %680 = vmatprep.subr.mxu0 0.0
      %681 = vmatpush2.msra.mxu0 0.0
      %682 = vmatprep.subr.mxu0 0.0
      %683 = vmatpush2.msra.mxu0 0.0
      %684 = vmatprep.subr.mxu0 0.0
      %685 = vmatpush2.msra.mxu0 0.0
      %686 = vmatprep.subr.mxu0 0.0
      %687 = vmatpush2.msra.mxu0 0.0
      %688 = vmatprep.subr.mxu0 0.0
      %689 = vmatpush2.msra.mxu0 0.0
      %690 = vmatprep.subr.mxu0 0.0
      %691 = vmatpush2.msra.mxu0 0.0
      %692 = vmatprep.subr.mxu0 0.0
      %693 = vmatpush2.msra.mxu0 0.0
      %694 = vmatprep.subr.mxu0 0.0
      %695 = vmatpush2.msra.mxu0 0.0
      %696 = vmatprep.subr.mxu0 0.0
      %697 = vmatpush2.msra.mxu0 0.0
      %698 = vmatprep.subr.mxu0 0.0
      %699 = vmatpush2.msra.mxu0 0.0
      %700 = vmatprep.subr.mxu0 0.0
      %701 = vmatpush2.msra.mxu0 0.0
      %702 = vmatprep.subr.mxu0 0.0
      %703 = vmatpush2.msra.mxu0 0.0
      %704 = vmatprep.subr.mxu0 0.0
      %705 = vmatpush2.msra.mxu0 0.0
      %706 = vmatprep.subr.mxu0 0.0
      %707 = vmatpush2.msra.mxu0 0.0
      %708 = vmatprep.subr.mxu0 0.0
      %709 = vmatpush2.msra.mxu0 0.0
      %710 = vmatprep.mubr.f32.mxu0 0.0
      %711 = vmatmul.mubr.f32.gmra.mxu0 %v626
      %v712 = vpop.f32.mrf.mxu0
      %v713 = vadd.f32 0.0, %v712
      %v714 = vpop.f32.mrf.mxu0
      %715 = vmatprep.mubr.f32.mxu0 0.0
      %716 = vmatmul.mubr.f32.gmra.mxu0 %v629
      %v717 = vpop.f32.mrf.mxu0
      %v718 = vadd.f32 0.0, %v717
      %v719 = vpop.f32.mrf.mxu0
      %720 = vmatprep.mubr.f32.mxu0 0.0
      %721 = vmatmul.mubr.f32.gmra.mxu0 %v632
      %v722 = vpop.f32.mrf.mxu0
      %v723 = vadd.f32 0.0, %v722
      %v724 = vpop.f32.mrf.mxu0
      %725 = vmatprep.mubr.f32.mxu0 0.0
      %726 = vmatmul.mubr.f32.gmra.mxu0 %v635
      %v727 = vpop.f32.mrf.mxu0
      %v728 = vadd.f32 0.0, %v727
      %v729 = vpop.f32.mrf.mxu0
      %730 = vmatprep.mubr.f32.mxu0 0.0
      %731 = vmatmul.mubr.f32.gmra.mxu0 %v638
      %v732 = vpop.f32.mrf.mxu0
      %v733 = vadd.f32 0.0, %v732
      %v734 = vpop.f32.mrf.mxu0
      %735 = vmatprep.mubr.f32.mxu0 0.0
      %736 = vmatmul.mubr.f32.gmra.mxu0 %v641
      %v737 = vpop.f32.mrf.mxu0
      %v738 = vadd.f32 0.0, %v737
      %v739 = vpop.f32.mrf.mxu0
      %740 = vdwg.mxu0
      %v741 = vadd.f32 %v587, %v713
      %v742 = vadd.f32 %v592, %v718
      %v743 = vadd.f32 %v597, %v723
      %v744 = vadd.f32 %v602, %v728
      %v745 = vadd.f32 %v607, %v733
      %v746 = vadd.f32 %v612, %v738
      %s747 = sadd.s32 0, 8
      %s748 = scalar_lea.vmem %s324, %s747
      %v749 = vld [vmem:[%s748] sm:$0xff]
      %v750 = vld [vmem:[%s748 + $0x8] sm:$0xff]
      %v751 = vld [vmem:[%s748 + $0x10] sm:$0xff]
      %v752 = vld [vmem:[%s748 + $0x18] sm:$0xff]
      %v753 = vld [vmem:[%s748 + $0x20] sm:$0xff]
      %v754 = vld [vmem:[%s748 + $0x28] sm:$0xff]
      %s755 = scalar_lea.vmem %s3, 12
      %v756 = vld [vmem:[%s755] sm:$0xf]
      %v758 = vsel %vm381, %v749, 0
      %v761 = vsel %vm381, %v750, 0
      %v764 = vsel %vm381, %v751, 0
      %v767 = vsel %vm381, %v752, 0
      %v770 = vsel %vm381, %v753, 0
      %v773 = vsel %vm381, %v754, 0
      %v776 = vsel %vm400, %v756, 0
      %778 = vmatprep.subr.mxu0 0.0
      %779 = vmatpush1.msra.mxu0 0.0
      %780 = vmatprep.subr.mxu0 0.0
      %781 = vmatpush1.msra.mxu0 0.0
      %782 = vmatprep.subr.mxu0 0.0
      %783 = vmatpush1.msra.mxu0 0.0
      %784 = vmatprep.subr.mxu0 0.0
      %785 = vmatpush1.msra.mxu0 0.0
      %786 = vmatprep.subr.mxu0 0.0
      %787 = vmatpush1.msra.mxu0 0.0
      %788 = vmatprep.subr.mxu0 0.0
      %789 = vmatpush1.msra.mxu0 0.0
      %790 = vmatprep.subr.mxu0 0.0
      %791 = vmatpush1.msra.mxu0 0.0
      %792 = vmatprep.subr.mxu0 0.0
      %793 = vmatpush1.msra.mxu0 0.0
      %794 = vmatprep.subr.mxu0 0.0
      %795 = vmatpush1.msra.mxu0 0.0
      %796 = vmatprep.subr.mxu0 0.0
      %797 = vmatpush1.msra.mxu0 0.0
      %798 = vmatprep.subr.mxu0 0.0
      %799 = vmatpush1.msra.mxu0 0.0
      %800 = vmatprep.subr.mxu0 0.0
      %801 = vmatpush1.msra.mxu0 0.0
      %802 = vmatprep.subr.mxu0 0.0
      %803 = vmatpush1.msra.mxu0 0.0
      %804 = vmatprep.subr.mxu0 0.0
      %805 = vmatpush1.msra.mxu0 0.0
      %806 = vmatprep.subr.mxu0 0.0
      %807 = vmatpush1.msra.mxu0 0.0
      %808 = vmatprep.subr.mxu0 0.0
      %809 = vmatpush1.msra.mxu0 %v776
      %810 = vmatprep.subr.mxu0 0.0
      %811 = vmatpush2.msra.mxu0 0.0
      %812 = vmatprep.subr.mxu0 0.0
      %813 = vmatpush2.msra.mxu0 0.0
      %814 = vmatprep.subr.mxu0 0.0
      %815 = vmatpush2.msra.mxu0 0.0
      %816 = vmatprep.subr.mxu0 0.0
      %817 = vmatpush2.msra.mxu0 0.0
      %818 = vmatprep.subr.mxu0 0.0
      %819 = vmatpush2.msra.mxu0 0.0
      %820 = vmatprep.subr.mxu0 0.0
      %821 = vmatpush2.msra.mxu0 0.0
      %822 = vmatprep.subr.mxu0 0.0
      %823 = vmatpush2.msra.mxu0 0.0
      %824 = vmatprep.subr.mxu0 0.0
      %825 = vmatpush2.msra.mxu0 0.0
      %826 = vmatprep.subr.mxu0 0.0
      %827 = vmatpush2.msra.mxu0 0.0
      %828 = vmatprep.subr.mxu0 0.0
      %829 = vmatpush2.msra.mxu0 0.0
      %830 = vmatprep.subr.mxu0 0.0
      %831 = vmatpush2.msra.mxu0 0.0
      %832 = vmatprep.subr.mxu0 0.0
      %833 = vmatpush2.msra.mxu0 0.0
      %834 = vmatprep.subr.mxu0 0.0
      %835 = vmatpush2.msra.mxu0 0.0
      %836 = vmatprep.subr.mxu0 0.0
      %837 = vmatpush2.msra.mxu0 0.0
      %838 = vmatprep.subr.mxu0 0.0
      %839 = vmatpush2.msra.mxu0 0.0
      %840 = vmatprep.subr.mxu0 0.0
      %841 = vmatpush2.msra.mxu0 0.0
      %842 = vmatprep.mubr.f32.mxu0 0.0
      %843 = vmatmul.mubr.f32.gmra.mxu0 %v758
      %v844 = vpop.f32.mrf.mxu0
      %v845 = vadd.f32 0.0, %v844
      %v846 = vpop.f32.mrf.mxu0
      %847 = vmatprep.mubr.f32.mxu0 0.0
      %848 = vmatmul.mubr.f32.gmra.mxu0 %v761
      %v849 = vpop.f32.mrf.mxu0
      %v850 = vadd.f32 0.0, %v849
      %v851 = vpop.f32.mrf.mxu0
      %852 = vmatprep.mubr.f32.mxu0 0.0
      %853 = vmatmul.mubr.f32.gmra.mxu0 %v764
      %v854 = vpop.f32.mrf.mxu0
      %v855 = vadd.f32 0.0, %v854
      %v856 = vpop.f32.mrf.mxu0
      %857 = vmatprep.mubr.f32.mxu0 0.0
      %858 = vmatmul.mubr.f32.gmra.mxu0 %v767
      %v859 = vpop.f32.mrf.mxu0
      %v860 = vadd.f32 0.0, %v859
      %v861 = vpop.f32.mrf.mxu0
      %862 = vmatprep.mubr.f32.mxu0 0.0
      %863 = vmatmul.mubr.f32.gmra.mxu0 %v770
      %v864 = vpop.f32.mrf.mxu0
      %v865 = vadd.f32 0.0, %v864
      %v866 = vpop.f32.mrf.mxu0
      %867 = vmatprep.mubr.f32.mxu0 0.0
      %868 = vmatmul.mubr.f32.gmra.mxu0 %v773
      %v869 = vpop.f32.mrf.mxu0
      %v870 = vadd.f32 0.0, %v869
      %v871 = vpop.f32.mrf.mxu0
      %872 = vdwg.mxu0
      %v873 = vadd.f32 %v741, %v845
      %v874 = vadd.f32 %v742, %v850
      %v875 = vadd.f32 %v743, %v855
      %v876 = vadd.f32 %v744, %v860
      %v877 = vadd.f32 %v745, %v865
      %v878 = vadd.f32 %v746, %v870
      %s879 = sadd.s32 0, 9
      %s880 = scalar_lea.vmem %s324, %s879
      %v881 = vld [vmem:[%s880] sm:$0xff]
      %v882 = vld [vmem:[%s880 + $0x8] sm:$0xff]
      %v883 = vld [vmem:[%s880 + $0x10] sm:$0xff]
      %v884 = vld [vmem:[%s880 + $0x18] sm:$0xff]
      %v885 = vld [vmem:[%s880 + $0x20] sm:$0xff]
      %v886 = vld [vmem:[%s880 + $0x28] sm:$0xff]
      %s887 = scalar_lea.vmem %s3, 16
      %v888 = vld [vmem:[%s887] sm:$0xf]
      %v890 = vsel %vm381, %v881, 0
      %v893 = vsel %vm381, %v882, 0
      %v896 = vsel %vm381, %v883, 0
      %v899 = vsel %vm381, %v884, 0
      %v902 = vsel %vm381, %v885, 0
      %v905 = vsel %vm381, %v886, 0
      %v908 = vsel %vm400, %v888, 0
      %910 = vmatprep.subr.mxu0 0.0
      %911 = vmatpush1.msra.mxu0 0.0
      %912 = vmatprep.subr.mxu0 0.0
      %913 = vmatpush1.msra.mxu0 0.0
      %914 = vmatprep.subr.mxu0 0.0
      %915 = vmatpush1.msra.mxu0 0.0
      %916 = vmatprep.subr.mxu0 0.0
      %917 = vmatpush1.msra.mxu0 0.0
      %918 = vmatprep.subr.mxu0 0.0
      %919 = vmatpush1.msra.mxu0 0.0
      %920 = vmatprep.subr.mxu0 0.0
      %921 = vmatpush1.msra.mxu0 0.0
      %922 = vmatprep.subr.mxu0 0.0
      %923 = vmatpush1.msra.mxu0 0.0
      %924 = vmatprep.subr.mxu0 0.0
      %925 = vmatpush1.msra.mxu0 0.0
      %926 = vmatprep.subr.mxu0 0.0
      %927 = vmatpush1.msra.mxu0 0.0
      %928 = vmatprep.subr.mxu0 0.0
      %929 = vmatpush1.msra.mxu0 0.0
      %930 = vmatprep.subr.mxu0 0.0
      %931 = vmatpush1.msra.mxu0 0.0
      %932 = vmatprep.subr.mxu0 0.0
      %933 = vmatpush1.msra.mxu0 0.0
      %934 = vmatprep.subr.mxu0 0.0
      %935 = vmatpush1.msra.mxu0 0.0
      %936 = vmatprep.subr.mxu0 0.0
      %937 = vmatpush1.msra.mxu0 0.0
      %938 = vmatprep.subr.mxu0 0.0
      %939 = vmatpush1.msra.mxu0 0.0
      %940 = vmatprep.subr.mxu0 0.0
      %941 = vmatpush1.msra.mxu0 %v908
      %942 = vmatprep.subr.mxu0 0.0
      %943 = vmatpush2.msra.mxu0 0.0
      %944 = vmatprep.subr.mxu0 0.0
      %945 = vmatpush2.msra.mxu0 0.0
      %946 = vmatprep.subr.mxu0 0.0
      %947 = vmatpush2.msra.mxu0 0.0
      %948 = vmatprep.subr.mxu0 0.0
      %949 = vmatpush2.msra.mxu0 0.0
      %950 = vmatprep.subr.mxu0 0.0
      %951 = vmatpush2.msra.mxu0 0.0
      %952 = vmatprep.subr.mxu0 0.0
      %953 = vmatpush2.msra.mxu0 0.0
      %954 = vmatprep.subr.mxu0 0.0
      %955 = vmatpush2.msra.mxu0 0.0
      %956 = vmatprep.subr.mxu0 0.0
      %957 = vmatpush2.msra.mxu0 0.0
      %958 = vmatprep.subr.mxu0 0.0
      %959 = vmatpush2.msra.mxu0 0.0
      %960 = vmatprep.subr.mxu0 0.0
      %961 = vmatpush2.msra.mxu0 0.0
      %962 = vmatprep.subr.mxu0 0.0
      %963 = vmatpush2.msra.mxu0 0.0
      %964 = vmatprep.subr.mxu0 0.0
      %965 = vmatpush2.msra.mxu0 0.0
      %966 = vmatprep.subr.mxu0 0.0
      %967 = vmatpush2.msra.mxu0 0.0
      %968 = vmatprep.subr.mxu0 0.0
      %969 = vmatpush2.msra.mxu0 0.0
      %970 = vmatprep.subr.mxu0 0.0
      %971 = vmatpush2.msra.mxu0 0.0
      %972 = vmatprep.subr.mxu0 0.0
      %973 = vmatpush2.msra.mxu0 0.0
      %974 = vmatprep.mubr.f32.mxu0 0.0
      %975 = vmatmul.mubr.f32.gmra.mxu0 %v890
      %v976 = vpop.f32.mrf.mxu0
      %v977 = vadd.f32 0.0, %v976
      %v978 = vpop.f32.mrf.mxu0
      %979 = vmatprep.mubr.f32.mxu0 0.0
      %980 = vmatmul.mubr.f32.gmra.mxu0 %v893
      %v981 = vpop.f32.mrf.mxu0
      %v982 = vadd.f32 0.0, %v981
      %v983 = vpop.f32.mrf.mxu0
      %984 = vmatprep.mubr.f32.mxu0 0.0
      %985 = vmatmul.mubr.f32.gmra.mxu0 %v896
      %v986 = vpop.f32.mrf.mxu0
      %v987 = vadd.f32 0.0, %v986
      %v988 = vpop.f32.mrf.mxu0
      %989 = vmatprep.mubr.f32.mxu0 0.0
      %990 = vmatmul.mubr.f32.gmra.mxu0 %v899
      %v991 = vpop.f32.mrf.mxu0
      %v992 = vadd.f32 0.0, %v991
      %v993 = vpop.f32.mrf.mxu0
      %994 = vmatprep.mubr.f32.mxu0 0.0
      %995 = vmatmul.mubr.f32.gmra.mxu0 %v902
      %v996 = vpop.f32.mrf.mxu0
      %v997 = vadd.f32 0.0, %v996
      %v998 = vpop.f32.mrf.mxu0
      %999 = vmatprep.mubr.f32.mxu0 0.0
      %1000 = vmatmul.mubr.f32.gmra.mxu0 %v905
      %v1001 = vpop.f32.mrf.mxu0
      %v1002 = vadd.f32 0.0, %v1001
      %v1003 = vpop.f32.mrf.mxu0
      %1004 = vdwg.mxu0
      %v1005 = vadd.f32 %v873, %v977
      %v1006 = vadd.f32 %v874, %v982
      %v1007 = vadd.f32 %v875, %v987
      %v1008 = vadd.f32 %v876, %v992
      %v1009 = vadd.f32 %v877, %v997
      %v1010 = vadd.f32 %v878, %v1002
      %s1011 = sadd.s32 0, 10
      %s1012 = scalar_lea.vmem %s324, %s1011
      %v1013 = vld [vmem:[%s1012] sm:$0xff]
      %v1014 = vld [vmem:[%s1012 + $0x8] sm:$0xff]
      %v1015 = vld [vmem:[%s1012 + $0x10] sm:$0xff]
      %v1016 = vld [vmem:[%s1012 + $0x18] sm:$0xff]
      %v1017 = vld [vmem:[%s1012 + $0x20] sm:$0xff]
      %v1018 = vld [vmem:[%s1012 + $0x28] sm:$0xff]
      %s1019 = scalar_lea.vmem %s3, 20
      %v1020 = vld [vmem:[%s1019] sm:$0xf]
      %v1022 = vsel %vm381, %v1013, 0
      %v1025 = vsel %vm381, %v1014, 0
      %v1028 = vsel %vm381, %v1015, 0
      %v1031 = vsel %vm381, %v1016, 0
      %v1034 = vsel %vm381, %v1017, 0
      %v1037 = vsel %vm381, %v1018, 0
      %v1040 = vsel %vm400, %v1020, 0
      %1042 = vmatprep.subr.mxu0 0.0
      %1043 = vmatpush1.msra.mxu0 0.0
      %1044 = vmatprep.subr.mxu0 0.0
      %1045 = vmatpush1.msra.mxu0 0.0
      %1046 = vmatprep.subr.mxu0 0.0
      %1047 = vmatpush1.msra.mxu0 0.0
      %1048 = vmatprep.subr.mxu0 0.0
      %1049 = vmatpush1.msra.mxu0 0.0
      %1050 = vmatprep.subr.mxu0 0.0
      %1051 = vmatpush1.msra.mxu0 0.0
      %1052 = vmatprep.subr.mxu0 0.0
      %1053 = vmatpush1.msra.mxu0 0.0
      %1054 = vmatprep.subr.mxu0 0.0
      %1055 = vmatpush1.msra.mxu0 0.0
      %1056 = vmatprep.subr.mxu0 0.0
      %1057 = vmatpush1.msra.mxu0 0.0
      %1058 = vmatprep.subr.mxu0 0.0
      %1059 = vmatpush1.msra.mxu0 0.0
      %1060 = vmatprep.subr.mxu0 0.0
      %1061 = vmatpush1.msra.mxu0 0.0
      %1062 = vmatprep.subr.mxu0 0.0
      %1063 = vmatpush1.msra.mxu0 0.0
      %1064 = vmatprep.subr.mxu0 0.0
      %1065 = vmatpush1.msra.mxu0 0.0
      %1066 = vmatprep.subr.mxu0 0.0
      %1067 = vmatpush1.msra.mxu0 0.0
      %1068 = vmatprep.subr.mxu0 0.0
      %1069 = vmatpush1.msra.mxu0 0.0
      %1070 = vmatprep.subr.mxu0 0.0
      %1071 = vmatpush1.msra.mxu0 0.0
      %1072 = vmatprep.subr.mxu0 0.0
      %1073 = vmatpush1.msra.mxu0 %v1040
      %1074 = vmatprep.subr.mxu0 0.0
      %1075 = vmatpush2.msra.mxu0 0.0
      %1076 = vmatprep.subr.mxu0 0.0
      %1077 = vmatpush2.msra.mxu0 0.0
      %1078 = vmatprep.subr.mxu0 0.0
      %1079 = vmatpush2.msra.mxu0 0.0
      %1080 = vmatprep.subr.mxu0 0.0
      %1081 = vmatpush2.msra.mxu0 0.0
      %1082 = vmatprep.subr.mxu0 0.0
      %1083 = vmatpush2.msra.mxu0 0.0
      %1084 = vmatprep.subr.mxu0 0.0
      %1085 = vmatpush2.msra.mxu0 0.0
      %1086 = vmatprep.subr.mxu0 0.0
      %1087 = vmatpush2.msra.mxu0 0.0
      %1088 = vmatprep.subr.mxu0 0.0
      %1089 = vmatpush2.msra.mxu0 0.0
      %1090 = vmatprep.subr.mxu0 0.0
      %1091 = vmatpush2.msra.mxu0 0.0
      %1092 = vmatprep.subr.mxu0 0.0
      %1093 = vmatpush2.msra.mxu0 0.0
      %1094 = vmatprep.subr.mxu0 0.0
      %1095 = vmatpush2.msra.mxu0 0.0
      %1096 = vmatprep.subr.mxu0 0.0
      %1097 = vmatpush2.msra.mxu0 0.0
      %1098 = vmatprep.subr.mxu0 0.0
      %1099 = vmatpush2.msra.mxu0 0.0
      %1100 = vmatprep.subr.mxu0 0.0
      %1101 = vmatpush2.msra.mxu0 0.0
      %1102 = vmatprep.subr.mxu0 0.0
      %1103 = vmatpush2.msra.mxu0 0.0
      %1104 = vmatprep.subr.mxu0 0.0
      %1105 = vmatpush2.msra.mxu0 0.0
      %1106 = vmatprep.mubr.f32.mxu0 0.0
      %1107 = vmatmul.mubr.f32.gmra.mxu0 %v1022
      %v1108 = vpop.f32.mrf.mxu0
      %v1109 = vadd.f32 0.0, %v1108
      %v1110 = vpop.f32.mrf.mxu0
      %1111 = vmatprep.mubr.f32.mxu0 0.0
      %1112 = vmatmul.mubr.f32.gmra.mxu0 %v1025
      %v1113 = vpop.f32.mrf.mxu0
      %v1114 = vadd.f32 0.0, %v1113
      %v1115 = vpop.f32.mrf.mxu0
      %1116 = vmatprep.mubr.f32.mxu0 0.0
      %1117 = vmatmul.mubr.f32.gmra.mxu0 %v1028
      %v1118 = vpop.f32.mrf.mxu0
      %v1119 = vadd.f32 0.0, %v1118
      %v1120 = vpop.f32.mrf.mxu0
      %1121 = vmatprep.mubr.f32.mxu0 0.0
      %1122 = vmatmul.mubr.f32.gmra.mxu0 %v1031
      %v1123 = vpop.f32.mrf.mxu0
      %v1124 = vadd.f32 0.0, %v1123
      %v1125 = vpop.f32.mrf.mxu0
      %1126 = vmatprep.mubr.f32.mxu0 0.0
      %1127 = vmatmul.mubr.f32.gmra.mxu0 %v1034
      %v1128 = vpop.f32.mrf.mxu0
      %v1129 = vadd.f32 0.0, %v1128
      %v1130 = vpop.f32.mrf.mxu0
      %1131 = vmatprep.mubr.f32.mxu0 0.0
      %1132 = vmatmul.mubr.f32.gmra.mxu0 %v1037
      %v1133 = vpop.f32.mrf.mxu0
      %v1134 = vadd.f32 0.0, %v1133
      %v1135 = vpop.f32.mrf.mxu0
      %1136 = vdwg.mxu0
      %v1137 = vadd.f32 %v1005, %v1109
      %v1138 = vadd.f32 %v1006, %v1114
      %v1139 = vadd.f32 %v1007, %v1119
      %v1140 = vadd.f32 %v1008, %v1124
      %v1141 = vadd.f32 %v1009, %v1129
      %v1142 = vadd.f32 %v1010, %v1134
      %s1143 = sadd.s32 0, 16
      %s1144 = scalar_lea.vmem %s324, %s1143
      %v1145 = vld [vmem:[%s1144] sm:$0xff]
      %v1146 = vld [vmem:[%s1144 + $0x8] sm:$0xff]
      %v1147 = vld [vmem:[%s1144 + $0x10] sm:$0xff]
      %v1148 = vld [vmem:[%s1144 + $0x18] sm:$0xff]
      %v1149 = vld [vmem:[%s1144 + $0x20] sm:$0xff]
      %v1150 = vld [vmem:[%s1144 + $0x28] sm:$0xff]
      %s1151 = scalar_lea.vmem %s3, 24
      %v1152 = vld [vmem:[%s1151] sm:$0xf]
      %v1154 = vsel %vm381, %v1145, 0
      %v1157 = vsel %vm381, %v1146, 0
      %v1160 = vsel %vm381, %v1147, 0
      %v1163 = vsel %vm381, %v1148, 0
      %v1166 = vsel %vm381, %v1149, 0
      %v1169 = vsel %vm381, %v1150, 0
      %v1172 = vsel %vm400, %v1152, 0
      %1174 = vmatprep.subr.mxu0 0.0
      %1175 = vmatpush1.msra.mxu0 0.0
      %1176 = vmatprep.subr.mxu0 0.0
      %1177 = vmatpush1.msra.mxu0 0.0
      %1178 = vmatprep.subr.mxu0 0.0
      %1179 = vmatpush1.msra.mxu0 0.0
      %1180 = vmatprep.subr.mxu0 0.0
      %1181 = vmatpush1.msra.mxu0 0.0
      %1182 = vmatprep.subr.mxu0 0.0
      %1183 = vmatpush1.msra.mxu0 0.0
      %1184 = vmatprep.subr.mxu0 0.0
      %1185 = vmatpush1.msra.mxu0 0.0
      %1186 = vmatprep.subr.mxu0 0.0
      %1187 = vmatpush1.msra.mxu0 0.0
      %1188 = vmatprep.subr.mxu0 0.0
      %1189 = vmatpush1.msra.mxu0 0.0
      %1190 = vmatprep.subr.mxu0 0.0
      %1191 = vmatpush1.msra.mxu0 0.0
      %1192 = vmatprep.subr.mxu0 0.0
      %1193 = vmatpush1.msra.mxu0 0.0
      %1194 = vmatprep.subr.mxu0 0.0
      %1195 = vmatpush1.msra.mxu0 0.0
      %1196 = vmatprep.subr.mxu0 0.0
      %1197 = vmatpush1.msra.mxu0 0.0
      %1198 = vmatprep.subr.mxu0 0.0
      %1199 = vmatpush1.msra.mxu0 0.0
      %1200 = vmatprep.subr.mxu0 0.0
      %1201 = vmatpush1.msra.mxu0 0.0
      %1202 = vmatprep.subr.mxu0 0.0
      %1203 = vmatpush1.msra.mxu0 0.0
      %1204 = vmatprep.subr.mxu0 0.0
      %1205 = vmatpush1.msra.mxu0 %v1172
      %1206 = vmatprep.subr.mxu0 0.0
      %1207 = vmatpush2.msra.mxu0 0.0
      %1208 = vmatprep.subr.mxu0 0.0
      %1209 = vmatpush2.msra.mxu0 0.0
      %1210 = vmatprep.subr.mxu0 0.0
      %1211 = vmatpush2.msra.mxu0 0.0
      %1212 = vmatprep.subr.mxu0 0.0
      %1213 = vmatpush2.msra.mxu0 0.0
      %1214 = vmatprep.subr.mxu0 0.0
      %1215 = vmatpush2.msra.mxu0 0.0
      %1216 = vmatprep.subr.mxu0 0.0
      %1217 = vmatpush2.msra.mxu0 0.0
      %1218 = vmatprep.subr.mxu0 0.0
      %1219 = vmatpush2.msra.mxu0 0.0
      %1220 = vmatprep.subr.mxu0 0.0
      %1221 = vmatpush2.msra.mxu0 0.0
      %1222 = vmatprep.subr.mxu0 0.0
      %1223 = vmatpush2.msra.mxu0 0.0
      %1224 = vmatprep.subr.mxu0 0.0
      %1225 = vmatpush2.msra.mxu0 0.0
      %1226 = vmatprep.subr.mxu0 0.0
      %1227 = vmatpush2.msra.mxu0 0.0
      %1228 = vmatprep.subr.mxu0 0.0
      %1229 = vmatpush2.msra.mxu0 0.0
      %1230 = vmatprep.subr.mxu0 0.0
      %1231 = vmatpush2.msra.mxu0 0.0
      %1232 = vmatprep.subr.mxu0 0.0
      %1233 = vmatpush2.msra.mxu0 0.0
      %1234 = vmatprep.subr.mxu0 0.0
      %1235 = vmatpush2.msra.mxu0 0.0
      %1236 = vmatprep.subr.mxu0 0.0
      %1237 = vmatpush2.msra.mxu0 0.0
      %1238 = vmatprep.mubr.f32.mxu0 0.0
      %1239 = vmatmul.mubr.f32.gmra.mxu0 %v1154
      %v1240 = vpop.f32.mrf.mxu0
      %v1241 = vadd.f32 0.0, %v1240
      %v1242 = vpop.f32.mrf.mxu0
      %1243 = vmatprep.mubr.f32.mxu0 0.0
      %1244 = vmatmul.mubr.f32.gmra.mxu0 %v1157
      %v1245 = vpop.f32.mrf.mxu0
      %v1246 = vadd.f32 0.0, %v1245
      %v1247 = vpop.f32.mrf.mxu0
      %1248 = vmatprep.mubr.f32.mxu0 0.0
      %1249 = vmatmul.mubr.f32.gmra.mxu0 %v1160
      %v1250 = vpop.f32.mrf.mxu0
      %v1251 = vadd.f32 0.0, %v1250
      %v1252 = vpop.f32.mrf.mxu0
      %1253 = vmatprep.mubr.f32.mxu0 0.0
      %1254 = vmatmul.mubr.f32.gmra.mxu0 %v1163
      %v1255 = vpop.f32.mrf.mxu0
      %v1256 = vadd.f32 0.0, %v1255
      %v1257 = vpop.f32.mrf.mxu0
      %1258 = vmatprep.mubr.f32.mxu0 0.0
      %1259 = vmatmul.mubr.f32.gmra.mxu0 %v1166
      %v1260 = vpop.f32.mrf.mxu0
      %v1261 = vadd.f32 0.0, %v1260
      %v1262 = vpop.f32.mrf.mxu0
      %1263 = vmatprep.mubr.f32.mxu0 0.0
      %1264 = vmatmul.mubr.f32.gmra.mxu0 %v1169
      %v1265 = vpop.f32.mrf.mxu0
      %v1266 = vadd.f32 0.0, %v1265
      %v1267 = vpop.f32.mrf.mxu0
      %1268 = vdwg.mxu0
      %v1269 = vadd.f32 %v1137, %v1241
      %v1270 = vadd.f32 %v1138, %v1246
      %v1271 = vadd.f32 %v1139, %v1251
      %v1272 = vadd.f32 %v1140, %v1256
      %v1273 = vadd.f32 %v1141, %v1261
      %v1274 = vadd.f32 %v1142, %v1266
      %s1275 = sadd.s32 0, 17
      %s1276 = scalar_lea.vmem %s324, %s1275
      %v1277 = vld [vmem:[%s1276] sm:$0xff]
      %v1278 = vld [vmem:[%s1276 + $0x8] sm:$0xff]
      %v1279 = vld [vmem:[%s1276 + $0x10] sm:$0xff]
      %v1280 = vld [vmem:[%s1276 + $0x18] sm:$0xff]
      %v1281 = vld [vmem:[%s1276 + $0x20] sm:$0xff]
      %v1282 = vld [vmem:[%s1276 + $0x28] sm:$0xff]
      %s1283 = scalar_lea.vmem %s3, 28
      %v1284 = vld [vmem:[%s1283] sm:$0xf]
      %v1286 = vsel %vm381, %v1277, 0
      %v1289 = vsel %vm381, %v1278, 0
      %v1292 = vsel %vm381, %v1279, 0
      %v1295 = vsel %vm381, %v1280, 0
      %v1298 = vsel %vm381, %v1281, 0
      %v1301 = vsel %vm381, %v1282, 0
      %v1304 = vsel %vm400, %v1284, 0
      %1306 = vmatprep.subr.mxu0 0.0
      %1307 = vmatpush1.msra.mxu0 0.0
      %1308 = vmatprep.subr.mxu0 0.0
      %1309 = vmatpush1.msra.mxu0 0.0
      %1310 = vmatprep.subr.mxu0 0.0
      %1311 = vmatpush1.msra.mxu0 0.0
      %1312 = vmatprep.subr.mxu0 0.0
      %1313 = vmatpush1.msra.mxu0 0.0
      %1314 = vmatprep.subr.mxu0 0.0
      %1315 = vmatpush1.msra.mxu0 0.0
      %1316 = vmatprep.subr.mxu0 0.0
      %1317 = vmatpush1.msra.mxu0 0.0
      %1318 = vmatprep.subr.mxu0 0.0
      %1319 = vmatpush1.msra.mxu0 0.0
      %1320 = vmatprep.subr.mxu0 0.0
      %1321 = vmatpush1.msra.mxu0 0.0
      %1322 = vmatprep.subr.mxu0 0.0
      %1323 = vmatpush1.msra.mxu0 0.0
      %1324 = vmatprep.subr.mxu0 0.0
      %1325 = vmatpush1.msra.mxu0 0.0
      %1326 = vmatprep.subr.mxu0 0.0
      %1327 = vmatpush1.msra.mxu0 0.0
      %1328 = vmatprep.subr.mxu0 0.0
      %1329 = vmatpush1.msra.mxu0 0.0
      %1330 = vmatprep.subr.mxu0 0.0
      %1331 = vmatpush1.msra.mxu0 0.0
      %1332 = vmatprep.subr.mxu0 0.0
      %1333 = vmatpush1.msra.mxu0 0.0
      %1334 = vmatprep.subr.mxu0 0.0
      %1335 = vmatpush1.msra.mxu0 0.0
      %1336 = vmatprep.subr.mxu0 0.0
      %1337 = vmatpush1.msra.mxu0 %v1304
      %1338 = vmatprep.subr.mxu0 0.0
      %1339 = vmatpush2.msra.mxu0 0.0
      %1340 = vmatprep.subr.mxu0 0.0
      %1341 = vmatpush2.msra.mxu0 0.0
      %1342 = vmatprep.subr.mxu0 0.0
      %1343 = vmatpush2.msra.mxu0 0.0
      %1344 = vmatprep.subr.mxu0 0.0
      %1345 = vmatpush2.msra.mxu0 0.0
      %1346 = vmatprep.subr.mxu0 0.0
      %1347 = vmatpush2.msra.mxu0 0.0
      %1348 = vmatprep.subr.mxu0 0.0
      %1349 = vmatpush2.msra.mxu0 0.0
      %1350 = vmatprep.subr.mxu0 0.0
      %1351 = vmatpush2.msra.mxu0 0.0
      %1352 = vmatprep.subr.mxu0 0.0
      %1353 = vmatpush2.msra.mxu0 0.0
      %1354 = vmatprep.subr.mxu0 0.0
      %1355 = vmatpush2.msra.mxu0 0.0
      %1356 = vmatprep.subr.mxu0 0.0
      %1357 = vmatpush2.msra.mxu0 0.0
      %1358 = vmatprep.subr.mxu0 0.0
      %1359 = vmatpush2.msra.mxu0 0.0
      %1360 = vmatprep.subr.mxu0 0.0
      %1361 = vmatpush2.msra.mxu0 0.0
      %1362 = vmatprep.subr.mxu0 0.0
      %1363 = vmatpush2.msra.mxu0 0.0
      %1364 = vmatprep.subr.mxu0 0.0
      %1365 = vmatpush2.msra.mxu0 0.0
      %1366 = vmatprep.subr.mxu0 0.0
      %1367 = vmatpush2.msra.mxu0 0.0
      %1368 = vmatprep.subr.mxu0 0.0
      %1369 = vmatpush2.msra.mxu0 0.0
      %1370 = vmatprep.mubr.f32.mxu0 0.0
      %1371 = vmatmul.mubr.f32.gmra.mxu0 %v1286
      %v1372 = vpop.f32.mrf.mxu0
      %v1373 = vadd.f32 0.0, %v1372
      %v1374 = vpop.f32.mrf.mxu0
      %1375 = vmatprep.mubr.f32.mxu0 0.0
      %1376 = vmatmul.mubr.f32.gmra.mxu0 %v1289
      %v1377 = vpop.f32.mrf.mxu0
      %v1378 = vadd.f32 0.0, %v1377
      %v1379 = vpop.f32.mrf.mxu0
      %1380 = vmatprep.mubr.f32.mxu0 0.0
      %1381 = vmatmul.mubr.f32.gmra.mxu0 %v1292
      %v1382 = vpop.f32.mrf.mxu0
      %v1383 = vadd.f32 0.0, %v1382
      %v1384 = vpop.f32.mrf.mxu0
      %1385 = vmatprep.mubr.f32.mxu0 0.0
      %1386 = vmatmul.mubr.f32.gmra.mxu0 %v1295
      %v1387 = vpop.f32.mrf.mxu0
      %v1388 = vadd.f32 0.0, %v1387
      %v1389 = vpop.f32.mrf.mxu0
      %1390 = vmatprep.mubr.f32.mxu0 0.0
      %1391 = vmatmul.mubr.f32.gmra.mxu0 %v1298
      %v1392 = vpop.f32.mrf.mxu0
      %v1393 = vadd.f32 0.0, %v1392
      %v1394 = vpop.f32.mrf.mxu0
      %1395 = vmatprep.mubr.f32.mxu0 0.0
      %1396 = vmatmul.mubr.f32.gmra.mxu0 %v1301
      %v1397 = vpop.f32.mrf.mxu0
      %v1398 = vadd.f32 0.0, %v1397
      %v1399 = vpop.f32.mrf.mxu0
      %1400 = vdwg.mxu0
      %v1401 = vadd.f32 %v1269, %v1373
      %v1402 = vadd.f32 %v1270, %v1378
      %v1403 = vadd.f32 %v1271, %v1383
      %v1404 = vadd.f32 %v1272, %v1388
      %v1405 = vadd.f32 %v1273, %v1393
      %v1406 = vadd.f32 %v1274, %v1398
      %s1407 = sadd.s32 0, 18
      %s1408 = scalar_lea.vmem %s324, %s1407
      %v1409 = vld [vmem:[%s1408] sm:$0xff]
      %v1410 = vld [vmem:[%s1408 + $0x8] sm:$0xff]
      %v1411 = vld [vmem:[%s1408 + $0x10] sm:$0xff]
      %v1412 = vld [vmem:[%s1408 + $0x18] sm:$0xff]
      %v1413 = vld [vmem:[%s1408 + $0x20] sm:$0xff]
      %v1414 = vld [vmem:[%s1408 + $0x28] sm:$0xff]
      %s1415 = scalar_lea.vmem %s3, 32
      %v1416 = vld [vmem:[%s1415] sm:$0xf]
      %v1418 = vsel %vm381, %v1409, 0
      %v1421 = vsel %vm381, %v1410, 0
      %v1424 = vsel %vm381, %v1411, 0
      %v1427 = vsel %vm381, %v1412, 0
      %v1430 = vsel %vm381, %v1413, 0
      %v1433 = vsel %vm381, %v1414, 0
      %v1436 = vsel %vm400, %v1416, 0
      %1438 = vmatprep.subr.mxu0 0.0
      %1439 = vmatpush1.msra.mxu0 0.0
      %1440 = vmatprep.subr.mxu0 0.0
      %1441 = vmatpush1.msra.mxu0 0.0
      %1442 = vmatprep.subr.mxu0 0.0
      %1443 = vmatpush1.msra.mxu0 0.0
      %1444 = vmatprep.subr.mxu0 0.0
      %1445 = vmatpush1.msra.mxu0 0.0
      %1446 = vmatprep.subr.mxu0 0.0
      %1447 = vmatpush1.msra.mxu0 0.0
      %1448 = vmatprep.subr.mxu0 0.0
      %1449 = vmatpush1.msra.mxu0 0.0
      %1450 = vmatprep.subr.mxu0 0.0
      %1451 = vmatpush1.msra.mxu0 0.0
      %1452 = vmatprep.subr.mxu0 0.0
      %1453 = vmatpush1.msra.mxu0 0.0
      %1454 = vmatprep.subr.mxu0 0.0
      %1455 = vmatpush1.msra.mxu0 0.0
      %1456 = vmatprep.subr.mxu0 0.0
      %1457 = vmatpush1.msra.mxu0 0.0
      %1458 = vmatprep.subr.mxu0 0.0
      %1459 = vmatpush1.msra.mxu0 0.0
      %1460 = vmatprep.subr.mxu0 0.0
      %1461 = vmatpush1.msra.mxu0 0.0
      %1462 = vmatprep.subr.mxu0 0.0
      %1463 = vmatpush1.msra.mxu0 0.0
      %1464 = vmatprep.subr.mxu0 0.0
      %1465 = vmatpush1.msra.mxu0 0.0
      %1466 = vmatprep.subr.mxu0 0.0
      %1467 = vmatpush1.msra.mxu0 0.0
      %1468 = vmatprep.subr.mxu0 0.0
      %1469 = vmatpush1.msra.mxu0 %v1436
      %1470 = vmatprep.subr.mxu0 0.0
      %1471 = vmatpush2.msra.mxu0 0.0
      %1472 = vmatprep.subr.mxu0 0.0
      %1473 = vmatpush2.msra.mxu0 0.0
      %1474 = vmatprep.subr.mxu0 0.0
      %1475 = vmatpush2.msra.mxu0 0.0
      %1476 = vmatprep.subr.mxu0 0.0
      %1477 = vmatpush2.msra.mxu0 0.0
      %1478 = vmatprep.subr.mxu0 0.0
      %1479 = vmatpush2.msra.mxu0 0.0
      %1480 = vmatprep.subr.mxu0 0.0
      %1481 = vmatpush2.msra.mxu0 0.0
      %1482 = vmatprep.subr.mxu0 0.0
      %1483 = vmatpush2.msra.mxu0 0.0
      %1484 = vmatprep.subr.mxu0 0.0
      %1485 = vmatpush2.msra.mxu0 0.0
      %1486 = vmatprep.subr.mxu0 0.0
      %1487 = vmatpush2.msra.mxu0 0.0
      %1488 = vmatprep.subr.mxu0 0.0
      %1489 = vmatpush2.msra.mxu0 0.0
      %1490 = vmatprep.subr.mxu0 0.0
      %1491 = vmatpush2.msra.mxu0 0.0
      %1492 = vmatprep.subr.mxu0 0.0
      %1493 = vmatpush2.msra.mxu0 0.0
      %1494 = vmatprep.subr.mxu0 0.0
      %1495 = vmatpush2.msra.mxu0 0.0
      %1496 = vmatprep.subr.mxu0 0.0
      %1497 = vmatpush2.msra.mxu0 0.0
      %1498 = vmatprep.subr.mxu0 0.0
      %1499 = vmatpush2.msra.mxu0 0.0
      %1500 = vmatprep.subr.mxu0 0.0
      %1501 = vmatpush2.msra.mxu0 0.0
      %1502 = vmatprep.mubr.f32.mxu0 0.0
      %1503 = vmatmul.mubr.f32.gmra.mxu0 %v1418
      %v1504 = vpop.f32.mrf.mxu0
      %v1505 = vadd.f32 0.0, %v1504
      %v1506 = vpop.f32.mrf.mxu0
      %1507 = vmatprep.mubr.f32.mxu0 0.0
      %1508 = vmatmul.mubr.f32.gmra.mxu0 %v1421
      %v1509 = vpop.f32.mrf.mxu0
      %v1510 = vadd.f32 0.0, %v1509
      %v1511 = vpop.f32.mrf.mxu0
      %1512 = vmatprep.mubr.f32.mxu0 0.0
      %1513 = vmatmul.mubr.f32.gmra.mxu0 %v1424
      %v1514 = vpop.f32.mrf.mxu0
      %v1515 = vadd.f32 0.0, %v1514
      %v1516 = vpop.f32.mrf.mxu0
      %1517 = vmatprep.mubr.f32.mxu0 0.0
      %1518 = vmatmul.mubr.f32.gmra.mxu0 %v1427
      %v1519 = vpop.f32.mrf.mxu0
      %v1520 = vadd.f32 0.0, %v1519
      %v1521 = vpop.f32.mrf.mxu0
      %1522 = vmatprep.mubr.f32.mxu0 0.0
      %1523 = vmatmul.mubr.f32.gmra.mxu0 %v1430
      %v1524 = vpop.f32.mrf.mxu0
      %v1525 = vadd.f32 0.0, %v1524
      %v1526 = vpop.f32.mrf.mxu0
      %1527 = vmatprep.mubr.f32.mxu0 0.0
      %1528 = vmatmul.mubr.f32.gmra.mxu0 %v1433
      %v1529 = vpop.f32.mrf.mxu0
      %v1530 = vadd.f32 0.0, %v1529
      %v1531 = vpop.f32.mrf.mxu0
      %1532 = vdwg.mxu0
      %v1533 = vadd.f32 %v1401, %v1505
      %v1534 = vadd.f32 %v1402, %v1510
      %v1535 = vadd.f32 %v1403, %v1515
      %v1536 = vadd.f32 %v1404, %v1520
      %v1537 = vadd.f32 %v1405, %v1525
      %v1538 = vadd.f32 %v1406, %v1530
      %v1539 = vld [vmem:[%s334] sm:$0xff]
      %v1540 = vld [vmem:[%s334 + $0x8] sm:$0xff]
      %v1541 = vld [vmem:[%s334 + $0x10] sm:$0xff]
      %v1542 = vld [vmem:[%s334 + $0x18] sm:$0xff]
      %v1543 = vld [vmem:[%s334 + $0x20] sm:$0xff]
      %v1544 = vld [vmem:[%s334 + $0x28] sm:$0xff]
      %s1545 = scalar_lea.vmem %s3, 36
      %v1546 = vld [vmem:[%s1545] sm:$0xf]
      %v1548 = vsel %vm381, %v1539, 0
      %v1551 = vsel %vm381, %v1540, 0
      %v1554 = vsel %vm381, %v1541, 0
      %v1557 = vsel %vm381, %v1542, 0
      %v1560 = vsel %vm381, %v1543, 0
      %v1563 = vsel %vm381, %v1544, 0
      %v1566 = vsel %vm400, %v1546, 0
      %1568 = vmatprep.subr.mxu0 0.0
      %1569 = vmatpush1.msra.mxu0 0.0
      %1570 = vmatprep.subr.mxu0 0.0
      %1571 = vmatpush1.msra.mxu0 0.0
      %1572 = vmatprep.subr.mxu0 0.0
      %1573 = vmatpush1.msra.mxu0 0.0
      %1574 = vmatprep.subr.mxu0 0.0
      %1575 = vmatpush1.msra.mxu0 0.0
      %1576 = vmatprep.subr.mxu0 0.0
      %1577 = vmatpush1.msra.mxu0 0.0
      %1578 = vmatprep.subr.mxu0 0.0
      %1579 = vmatpush1.msra.mxu0 0.0
      %1580 = vmatprep.subr.mxu0 0.0
      %1581 = vmatpush1.msra.mxu0 0.0
      %1582 = vmatprep.subr.mxu0 0.0
      %1583 = vmatpush1.msra.mxu0 0.0
      %1584 = vmatprep.subr.mxu0 0.0
      %1585 = vmatpush1.msra.mxu0 0.0
      %1586 = vmatprep.subr.mxu0 0.0
      %1587 = vmatpush1.msra.mxu0 0.0
      %1588 = vmatprep.subr.mxu0 0.0
      %1589 = vmatpush1.msra.mxu0 0.0
      %1590 = vmatprep.subr.mxu0 0.0
      %1591 = vmatpush1.msra.mxu0 0.0
      %1592 = vmatprep.subr.mxu0 0.0
      %1593 = vmatpush1.msra.mxu0 0.0
      %1594 = vmatprep.subr.mxu0 0.0
      %1595 = vmatpush1.msra.mxu0 0.0
      %1596 = vmatprep.subr.mxu0 0.0
      %1597 = vmatpush1.msra.mxu0 0.0
      %1598 = vmatprep.subr.mxu0 0.0
      %1599 = vmatpush1.msra.mxu0 %v1566
      %1600 = vmatprep.subr.mxu0 0.0
      %1601 = vmatpush2.msra.mxu0 0.0
      %1602 = vmatprep.subr.mxu0 0.0
      %1603 = vmatpush2.msra.mxu0 0.0
      %1604 = vmatprep.subr.mxu0 0.0
      %1605 = vmatpush2.msra.mxu0 0.0
      %1606 = vmatprep.subr.mxu0 0.0
      %1607 = vmatpush2.msra.mxu0 0.0
      %1608 = vmatprep.subr.mxu0 0.0
      %1609 = vmatpush2.msra.mxu0 0.0
      %1610 = vmatprep.subr.mxu0 0.0
      %1611 = vmatpush2.msra.mxu0 0.0
      %1612 = vmatprep.subr.mxu0 0.0
      %1613 = vmatpush2.msra.mxu0 0.0
      %1614 = vmatprep.subr.mxu0 0.0
      %1615 = vmatpush2.msra.mxu0 0.0
      %1616 = vmatprep.subr.mxu0 0.0
      %1617 = vmatpush2.msra.mxu0 0.0
      %1618 = vmatprep.subr.mxu0 0.0
      %1619 = vmatpush2.msra.mxu0 0.0
      %1620 = vmatprep.subr.mxu0 0.0
      %1621 = vmatpush2.msra.mxu0 0.0
      %1622 = vmatprep.subr.mxu0 0.0
      %1623 = vmatpush2.msra.mxu0 0.0
      %1624 = vmatprep.subr.mxu0 0.0
      %1625 = vmatpush2.msra.mxu0 0.0
      %1626 = vmatprep.subr.mxu0 0.0
      %1627 = vmatpush2.msra.mxu0 0.0
      %1628 = vmatprep.subr.mxu0 0.0
      %1629 = vmatpush2.msra.mxu0 0.0
      %1630 = vmatprep.subr.mxu0 0.0
      %1631 = vmatpush2.msra.mxu0 0.0
      %1632 = vmatprep.mubr.f32.mxu0 0.0
      %1633 = vmatmul.mubr.f32.gmra.mxu0 %v1548
      %v1634 = vpop.f32.mrf.mxu0
      %v1635 = vadd.f32 0.0, %v1634
      %v1636 = vpop.f32.mrf.mxu0
      %1637 = vmatprep.mubr.f32.mxu0 0.0
      %1638 = vmatmul.mubr.f32.gmra.mxu0 %v1551
      %v1639 = vpop.f32.mrf.mxu0
      %v1640 = vadd.f32 0.0, %v1639
      %v1641 = vpop.f32.mrf.mxu0
      %1642 = vmatprep.mubr.f32.mxu0 0.0
      %1643 = vmatmul.mubr.f32.gmra.mxu0 %v1554
      %v1644 = vpop.f32.mrf.mxu0
      %v1645 = vadd.f32 0.0, %v1644
      %v1646 = vpop.f32.mrf.mxu0
      %1647 = vmatprep.mubr.f32.mxu0 0.0
      %1648 = vmatmul.mubr.f32.gmra.mxu0 %v1557
      %v1649 = vpop.f32.mrf.mxu0
      %v1650 = vadd.f32 0.0, %v1649
      %v1651 = vpop.f32.mrf.mxu0
      %1652 = vmatprep.mubr.f32.mxu0 0.0
      %1653 = vmatmul.mubr.f32.gmra.mxu0 %v1560
      %v1654 = vpop.f32.mrf.mxu0
      %v1655 = vadd.f32 0.0, %v1654
      %v1656 = vpop.f32.mrf.mxu0
      %1657 = vmatprep.mubr.f32.mxu0 0.0
      %1658 = vmatmul.mubr.f32.gmra.mxu0 %v1563
      %v1659 = vpop.f32.mrf.mxu0
      %v1660 = vadd.f32 0.0, %v1659
      %v1661 = vpop.f32.mrf.mxu0
      %1662 = vdwg.mxu0
      %v1663 = vadd.f32 %v1533, %v1635
      %v1664 = vadd.f32 %v1534, %v1640
      %v1665 = vadd.f32 %v1535, %v1645
      %v1666 = vadd.f32 %v1536, %v1650
      %v1667 = vadd.f32 %v1537, %v1655
      %v1668 = vadd.f32 %v1538, %v1660
      %s1669 = scalar_lea.vmem %s334, %s371
      %v1670 = vld [vmem:[%s1669] sm:$0xff]
      %v1671 = vld [vmem:[%s1669 + $0x8] sm:$0xff]
      %v1672 = vld [vmem:[%s1669 + $0x10] sm:$0xff]
      %v1673 = vld [vmem:[%s1669 + $0x18] sm:$0xff]
      %v1674 = vld [vmem:[%s1669 + $0x20] sm:$0xff]
      %v1675 = vld [vmem:[%s1669 + $0x28] sm:$0xff]
      %s1676 = scalar_lea.vmem %s3, 40
      %v1677 = vld [vmem:[%s1676] sm:$0xf]
      %v1679 = vsel %vm381, %v1670, 0
      %v1682 = vsel %vm381, %v1671, 0
      %v1685 = vsel %vm381, %v1672, 0
      %v1688 = vsel %vm381, %v1673, 0
      %v1691 = vsel %vm381, %v1674, 0
      %v1694 = vsel %vm381, %v1675, 0
      %v1697 = vsel %vm400, %v1677, 0
      %1699 = vmatprep.subr.mxu0 0.0
      %1700 = vmatpush1.msra.mxu0 0.0
      %1701 = vmatprep.subr.mxu0 0.0
      %1702 = vmatpush1.msra.mxu0 0.0
      %1703 = vmatprep.subr.mxu0 0.0
      %1704 = vmatpush1.msra.mxu0 0.0
      %1705 = vmatprep.subr.mxu0 0.0
      %1706 = vmatpush1.msra.mxu0 0.0
      %1707 = vmatprep.subr.mxu0 0.0
      %1708 = vmatpush1.msra.mxu0 0.0
      %1709 = vmatprep.subr.mxu0 0.0
      %1710 = vmatpush1.msra.mxu0 0.0
      %1711 = vmatprep.subr.mxu0 0.0
      %1712 = vmatpush1.msra.mxu0 0.0
      %1713 = vmatprep.subr.mxu0 0.0
      %1714 = vmatpush1.msra.mxu0 0.0
      %1715 = vmatprep.subr.mxu0 0.0
      %1716 = vmatpush1.msra.mxu0 0.0
      %1717 = vmatprep.subr.mxu0 0.0
      %1718 = vmatpush1.msra.mxu0 0.0
      %1719 = vmatprep.subr.mxu0 0.0
      %1720 = vmatpush1.msra.mxu0 0.0
      %1721 = vmatprep.subr.mxu0 0.0
      %1722 = vmatpush1.msra.mxu0 0.0
      %1723 = vmatprep.subr.mxu0 0.0
      %1724 = vmatpush1.msra.mxu0 0.0
      %1725 = vmatprep.subr.mxu0 0.0
      %1726 = vmatpush1.msra.mxu0 0.0
      %1727 = vmatprep.subr.mxu0 0.0
      %1728 = vmatpush1.msra.mxu0 0.0
      %1729 = vmatprep.subr.mxu0 0.0
      %1730 = vmatpush1.msra.mxu0 %v1697
      %1731 = vmatprep.subr.mxu0 0.0
      %1732 = vmatpush2.msra.mxu0 0.0
      %1733 = vmatprep.subr.mxu0 0.0
      %1734 = vmatpush2.msra.mxu0 0.0
      %1735 = vmatprep.subr.mxu0 0.0
      %1736 = vmatpush2.msra.mxu0 0.0
      %1737 = vmatprep.subr.mxu0 0.0
      %1738 = vmatpush2.msra.mxu0 0.0
      %1739 = vmatprep.subr.mxu0 0.0
      %1740 = vmatpush2.msra.mxu0 0.0
      %1741 = vmatprep.subr.mxu0 0.0
      %1742 = vmatpush2.msra.mxu0 0.0
      %1743 = vmatprep.subr.mxu0 0.0
      %1744 = vmatpush2.msra.mxu0 0.0
      %1745 = vmatprep.subr.mxu0 0.0
      %1746 = vmatpush2.msra.mxu0 0.0
      %1747 = vmatprep.subr.mxu0 0.0
      %1748 = vmatpush2.msra.mxu0 0.0
      %1749 = vmatprep.subr.mxu0 0.0
      %1750 = vmatpush2.msra.mxu0 0.0
      %1751 = vmatprep.subr.mxu0 0.0
      %1752 = vmatpush2.msra.mxu0 0.0
      %1753 = vmatprep.subr.mxu0 0.0
      %1754 = vmatpush2.msra.mxu0 0.0
      %1755 = vmatprep.subr.mxu0 0.0
      %1756 = vmatpush2.msra.mxu0 0.0
      %1757 = vmatprep.subr.mxu0 0.0
      %1758 = vmatpush2.msra.mxu0 0.0
      %1759 = vmatprep.subr.mxu0 0.0
      %1760 = vmatpush2.msra.mxu0 0.0
      %1761 = vmatprep.subr.mxu0 0.0
      %1762 = vmatpush2.msra.mxu0 0.0
      %1763 = vmatprep.mubr.f32.mxu0 0.0
      %1764 = vmatmul.mubr.f32.gmra.mxu0 %v1679
      %v1765 = vpop.f32.mrf.mxu0
      %v1766 = vadd.f32 0.0, %v1765
      %v1767 = vpop.f32.mrf.mxu0
      %1768 = vmatprep.mubr.f32.mxu0 0.0
      %1769 = vmatmul.mubr.f32.gmra.mxu0 %v1682
      %v1770 = vpop.f32.mrf.mxu0
      %v1771 = vadd.f32 0.0, %v1770
      %v1772 = vpop.f32.mrf.mxu0
      %1773 = vmatprep.mubr.f32.mxu0 0.0
      %1774 = vmatmul.mubr.f32.gmra.mxu0 %v1685
      %v1775 = vpop.f32.mrf.mxu0
      %v1776 = vadd.f32 0.0, %v1775
      %v1777 = vpop.f32.mrf.mxu0
      %1778 = vmatprep.mubr.f32.mxu0 0.0
      %1779 = vmatmul.mubr.f32.gmra.mxu0 %v1688
      %v1780 = vpop.f32.mrf.mxu0
      %v1781 = vadd.f32 0.0, %v1780
      %v1782 = vpop.f32.mrf.mxu0
      %1783 = vmatprep.mubr.f32.mxu0 0.0
      %1784 = vmatmul.mubr.f32.gmra.mxu0 %v1691
      %v1785 = vpop.f32.mrf.mxu0
      %v1786 = vadd.f32 0.0, %v1785
      %v1787 = vpop.f32.mrf.mxu0
      %1788 = vmatprep.mubr.f32.mxu0 0.0
      %1789 = vmatmul.mubr.f32.gmra.mxu0 %v1694
      %v1790 = vpop.f32.mrf.mxu0
      %v1791 = vadd.f32 0.0, %v1790
      %v1792 = vpop.f32.mrf.mxu0
      %1793 = vdwg.mxu0
      %v1794 = vadd.f32 %v1663, %v1766
      %v1795 = vadd.f32 %v1664, %v1771
      %v1796 = vadd.f32 %v1665, %v1776
      %v1797 = vadd.f32 %v1666, %v1781
      %v1798 = vadd.f32 %v1667, %v1786
      %v1799 = vadd.f32 %v1668, %v1791
      %s1800 = scalar_lea.vmem %s334, %s615
      %v1801 = vld [vmem:[%s1800] sm:$0xff]
      %v1802 = vld [vmem:[%s1800 + $0x8] sm:$0xff]
      %v1803 = vld [vmem:[%s1800 + $0x10] sm:$0xff]
      %v1804 = vld [vmem:[%s1800 + $0x18] sm:$0xff]
      %v1805 = vld [vmem:[%s1800 + $0x20] sm:$0xff]
      %v1806 = vld [vmem:[%s1800 + $0x28] sm:$0xff]
      %s1807 = scalar_lea.vmem %s3, 44
      %v1808 = vld [vmem:[%s1807] sm:$0xf]
      %v1810 = vsel %vm381, %v1801, 0
      %v1813 = vsel %vm381, %v1802, 0
      %v1816 = vsel %vm381, %v1803, 0
      %v1819 = vsel %vm381, %v1804, 0
      %v1822 = vsel %vm381, %v1805, 0
      %v1825 = vsel %vm381, %v1806, 0
      %v1828 = vsel %vm400, %v1808, 0
      %1830 = vmatprep.subr.mxu0 0.0
      %1831 = vmatpush1.msra.mxu0 0.0
      %1832 = vmatprep.subr.mxu0 0.0
      %1833 = vmatpush1.msra.mxu0 0.0
      %1834 = vmatprep.subr.mxu0 0.0
      %1835 = vmatpush1.msra.mxu0 0.0
      %1836 = vmatprep.subr.mxu0 0.0
      %1837 = vmatpush1.msra.mxu0 0.0
      %1838 = vmatprep.subr.mxu0 0.0
      %1839 = vmatpush1.msra.mxu0 0.0
      %1840 = vmatprep.subr.mxu0 0.0
      %1841 = vmatpush1.msra.mxu0 0.0
      %1842 = vmatprep.subr.mxu0 0.0
      %1843 = vmatpush1.msra.mxu0 0.0
      %1844 = vmatprep.subr.mxu0 0.0
      %1845 = vmatpush1.msra.mxu0 0.0
      %1846 = vmatprep.subr.mxu0 0.0
      %1847 = vmatpush1.msra.mxu0 0.0
      %1848 = vmatprep.subr.mxu0 0.0
      %1849 = vmatpush1.msra.mxu0 0.0
      %1850 = vmatprep.subr.mxu0 0.0
      %1851 = vmatpush1.msra.mxu0 0.0
      %1852 = vmatprep.subr.mxu0 0.0
      %1853 = vmatpush1.msra.mxu0 0.0
      %1854 = vmatprep.subr.mxu0 0.0
      %1855 = vmatpush1.msra.mxu0 0.0
      %1856 = vmatprep.subr.mxu0 0.0
      %1857 = vmatpush1.msra.mxu0 0.0
      %1858 = vmatprep.subr.mxu0 0.0
      %1859 = vmatpush1.msra.mxu0 0.0
      %1860 = vmatprep.subr.mxu0 0.0
      %1861 = vmatpush1.msra.mxu0 %v1828
      %1862 = vmatprep.subr.mxu0 0.0
      %1863 = vmatpush2.msra.mxu0 0.0
      %1864 = vmatprep.subr.mxu0 0.0
      %1865 = vmatpush2.msra.mxu0 0.0
      %1866 = vmatprep.subr.mxu0 0.0
      %1867 = vmatpush2.msra.mxu0 0.0
      %1868 = vmatprep.subr.mxu0 0.0
      %1869 = vmatpush2.msra.mxu0 0.0
      %1870 = vmatprep.subr.mxu0 0.0
      %1871 = vmatpush2.msra.mxu0 0.0
      %1872 = vmatprep.subr.mxu0 0.0
      %1873 = vmatpush2.msra.mxu0 0.0
      %1874 = vmatprep.subr.mxu0 0.0
      %1875 = vmatpush2.msra.mxu0 0.0
      %1876 = vmatprep.subr.mxu0 0.0
      %1877 = vmatpush2.msra.mxu0 0.0
      %1878 = vmatprep.subr.mxu0 0.0
      %1879 = vmatpush2.msra.mxu0 0.0
      %1880 = vmatprep.subr.mxu0 0.0
      %1881 = vmatpush2.msra.mxu0 0.0
      %1882 = vmatprep.subr.mxu0 0.0
      %1883 = vmatpush2.msra.mxu0 0.0
      %1884 = vmatprep.subr.mxu0 0.0
      %1885 = vmatpush2.msra.mxu0 0.0
      %1886 = vmatprep.subr.mxu0 0.0
      %1887 = vmatpush2.msra.mxu0 0.0
      %1888 = vmatprep.subr.mxu0 0.0
      %1889 = vmatpush2.msra.mxu0 0.0
      %1890 = vmatprep.subr.mxu0 0.0
      %1891 = vmatpush2.msra.mxu0 0.0
      %1892 = vmatprep.subr.mxu0 0.0
      %1893 = vmatpush2.msra.mxu0 0.0
      %1894 = vmatprep.mubr.f32.mxu0 0.0
      %1895 = vmatmul.mubr.f32.gmra.mxu0 %v1810
      %v1896 = vpop.f32.mrf.mxu0
      %v1897 = vadd.f32 0.0, %v1896
      %v1898 = vpop.f32.mrf.mxu0
      %1899 = vmatprep.mubr.f32.mxu0 0.0
      %1900 = vmatmul.mubr.f32.gmra.mxu0 %v1813
      %v1901 = vpop.f32.mrf.mxu0
      %v1902 = vadd.f32 0.0, %v1901
      %v1903 = vpop.f32.mrf.mxu0
      %1904 = vmatprep.mubr.f32.mxu0 0.0
      %1905 = vmatmul.mubr.f32.gmra.mxu0 %v1816
      %v1906 = vpop.f32.mrf.mxu0
      %v1907 = vadd.f32 0.0, %v1906
      %v1908 = vpop.f32.mrf.mxu0
      %1909 = vmatprep.mubr.f32.mxu0 0.0
      %1910 = vmatmul.mubr.f32.gmra.mxu0 %v1819
      %v1911 = vpop.f32.mrf.mxu0
      %v1912 = vadd.f32 0.0, %v1911
      %v1913 = vpop.f32.mrf.mxu0
      %1914 = vmatprep.mubr.f32.mxu0 0.0
      %1915 = vmatmul.mubr.f32.gmra.mxu0 %v1822
      %v1916 = vpop.f32.mrf.mxu0
      %v1917 = vadd.f32 0.0, %v1916
      %v1918 = vpop.f32.mrf.mxu0
      %1919 = vmatprep.mubr.f32.mxu0 0.0
      %1920 = vmatmul.mubr.f32.gmra.mxu0 %v1825
      %v1921 = vpop.f32.mrf.mxu0
      %v1922 = vadd.f32 0.0, %v1921
      %v1923 = vpop.f32.mrf.mxu0
      %1924 = vdwg.mxu0
      %v1925 = vadd.f32 %v1794, %v1897
      %v1926 = vadd.f32 %v1795, %v1902
      %v1927 = vadd.f32 %v1796, %v1907
      %v1928 = vadd.f32 %v1797, %v1912
      %v1929 = vadd.f32 %v1798, %v1917
      %v1930 = vadd.f32 %v1799, %v1922
      %s1931 = scalar_lea.vmem %s334, %s747
      %v1932 = vld [vmem:[%s1931] sm:$0xff]
      %v1933 = vld [vmem:[%s1931 + $0x8] sm:$0xff]
      %v1934 = vld [vmem:[%s1931 + $0x10] sm:$0xff]
      %v1935 = vld [vmem:[%s1931 + $0x18] sm:$0xff]
      %v1936 = vld [vmem:[%s1931 + $0x20] sm:$0xff]
      %v1937 = vld [vmem:[%s1931 + $0x28] sm:$0xff]
      %s1938 = scalar_lea.vmem %s3, 48
      %v1939 = vld [vmem:[%s1938] sm:$0xf]
      %v1941 = vsel %vm381, %v1932, 0
      %v1944 = vsel %vm381, %v1933, 0
      %v1947 = vsel %vm381, %v1934, 0
      %v1950 = vsel %vm381, %v1935, 0
      %v1953 = vsel %vm381, %v1936, 0
      %v1956 = vsel %vm381, %v1937, 0
      %v1959 = vsel %vm400, %v1939, 0
      %1961 = vmatprep.subr.mxu0 0.0
      %1962 = vmatpush1.msra.mxu0 0.0
      %1963 = vmatprep.subr.mxu0 0.0
      %1964 = vmatpush1.msra.mxu0 0.0
      %1965 = vmatprep.subr.mxu0 0.0
      %1966 = vmatpush1.msra.mxu0 0.0
      %1967 = vmatprep.subr.mxu0 0.0
      %1968 = vmatpush1.msra.mxu0 0.0
      %1969 = vmatprep.subr.mxu0 0.0
      %1970 = vmatpush1.msra.mxu0 0.0
      %1971 = vmatprep.subr.mxu0 0.0
      %1972 = vmatpush1.msra.mxu0 0.0
      %1973 = vmatprep.subr.mxu0 0.0
      %1974 = vmatpush1.msra.mxu0 0.0
      %1975 = vmatprep.subr.mxu0 0.0
      %1976 = vmatpush1.msra.mxu0 0.0
      %1977 = vmatprep.subr.mxu0 0.0
      %1978 = vmatpush1.msra.mxu0 0.0
      %1979 = vmatprep.subr.mxu0 0.0
      %1980 = vmatpush1.msra.mxu0 0.0
      %1981 = vmatprep.subr.mxu0 0.0
      %1982 = vmatpush1.msra.mxu0 0.0
      %1983 = vmatprep.subr.mxu0 0.0
      %1984 = vmatpush1.msra.mxu0 0.0
      %1985 = vmatprep.subr.mxu0 0.0
      %1986 = vmatpush1.msra.mxu0 0.0
      %1987 = vmatprep.subr.mxu0 0.0
      %1988 = vmatpush1.msra.mxu0 0.0
      %1989 = vmatprep.subr.mxu0 0.0
      %1990 = vmatpush1.msra.mxu0 0.0
      %1991 = vmatprep.subr.mxu0 0.0
      %1992 = vmatpush1.msra.mxu0 %v1959
      %1993 = vmatprep.subr.mxu0 0.0
      %1994 = vmatpush2.msra.mxu0 0.0
      %1995 = vmatprep.subr.mxu0 0.0
      %1996 = vmatpush2.msra.mxu0 0.0
      %1997 = vmatprep.subr.mxu0 0.0
      %1998 = vmatpush2.msra.mxu0 0.0
      %1999 = vmatprep.subr.mxu0 0.0
      %2000 = vmatpush2.msra.mxu0 0.0
      %2001 = vmatprep.subr.mxu0 0.0
      %2002 = vmatpush2.msra.mxu0 0.0
      %2003 = vmatprep.subr.mxu0 0.0
      %2004 = vmatpush2.msra.mxu0 0.0
      %2005 = vmatprep.subr.mxu0 0.0
      %2006 = vmatpush2.msra.mxu0 0.0
      %2007 = vmatprep.subr.mxu0 0.0
      %2008 = vmatpush2.msra.mxu0 0.0
      %2009 = vmatprep.subr.mxu0 0.0
      %2010 = vmatpush2.msra.mxu0 0.0
      %2011 = vmatprep.subr.mxu0 0.0
      %2012 = vmatpush2.msra.mxu0 0.0
      %2013 = vmatprep.subr.mxu0 0.0
      %2014 = vmatpush2.msra.mxu0 0.0
      %2015 = vmatprep.subr.mxu0 0.0
      %2016 = vmatpush2.msra.mxu0 0.0
      %2017 = vmatprep.subr.mxu0 0.0
      %2018 = vmatpush2.msra.mxu0 0.0
      %2019 = vmatprep.subr.mxu0 0.0
      %2020 = vmatpush2.msra.mxu0 0.0
      %2021 = vmatprep.subr.mxu0 0.0
      %2022 = vmatpush2.msra.mxu0 0.0
      %2023 = vmatprep.subr.mxu0 0.0
      %2024 = vmatpush2.msra.mxu0 0.0
      %2025 = vmatprep.mubr.f32.mxu0 0.0
      %2026 = vmatmul.mubr.f32.gmra.mxu0 %v1941
      %v2027 = vpop.f32.mrf.mxu0
      %v2028 = vadd.f32 0.0, %v2027
      %v2029 = vpop.f32.mrf.mxu0
      %2030 = vmatprep.mubr.f32.mxu0 0.0
      %2031 = vmatmul.mubr.f32.gmra.mxu0 %v1944
      %v2032 = vpop.f32.mrf.mxu0
      %v2033 = vadd.f32 0.0, %v2032
      %v2034 = vpop.f32.mrf.mxu0
      %2035 = vmatprep.mubr.f32.mxu0 0.0
      %2036 = vmatmul.mubr.f32.gmra.mxu0 %v1947
      %v2037 = vpop.f32.mrf.mxu0
      %v2038 = vadd.f32 0.0, %v2037
      %v2039 = vpop.f32.mrf.mxu0
      %2040 = vmatprep.mubr.f32.mxu0 0.0
      %2041 = vmatmul.mubr.f32.gmra.mxu0 %v1950
      %v2042 = vpop.f32.mrf.mxu0
      %v2043 = vadd.f32 0.0, %v2042
      %v2044 = vpop.f32.mrf.mxu0
      %2045 = vmatprep.mubr.f32.mxu0 0.0
      %2046 = vmatmul.mubr.f32.gmra.mxu0 %v1953
      %v2047 = vpop.f32.mrf.mxu0
      %v2048 = vadd.f32 0.0, %v2047
      %v2049 = vpop.f32.mrf.mxu0
      %2050 = vmatprep.mubr.f32.mxu0 0.0
      %2051 = vmatmul.mubr.f32.gmra.mxu0 %v1956
      %v2052 = vpop.f32.mrf.mxu0
      %v2053 = vadd.f32 0.0, %v2052
      %v2054 = vpop.f32.mrf.mxu0
      %2055 = vdwg.mxu0
      %v2056 = vadd.f32 %v1925, %v2028
      %v2057 = vadd.f32 %v1926, %v2033
      %v2058 = vadd.f32 %v1927, %v2038
      %v2059 = vadd.f32 %v1928, %v2043
      %v2060 = vadd.f32 %v1929, %v2048
      %v2061 = vadd.f32 %v1930, %v2053
      %s2062 = scalar_lea.vmem %s334, %s879
      %v2063 = vld [vmem:[%s2062] sm:$0xff]
      %v2064 = vld [vmem:[%s2062 + $0x8] sm:$0xff]
      %v2065 = vld [vmem:[%s2062 + $0x10] sm:$0xff]
      %v2066 = vld [vmem:[%s2062 + $0x18] sm:$0xff]
      %v2067 = vld [vmem:[%s2062 + $0x20] sm:$0xff]
      %v2068 = vld [vmem:[%s2062 + $0x28] sm:$0xff]
      %s2069 = scalar_lea.vmem %s3, 52
      %v2070 = vld [vmem:[%s2069] sm:$0xf]
      %v2072 = vsel %vm381, %v2063, 0
      %v2075 = vsel %vm381, %v2064, 0
      %v2078 = vsel %vm381, %v2065, 0
      %v2081 = vsel %vm381, %v2066, 0
      %v2084 = vsel %vm381, %v2067, 0
      %v2087 = vsel %vm381, %v2068, 0
      %v2090 = vsel %vm400, %v2070, 0
      %2092 = vmatprep.subr.mxu0 0.0
      %2093 = vmatpush1.msra.mxu0 0.0
      %2094 = vmatprep.subr.mxu0 0.0
      %2095 = vmatpush1.msra.mxu0 0.0
      %2096 = vmatprep.subr.mxu0 0.0
      %2097 = vmatpush1.msra.mxu0 0.0
      %2098 = vmatprep.subr.mxu0 0.0
      %2099 = vmatpush1.msra.mxu0 0.0
      %2100 = vmatprep.subr.mxu0 0.0
      %2101 = vmatpush1.msra.mxu0 0.0
      %2102 = vmatprep.subr.mxu0 0.0
      %2103 = vmatpush1.msra.mxu0 0.0
      %2104 = vmatprep.subr.mxu0 0.0
      %2105 = vmatpush1.msra.mxu0 0.0
      %2106 = vmatprep.subr.mxu0 0.0
      %2107 = vmatpush1.msra.mxu0 0.0
      %2108 = vmatprep.subr.mxu0 0.0
      %2109 = vmatpush1.msra.mxu0 0.0
      %2110 = vmatprep.subr.mxu0 0.0
      %2111 = vmatpush1.msra.mxu0 0.0
      %2112 = vmatprep.subr.mxu0 0.0
      %2113 = vmatpush1.msra.mxu0 0.0
      %2114 = vmatprep.subr.mxu0 0.0
      %2115 = vmatpush1.msra.mxu0 0.0
      %2116 = vmatprep.subr.mxu0 0.0
      %2117 = vmatpush1.msra.mxu0 0.0
      %2118 = vmatprep.subr.mxu0 0.0
      %2119 = vmatpush1.msra.mxu0 0.0
      %2120 = vmatprep.subr.mxu0 0.0
      %2121 = vmatpush1.msra.mxu0 0.0
      %2122 = vmatprep.subr.mxu0 0.0
      %2123 = vmatpush1.msra.mxu0 %v2090
      %2124 = vmatprep.subr.mxu0 0.0
      %2125 = vmatpush2.msra.mxu0 0.0
      %2126 = vmatprep.subr.mxu0 0.0
      %2127 = vmatpush2.msra.mxu0 0.0
      %2128 = vmatprep.subr.mxu0 0.0
      %2129 = vmatpush2.msra.mxu0 0.0
      %2130 = vmatprep.subr.mxu0 0.0
      %2131 = vmatpush2.msra.mxu0 0.0
      %2132 = vmatprep.subr.mxu0 0.0
      %2133 = vmatpush2.msra.mxu0 0.0
      %2134 = vmatprep.subr.mxu0 0.0
      %2135 = vmatpush2.msra.mxu0 0.0
      %2136 = vmatprep.subr.mxu0 0.0
      %2137 = vmatpush2.msra.mxu0 0.0
      %2138 = vmatprep.subr.mxu0 0.0
      %2139 = vmatpush2.msra.mxu0 0.0
      %2140 = vmatprep.subr.mxu0 0.0
      %2141 = vmatpush2.msra.mxu0 0.0
      %2142 = vmatprep.subr.mxu0 0.0
      %2143 = vmatpush2.msra.mxu0 0.0
      %2144 = vmatprep.subr.mxu0 0.0
      %2145 = vmatpush2.msra.mxu0 0.0
      %2146 = vmatprep.subr.mxu0 0.0
      %2147 = vmatpush2.msra.mxu0 0.0
      %2148 = vmatprep.subr.mxu0 0.0
      %2149 = vmatpush2.msra.mxu0 0.0
      %2150 = vmatprep.subr.mxu0 0.0
      %2151 = vmatpush2.msra.mxu0 0.0
      %2152 = vmatprep.subr.mxu0 0.0
      %2153 = vmatpush2.msra.mxu0 0.0
      %2154 = vmatprep.subr.mxu0 0.0
      %2155 = vmatpush2.msra.mxu0 0.0
      %2156 = vmatprep.mubr.f32.mxu0 0.0
      %2157 = vmatmul.mubr.f32.gmra.mxu0 %v2072
      %v2158 = vpop.f32.mrf.mxu0
      %v2159 = vadd.f32 0.0, %v2158
      %v2160 = vpop.f32.mrf.mxu0
      %2161 = vmatprep.mubr.f32.mxu0 0.0
      %2162 = vmatmul.mubr.f32.gmra.mxu0 %v2075
      %v2163 = vpop.f32.mrf.mxu0
      %v2164 = vadd.f32 0.0, %v2163
      %v2165 = vpop.f32.mrf.mxu0
      %2166 = vmatprep.mubr.f32.mxu0 0.0
      %2167 = vmatmul.mubr.f32.gmra.mxu0 %v2078
      %v2168 = vpop.f32.mrf.mxu0
      %v2169 = vadd.f32 0.0, %v2168
      %v2170 = vpop.f32.mrf.mxu0
      %2171 = vmatprep.mubr.f32.mxu0 0.0
      %2172 = vmatmul.mubr.f32.gmra.mxu0 %v2081
      %v2173 = vpop.f32.mrf.mxu0
      %v2174 = vadd.f32 0.0, %v2173
      %v2175 = vpop.f32.mrf.mxu0
      %2176 = vmatprep.mubr.f32.mxu0 0.0
      %2177 = vmatmul.mubr.f32.gmra.mxu0 %v2084
      %v2178 = vpop.f32.mrf.mxu0
      %v2179 = vadd.f32 0.0, %v2178
      %v2180 = vpop.f32.mrf.mxu0
      %2181 = vmatprep.mubr.f32.mxu0 0.0
      %2182 = vmatmul.mubr.f32.gmra.mxu0 %v2087
      %v2183 = vpop.f32.mrf.mxu0
      %v2184 = vadd.f32 0.0, %v2183
      %v2185 = vpop.f32.mrf.mxu0
      %2186 = vdwg.mxu0
      %v2187 = vadd.f32 %v2056, %v2159
      %v2188 = vadd.f32 %v2057, %v2164
      %v2189 = vadd.f32 %v2058, %v2169
      %v2190 = vadd.f32 %v2059, %v2174
      %v2191 = vadd.f32 %v2060, %v2179
      %v2192 = vadd.f32 %v2061, %v2184
      %s2193 = scalar_lea.vmem %s334, %s1011
      %v2194 = vld [vmem:[%s2193] sm:$0xff]
      %v2195 = vld [vmem:[%s2193 + $0x8] sm:$0xff]
      %v2196 = vld [vmem:[%s2193 + $0x10] sm:$0xff]
      %v2197 = vld [vmem:[%s2193 + $0x18] sm:$0xff]
      %v2198 = vld [vmem:[%s2193 + $0x20] sm:$0xff]
      %v2199 = vld [vmem:[%s2193 + $0x28] sm:$0xff]
      %s2200 = scalar_lea.vmem %s3, 56
      %v2201 = vld [vmem:[%s2200] sm:$0xf]
      %v2203 = vsel %vm381, %v2194, 0
      %v2206 = vsel %vm381, %v2195, 0
      %v2209 = vsel %vm381, %v2196, 0
      %v2212 = vsel %vm381, %v2197, 0
      %v2215 = vsel %vm381, %v2198, 0
      %v2218 = vsel %vm381, %v2199, 0
      %v2221 = vsel %vm400, %v2201, 0
      %2223 = vmatprep.subr.mxu0 0.0
      %2224 = vmatpush1.msra.mxu0 0.0
      %2225 = vmatprep.subr.mxu0 0.0
      %2226 = vmatpush1.msra.mxu0 0.0
      %2227 = vmatprep.subr.mxu0 0.0
      %2228 = vmatpush1.msra.mxu0 0.0
      %2229 = vmatprep.subr.mxu0 0.0
      %2230 = vmatpush1.msra.mxu0 0.0
      %2231 = vmatprep.subr.mxu0 0.0
      %2232 = vmatpush1.msra.mxu0 0.0
      %2233 = vmatprep.subr.mxu0 0.0
      %2234 = vmatpush1.msra.mxu0 0.0
      %2235 = vmatprep.subr.mxu0 0.0
      %2236 = vmatpush1.msra.mxu0 0.0
      %2237 = vmatprep.subr.mxu0 0.0
      %2238 = vmatpush1.msra.mxu0 0.0
      %2239 = vmatprep.subr.mxu0 0.0
      %2240 = vmatpush1.msra.mxu0 0.0
      %2241 = vmatprep.subr.mxu0 0.0
      %2242 = vmatpush1.msra.mxu0 0.0
      %2243 = vmatprep.subr.mxu0 0.0
      %2244 = vmatpush1.msra.mxu0 0.0
      %2245 = vmatprep.subr.mxu0 0.0
      %2246 = vmatpush1.msra.mxu0 0.0
      %2247 = vmatprep.subr.mxu0 0.0
      %2248 = vmatpush1.msra.mxu0 0.0
      %2249 = vmatprep.subr.mxu0 0.0
      %2250 = vmatpush1.msra.mxu0 0.0
      %2251 = vmatprep.subr.mxu0 0.0
      %2252 = vmatpush1.msra.mxu0 0.0
      %2253 = vmatprep.subr.mxu0 0.0
      %2254 = vmatpush1.msra.mxu0 %v2221
      %2255 = vmatprep.subr.mxu0 0.0
      %2256 = vmatpush2.msra.mxu0 0.0
      %2257 = vmatprep.subr.mxu0 0.0
      %2258 = vmatpush2.msra.mxu0 0.0
      %2259 = vmatprep.subr.mxu0 0.0
      %2260 = vmatpush2.msra.mxu0 0.0
      %2261 = vmatprep.subr.mxu0 0.0
      %2262 = vmatpush2.msra.mxu0 0.0
      %2263 = vmatprep.subr.mxu0 0.0
      %2264 = vmatpush2.msra.mxu0 0.0
      %2265 = vmatprep.subr.mxu0 0.0
      %2266 = vmatpush2.msra.mxu0 0.0
      %2267 = vmatprep.subr.mxu0 0.0
      %2268 = vmatpush2.msra.mxu0 0.0
      %2269 = vmatprep.subr.mxu0 0.0
      %2270 = vmatpush2.msra.mxu0 0.0
      %2271 = vmatprep.subr.mxu0 0.0
      %2272 = vmatpush2.msra.mxu0 0.0
      %2273 = vmatprep.subr.mxu0 0.0
      %2274 = vmatpush2.msra.mxu0 0.0
      %2275 = vmatprep.subr.mxu0 0.0
      %2276 = vmatpush2.msra.mxu0 0.0
      %2277 = vmatprep.subr.mxu0 0.0
      %2278 = vmatpush2.msra.mxu0 0.0
      %2279 = vmatprep.subr.mxu0 0.0
      %2280 = vmatpush2.msra.mxu0 0.0
      %2281 = vmatprep.subr.mxu0 0.0
      %2282 = vmatpush2.msra.mxu0 0.0
      %2283 = vmatprep.subr.mxu0 0.0
      %2284 = vmatpush2.msra.mxu0 0.0
      %2285 = vmatprep.subr.mxu0 0.0
      %2286 = vmatpush2.msra.mxu0 0.0
      %2287 = vmatprep.mubr.f32.mxu0 0.0
      %2288 = vmatmul.mubr.f32.gmra.mxu0 %v2203
      %v2289 = vpop.f32.mrf.mxu0
      %v2290 = vadd.f32 0.0, %v2289
      %v2291 = vpop.f32.mrf.mxu0
      %2292 = vmatprep.mubr.f32.mxu0 0.0
      %2293 = vmatmul.mubr.f32.gmra.mxu0 %v2206
      %v2294 = vpop.f32.mrf.mxu0
      %v2295 = vadd.f32 0.0, %v2294
      %v2296 = vpop.f32.mrf.mxu0
      %2297 = vmatprep.mubr.f32.mxu0 0.0
      %2298 = vmatmul.mubr.f32.gmra.mxu0 %v2209
      %v2299 = vpop.f32.mrf.mxu0
      %v2300 = vadd.f32 0.0, %v2299
      %v2301 = vpop.f32.mrf.mxu0
      %2302 = vmatprep.mubr.f32.mxu0 0.0
      %2303 = vmatmul.mubr.f32.gmra.mxu0 %v2212
      %v2304 = vpop.f32.mrf.mxu0
      %v2305 = vadd.f32 0.0, %v2304
      %v2306 = vpop.f32.mrf.mxu0
      %2307 = vmatprep.mubr.f32.mxu0 0.0
      %2308 = vmatmul.mubr.f32.gmra.mxu0 %v2215
      %v2309 = vpop.f32.mrf.mxu0
      %v2310 = vadd.f32 0.0, %v2309
      %v2311 = vpop.f32.mrf.mxu0
      %2312 = vmatprep.mubr.f32.mxu0 0.0
      %2313 = vmatmul.mubr.f32.gmra.mxu0 %v2218
      %v2314 = vpop.f32.mrf.mxu0
      %v2315 = vadd.f32 0.0, %v2314
      %v2316 = vpop.f32.mrf.mxu0
      %2317 = vdwg.mxu0
      %v2318 = vadd.f32 %v2187, %v2290
      %v2319 = vadd.f32 %v2188, %v2295
      %v2320 = vadd.f32 %v2189, %v2300
      %v2321 = vadd.f32 %v2190, %v2305
      %v2322 = vadd.f32 %v2191, %v2310
      %v2323 = vadd.f32 %v2192, %v2315
      %s2324 = scalar_lea.vmem %s334, %s1143
      %v2325 = vld [vmem:[%s2324] sm:$0xff]
      %v2326 = vld [vmem:[%s2324 + $0x8] sm:$0xff]
      %v2327 = vld [vmem:[%s2324 + $0x10] sm:$0xff]
      %v2328 = vld [vmem:[%s2324 + $0x18] sm:$0xff]
      %v2329 = vld [vmem:[%s2324 + $0x20] sm:$0xff]
      %v2330 = vld [vmem:[%s2324 + $0x28] sm:$0xff]
      %s2331 = scalar_lea.vmem %s3, 60
      %v2332 = vld [vmem:[%s2331] sm:$0xf]
      %v2334 = vsel %vm381, %v2325, 0
      %v2337 = vsel %vm381, %v2326, 0
      %v2340 = vsel %vm381, %v2327, 0
      %v2343 = vsel %vm381, %v2328, 0
      %v2346 = vsel %vm381, %v2329, 0
      %v2349 = vsel %vm381, %v2330, 0
      %v2352 = vsel %vm400, %v2332, 0
      %2354 = vmatprep.subr.mxu0 0.0
      %2355 = vmatpush1.msra.mxu0 0.0
      %2356 = vmatprep.subr.mxu0 0.0
      %2357 = vmatpush1.msra.mxu0 0.0
      %2358 = vmatprep.subr.mxu0 0.0
      %2359 = vmatpush1.msra.mxu0 0.0
      %2360 = vmatprep.subr.mxu0 0.0
      %2361 = vmatpush1.msra.mxu0 0.0
      %2362 = vmatprep.subr.mxu0 0.0
      %2363 = vmatpush1.msra.mxu0 0.0
      %2364 = vmatprep.subr.mxu0 0.0
      %2365 = vmatpush1.msra.mxu0 0.0
      %2366 = vmatprep.subr.mxu0 0.0
      %2367 = vmatpush1.msra.mxu0 0.0
      %2368 = vmatprep.subr.mxu0 0.0
      %2369 = vmatpush1.msra.mxu0 0.0
      %2370 = vmatprep.subr.mxu0 0.0
      %2371 = vmatpush1.msra.mxu0 0.0
      %2372 = vmatprep.subr.mxu0 0.0
      %2373 = vmatpush1.msra.mxu0 0.0
      %2374 = vmatprep.subr.mxu0 0.0
      %2375 = vmatpush1.msra.mxu0 0.0
      %2376 = vmatprep.subr.mxu0 0.0
      %2377 = vmatpush1.msra.mxu0 0.0
      %2378 = vmatprep.subr.mxu0 0.0
      %2379 = vmatpush1.msra.mxu0 0.0
      %2380 = vmatprep.subr.mxu0 0.0
      %2381 = vmatpush1.msra.mxu0 0.0
      %2382 = vmatprep.subr.mxu0 0.0
      %2383 = vmatpush1.msra.mxu0 0.0
      %2384 = vmatprep.subr.mxu0 0.0
      %2385 = vmatpush1.msra.mxu0 %v2352
      %2386 = vmatprep.subr.mxu0 0.0
      %2387 = vmatpush2.msra.mxu0 0.0
      %2388 = vmatprep.subr.mxu0 0.0
      %2389 = vmatpush2.msra.mxu0 0.0
      %2390 = vmatprep.subr.mxu0 0.0
      %2391 = vmatpush2.msra.mxu0 0.0
      %2392 = vmatprep.subr.mxu0 0.0
      %2393 = vmatpush2.msra.mxu0 0.0
      %2394 = vmatprep.subr.mxu0 0.0
      %2395 = vmatpush2.msra.mxu0 0.0
      %2396 = vmatprep.subr.mxu0 0.0
      %2397 = vmatpush2.msra.mxu0 0.0
      %2398 = vmatprep.subr.mxu0 0.0
      %2399 = vmatpush2.msra.mxu0 0.0
      %2400 = vmatprep.subr.mxu0 0.0
      %2401 = vmatpush2.msra.mxu0 0.0
      %2402 = vmatprep.subr.mxu0 0.0
      %2403 = vmatpush2.msra.mxu0 0.0
      %2404 = vmatprep.subr.mxu0 0.0
      %2405 = vmatpush2.msra.mxu0 0.0
      %2406 = vmatprep.subr.mxu0 0.0
      %2407 = vmatpush2.msra.mxu0 0.0
      %2408 = vmatprep.subr.mxu0 0.0
      %2409 = vmatpush2.msra.mxu0 0.0
      %2410 = vmatprep.subr.mxu0 0.0
      %2411 = vmatpush2.msra.mxu0 0.0
      %2412 = vmatprep.subr.mxu0 0.0
      %2413 = vmatpush2.msra.mxu0 0.0
      %2414 = vmatprep.subr.mxu0 0.0
      %2415 = vmatpush2.msra.mxu0 0.0
      %2416 = vmatprep.subr.mxu0 0.0
      %2417 = vmatpush2.msra.mxu0 0.0
      %2418 = vmatprep.mubr.f32.mxu0 0.0
      %2419 = vmatmul.mubr.f32.gmra.mxu0 %v2334
      %v2420 = vpop.f32.mrf.mxu0
      %v2421 = vadd.f32 0.0, %v2420
      %v2422 = vpop.f32.mrf.mxu0
      %2423 = vmatprep.mubr.f32.mxu0 0.0
      %2424 = vmatmul.mubr.f32.gmra.mxu0 %v2337
      %v2425 = vpop.f32.mrf.mxu0
      %v2426 = vadd.f32 0.0, %v2425
      %v2427 = vpop.f32.mrf.mxu0
      %2428 = vmatprep.mubr.f32.mxu0 0.0
      %2429 = vmatmul.mubr.f32.gmra.mxu0 %v2340
      %v2430 = vpop.f32.mrf.mxu0
      %v2431 = vadd.f32 0.0, %v2430
      %v2432 = vpop.f32.mrf.mxu0
      %2433 = vmatprep.mubr.f32.mxu0 0.0
      %2434 = vmatmul.mubr.f32.gmra.mxu0 %v2343
      %v2435 = vpop.f32.mrf.mxu0
      %v2436 = vadd.f32 0.0, %v2435
      %v2437 = vpop.f32.mrf.mxu0
      %2438 = vmatprep.mubr.f32.mxu0 0.0
      %2439 = vmatmul.mubr.f32.gmra.mxu0 %v2346
      %v2440 = vpop.f32.mrf.mxu0
      %v2441 = vadd.f32 0.0, %v2440
      %v2442 = vpop.f32.mrf.mxu0
      %2443 = vmatprep.mubr.f32.mxu0 0.0
      %2444 = vmatmul.mubr.f32.gmra.mxu0 %v2349
      %v2445 = vpop.f32.mrf.mxu0
      %v2446 = vadd.f32 0.0, %v2445
      %v2447 = vpop.f32.mrf.mxu0
      %2448 = vdwg.mxu0
      %v2449 = vadd.f32 %v2318, %v2421
      %v2450 = vadd.f32 %v2319, %v2426
      %v2451 = vadd.f32 %v2320, %v2431
      %v2452 = vadd.f32 %v2321, %v2436
      %v2453 = vadd.f32 %v2322, %v2441
      %v2454 = vadd.f32 %v2323, %v2446
      %s2455 = scalar_lea.vmem %s334, %s1275
      %v2456 = vld [vmem:[%s2455] sm:$0xff]
      %v2457 = vld [vmem:[%s2455 + $0x8] sm:$0xff]
      %v2458 = vld [vmem:[%s2455 + $0x10] sm:$0xff]
      %v2459 = vld [vmem:[%s2455 + $0x18] sm:$0xff]
      %v2460 = vld [vmem:[%s2455 + $0x20] sm:$0xff]
      %v2461 = vld [vmem:[%s2455 + $0x28] sm:$0xff]
      %s2462 = scalar_lea.vmem %s3, 64
      %v2463 = vld [vmem:[%s2462] sm:$0xf]
      %v2465 = vsel %vm381, %v2456, 0
      %v2468 = vsel %vm381, %v2457, 0
      %v2471 = vsel %vm381, %v2458, 0
      %v2474 = vsel %vm381, %v2459, 0
      %v2477 = vsel %vm381, %v2460, 0
      %v2480 = vsel %vm381, %v2461, 0
      %v2483 = vsel %vm400, %v2463, 0
      %2485 = vmatprep.subr.mxu0 0.0
      %2486 = vmatpush1.msra.mxu0 0.0
      %2487 = vmatprep.subr.mxu0 0.0
      %2488 = vmatpush1.msra.mxu0 0.0
      %2489 = vmatprep.subr.mxu0 0.0
      %2490 = vmatpush1.msra.mxu0 0.0
      %2491 = vmatprep.subr.mxu0 0.0
      %2492 = vmatpush1.msra.mxu0 0.0
      %2493 = vmatprep.subr.mxu0 0.0
      %2494 = vmatpush1.msra.mxu0 0.0
      %2495 = vmatprep.subr.mxu0 0.0
      %2496 = vmatpush1.msra.mxu0 0.0
      %2497 = vmatprep.subr.mxu0 0.0
      %2498 = vmatpush1.msra.mxu0 0.0
      %2499 = vmatprep.subr.mxu0 0.0
      %2500 = vmatpush1.msra.mxu0 0.0
      %2501 = vmatprep.subr.mxu0 0.0
      %2502 = vmatpush1.msra.mxu0 0.0
      %2503 = vmatprep.subr.mxu0 0.0
      %2504 = vmatpush1.msra.mxu0 0.0
      %2505 = vmatprep.subr.mxu0 0.0
      %2506 = vmatpush1.msra.mxu0 0.0
      %2507 = vmatprep.subr.mxu0 0.0
      %2508 = vmatpush1.msra.mxu0 0.0
      %2509 = vmatprep.subr.mxu0 0.0
      %2510 = vmatpush1.msra.mxu0 0.0
      %2511 = vmatprep.subr.mxu0 0.0
      %2512 = vmatpush1.msra.mxu0 0.0
      %2513 = vmatprep.subr.mxu0 0.0
      %2514 = vmatpush1.msra.mxu0 0.0
      %2515 = vmatprep.subr.mxu0 0.0
      %2516 = vmatpush1.msra.mxu0 %v2483
      %2517 = vmatprep.subr.mxu0 0.0
      %2518 = vmatpush2.msra.mxu0 0.0
      %2519 = vmatprep.subr.mxu0 0.0
      %2520 = vmatpush2.msra.mxu0 0.0
      %2521 = vmatprep.subr.mxu0 0.0
      %2522 = vmatpush2.msra.mxu0 0.0
      %2523 = vmatprep.subr.mxu0 0.0
      %2524 = vmatpush2.msra.mxu0 0.0
      %2525 = vmatprep.subr.mxu0 0.0
      %2526 = vmatpush2.msra.mxu0 0.0
      %2527 = vmatprep.subr.mxu0 0.0
      %2528 = vmatpush2.msra.mxu0 0.0
      %2529 = vmatprep.subr.mxu0 0.0
      %2530 = vmatpush2.msra.mxu0 0.0
      %2531 = vmatprep.subr.mxu0 0.0
      %2532 = vmatpush2.msra.mxu0 0.0
      %2533 = vmatprep.subr.mxu0 0.0
      %2534 = vmatpush2.msra.mxu0 0.0
      %2535 = vmatprep.subr.mxu0 0.0
      %2536 = vmatpush2.msra.mxu0 0.0
      %2537 = vmatprep.subr.mxu0 0.0
      %2538 = vmatpush2.msra.mxu0 0.0
      %2539 = vmatprep.subr.mxu0 0.0
      %2540 = vmatpush2.msra.mxu0 0.0
      %2541 = vmatprep.subr.mxu0 0.0
      %2542 = vmatpush2.msra.mxu0 0.0
      %2543 = vmatprep.subr.mxu0 0.0
      %2544 = vmatpush2.msra.mxu0 0.0
      %2545 = vmatprep.subr.mxu0 0.0
      %2546 = vmatpush2.msra.mxu0 0.0
      %2547 = vmatprep.subr.mxu0 0.0
      %2548 = vmatpush2.msra.mxu0 0.0
      %2549 = vmatprep.mubr.f32.mxu0 0.0
      %2550 = vmatmul.mubr.f32.gmra.mxu0 %v2465
      %v2551 = vpop.f32.mrf.mxu0
      %v2552 = vadd.f32 0.0, %v2551
      %v2553 = vpop.f32.mrf.mxu0
      %2554 = vmatprep.mubr.f32.mxu0 0.0
      %2555 = vmatmul.mubr.f32.gmra.mxu0 %v2468
      %v2556 = vpop.f32.mrf.mxu0
      %v2557 = vadd.f32 0.0, %v2556
      %v2558 = vpop.f32.mrf.mxu0
      %2559 = vmatprep.mubr.f32.mxu0 0.0
      %2560 = vmatmul.mubr.f32.gmra.mxu0 %v2471
      %v2561 = vpop.f32.mrf.mxu0
      %v2562 = vadd.f32 0.0, %v2561
      %v2563 = vpop.f32.mrf.mxu0
      %2564 = vmatprep.mubr.f32.mxu0 0.0
      %2565 = vmatmul.mubr.f32.gmra.mxu0 %v2474
      %v2566 = vpop.f32.mrf.mxu0
      %v2567 = vadd.f32 0.0, %v2566
      %v2568 = vpop.f32.mrf.mxu0
      %2569 = vmatprep.mubr.f32.mxu0 0.0
      %2570 = vmatmul.mubr.f32.gmra.mxu0 %v2477
      %v2571 = vpop.f32.mrf.mxu0
      %v2572 = vadd.f32 0.0, %v2571
      %v2573 = vpop.f32.mrf.mxu0
      %2574 = vmatprep.mubr.f32.mxu0 0.0
      %2575 = vmatmul.mubr.f32.gmra.mxu0 %v2480
      %v2576 = vpop.f32.mrf.mxu0
      %v2577 = vadd.f32 0.0, %v2576
      %v2578 = vpop.f32.mrf.mxu0
      %2579 = vdwg.mxu0
      %v2580 = vadd.f32 %v2449, %v2552
      %v2581 = vadd.f32 %v2450, %v2557
      %v2582 = vadd.f32 %v2451, %v2562
      %v2583 = vadd.f32 %v2452, %v2567
      %v2584 = vadd.f32 %v2453, %v2572
      %v2585 = vadd.f32 %v2454, %v2577
      %s2586 = scalar_lea.vmem %s334, %s1407
      %v2587 = vld [vmem:[%s2586] sm:$0xff]
      %v2588 = vld [vmem:[%s2586 + $0x8] sm:$0xff]
      %v2589 = vld [vmem:[%s2586 + $0x10] sm:$0xff]
      %v2590 = vld [vmem:[%s2586 + $0x18] sm:$0xff]
      %v2591 = vld [vmem:[%s2586 + $0x20] sm:$0xff]
      %v2592 = vld [vmem:[%s2586 + $0x28] sm:$0xff]
      %s2593 = scalar_lea.vmem %s3, 68
      %v2594 = vld [vmem:[%s2593] sm:$0xf]
      %v2596 = vsel %vm381, %v2587, 0
      %v2599 = vsel %vm381, %v2588, 0
      %v2602 = vsel %vm381, %v2589, 0
      %v2605 = vsel %vm381, %v2590, 0
      %v2608 = vsel %vm381, %v2591, 0
      %v2611 = vsel %vm381, %v2592, 0
      %v2614 = vsel %vm400, %v2594, 0
      %2616 = vmatprep.subr.mxu0 0.0
      %2617 = vmatpush1.msra.mxu0 0.0
      %2618 = vmatprep.subr.mxu0 0.0
      %2619 = vmatpush1.msra.mxu0 0.0
      %2620 = vmatprep.subr.mxu0 0.0
      %2621 = vmatpush1.msra.mxu0 0.0
      %2622 = vmatprep.subr.mxu0 0.0
      %2623 = vmatpush1.msra.mxu0 0.0
      %2624 = vmatprep.subr.mxu0 0.0
      %2625 = vmatpush1.msra.mxu0 0.0
      %2626 = vmatprep.subr.mxu0 0.0
      %2627 = vmatpush1.msra.mxu0 0.0
      %2628 = vmatprep.subr.mxu0 0.0
      %2629 = vmatpush1.msra.mxu0 0.0
      %2630 = vmatprep.subr.mxu0 0.0
      %2631 = vmatpush1.msra.mxu0 0.0
      %2632 = vmatprep.subr.mxu0 0.0
      %2633 = vmatpush1.msra.mxu0 0.0
      %2634 = vmatprep.subr.mxu0 0.0
      %2635 = vmatpush1.msra.mxu0 0.0
      %2636 = vmatprep.subr.mxu0 0.0
      %2637 = vmatpush1.msra.mxu0 0.0
      %2638 = vmatprep.subr.mxu0 0.0
      %2639 = vmatpush1.msra.mxu0 0.0
      %2640 = vmatprep.subr.mxu0 0.0
      %2641 = vmatpush1.msra.mxu0 0.0
      %2642 = vmatprep.subr.mxu0 0.0
      %2643 = vmatpush1.msra.mxu0 0.0
      %2644 = vmatprep.subr.mxu0 0.0
      %2645 = vmatpush1.msra.mxu0 0.0
      %2646 = vmatprep.subr.mxu0 0.0
      %2647 = vmatpush1.msra.mxu0 %v2614
      %2648 = vmatprep.subr.mxu0 0.0
      %2649 = vmatpush2.msra.mxu0 0.0
      %2650 = vmatprep.subr.mxu0 0.0
      %2651 = vmatpush2.msra.mxu0 0.0
      %2652 = vmatprep.subr.mxu0 0.0
      %2653 = vmatpush2.msra.mxu0 0.0
      %2654 = vmatprep.subr.mxu0 0.0
      %2655 = vmatpush2.msra.mxu0 0.0
      %2656 = vmatprep.subr.mxu0 0.0
      %2657 = vmatpush2.msra.mxu0 0.0
      %2658 = vmatprep.subr.mxu0 0.0
      %2659 = vmatpush2.msra.mxu0 0.0
      %2660 = vmatprep.subr.mxu0 0.0
      %2661 = vmatpush2.msra.mxu0 0.0
      %2662 = vmatprep.subr.mxu0 0.0
      %2663 = vmatpush2.msra.mxu0 0.0
      %2664 = vmatprep.subr.mxu0 0.0
      %2665 = vmatpush2.msra.mxu0 0.0
      %2666 = vmatprep.subr.mxu0 0.0
      %2667 = vmatpush2.msra.mxu0 0.0
      %2668 = vmatprep.subr.mxu0 0.0
      %2669 = vmatpush2.msra.mxu0 0.0
      %2670 = vmatprep.subr.mxu0 0.0
      %2671 = vmatpush2.msra.mxu0 0.0
      %2672 = vmatprep.subr.mxu0 0.0
      %2673 = vmatpush2.msra.mxu0 0.0
      %2674 = vmatprep.subr.mxu0 0.0
      %2675 = vmatpush2.msra.mxu0 0.0
      %2676 = vmatprep.subr.mxu0 0.0
      %2677 = vmatpush2.msra.mxu0 0.0
      %2678 = vmatprep.subr.mxu0 0.0
      %2679 = vmatpush2.msra.mxu0 0.0
      %2680 = vmatprep.mubr.f32.mxu0 0.0
      %2681 = vmatmul.mubr.f32.gmra.mxu0 %v2596
      %v2682 = vpop.f32.mrf.mxu0
      %v2683 = vadd.f32 0.0, %v2682
      %v2684 = vpop.f32.mrf.mxu0
      %2685 = vmatprep.mubr.f32.mxu0 0.0
      %2686 = vmatmul.mubr.f32.gmra.mxu0 %v2599
      %v2687 = vpop.f32.mrf.mxu0
      %v2688 = vadd.f32 0.0, %v2687
      %v2689 = vpop.f32.mrf.mxu0
      %2690 = vmatprep.mubr.f32.mxu0 0.0
      %2691 = vmatmul.mubr.f32.gmra.mxu0 %v2602
      %v2692 = vpop.f32.mrf.mxu0
      %v2693 = vadd.f32 0.0, %v2692
      %v2694 = vpop.f32.mrf.mxu0
      %2695 = vmatprep.mubr.f32.mxu0 0.0
      %2696 = vmatmul.mubr.f32.gmra.mxu0 %v2605
      %v2697 = vpop.f32.mrf.mxu0
      %v2698 = vadd.f32 0.0, %v2697
      %v2699 = vpop.f32.mrf.mxu0
      %2700 = vmatprep.mubr.f32.mxu0 0.0
      %2701 = vmatmul.mubr.f32.gmra.mxu0 %v2608
      %v2702 = vpop.f32.mrf.mxu0
      %v2703 = vadd.f32 0.0, %v2702
      %v2704 = vpop.f32.mrf.mxu0
      %2705 = vmatprep.mubr.f32.mxu0 0.0
      %2706 = vmatmul.mubr.f32.gmra.mxu0 %v2611
      %v2707 = vpop.f32.mrf.mxu0
      %v2708 = vadd.f32 0.0, %v2707
      %v2709 = vpop.f32.mrf.mxu0
      %2710 = vdwg.mxu0
      %v2711 = vadd.f32 %v2580, %v2683
      %v2712 = vadd.f32 %v2581, %v2688
      %v2713 = vadd.f32 %v2582, %v2693
      %v2714 = vadd.f32 %v2583, %v2698
      %v2715 = vadd.f32 %v2584, %v2703
      %v2716 = vadd.f32 %v2585, %v2708
      %v2717 = vld [vmem:[%s345] sm:$0xff]
      %v2718 = vld [vmem:[%s345 + $0x8] sm:$0xff]
      %v2719 = vld [vmem:[%s345 + $0x10] sm:$0xff]
      %v2720 = vld [vmem:[%s345 + $0x18] sm:$0xff]
      %v2721 = vld [vmem:[%s345 + $0x20] sm:$0xff]
      %v2722 = vld [vmem:[%s345 + $0x28] sm:$0xff]
      %s2723 = scalar_lea.vmem %s3, 72
      %v2724 = vld [vmem:[%s2723] sm:$0xf]
      %v2726 = vsel %vm381, %v2717, 0
      %v2729 = vsel %vm381, %v2718, 0
      %v2732 = vsel %vm381, %v2719, 0
      %v2735 = vsel %vm381, %v2720, 0
      %v2738 = vsel %vm381, %v2721, 0
      %v2741 = vsel %vm381, %v2722, 0
      %v2744 = vsel %vm400, %v2724, 0
      %2746 = vmatprep.subr.mxu0 0.0
      %2747 = vmatpush1.msra.mxu0 0.0
      %2748 = vmatprep.subr.mxu0 0.0
      %2749 = vmatpush1.msra.mxu0 0.0
      %2750 = vmatprep.subr.mxu0 0.0
      %2751 = vmatpush1.msra.mxu0 0.0
      %2752 = vmatprep.subr.mxu0 0.0
      %2753 = vmatpush1.msra.mxu0 0.0
      %2754 = vmatprep.subr.mxu0 0.0
      %2755 = vmatpush1.msra.mxu0 0.0
      %2756 = vmatprep.subr.mxu0 0.0
      %2757 = vmatpush1.msra.mxu0 0.0
      %2758 = vmatprep.subr.mxu0 0.0
      %2759 = vmatpush1.msra.mxu0 0.0
      %2760 = vmatprep.subr.mxu0 0.0
      %2761 = vmatpush1.msra.mxu0 0.0
      %2762 = vmatprep.subr.mxu0 0.0
      %2763 = vmatpush1.msra.mxu0 0.0
      %2764 = vmatprep.subr.mxu0 0.0
      %2765 = vmatpush1.msra.mxu0 0.0
      %2766 = vmatprep.subr.mxu0 0.0
      %2767 = vmatpush1.msra.mxu0 0.0
      %2768 = vmatprep.subr.mxu0 0.0
      %2769 = vmatpush1.msra.mxu0 0.0
      %2770 = vmatprep.subr.mxu0 0.0
      %2771 = vmatpush1.msra.mxu0 0.0
      %2772 = vmatprep.subr.mxu0 0.0
      %2773 = vmatpush1.msra.mxu0 0.0
      %2774 = vmatprep.subr.mxu0 0.0
      %2775 = vmatpush1.msra.mxu0 0.0
      %2776 = vmatprep.subr.mxu0 0.0
      %2777 = vmatpush1.msra.mxu0 %v2744
      %2778 = vmatprep.subr.mxu0 0.0
      %2779 = vmatpush2.msra.mxu0 0.0
      %2780 = vmatprep.subr.mxu0 0.0
      %2781 = vmatpush2.msra.mxu0 0.0
      %2782 = vmatprep.subr.mxu0 0.0
      %2783 = vmatpush2.msra.mxu0 0.0
      %2784 = vmatprep.subr.mxu0 0.0
      %2785 = vmatpush2.msra.mxu0 0.0
      %2786 = vmatprep.subr.mxu0 0.0
      %2787 = vmatpush2.msra.mxu0 0.0
      %2788 = vmatprep.subr.mxu0 0.0
      %2789 = vmatpush2.msra.mxu0 0.0
      %2790 = vmatprep.subr.mxu0 0.0
      %2791 = vmatpush2.msra.mxu0 0.0
      %2792 = vmatprep.subr.mxu0 0.0
      %2793 = vmatpush2.msra.mxu0 0.0
      %2794 = vmatprep.subr.mxu0 0.0
      %2795 = vmatpush2.msra.mxu0 0.0
      %2796 = vmatprep.subr.mxu0 0.0
      %2797 = vmatpush2.msra.mxu0 0.0
      %2798 = vmatprep.subr.mxu0 0.0
      %2799 = vmatpush2.msra.mxu0 0.0
      %2800 = vmatprep.subr.mxu0 0.0
      %2801 = vmatpush2.msra.mxu0 0.0
      %2802 = vmatprep.subr.mxu0 0.0
      %2803 = vmatpush2.msra.mxu0 0.0
      %2804 = vmatprep.subr.mxu0 0.0
      %2805 = vmatpush2.msra.mxu0 0.0
      %2806 = vmatprep.subr.mxu0 0.0
      %2807 = vmatpush2.msra.mxu0 0.0
      %2808 = vmatprep.subr.mxu0 0.0
      %2809 = vmatpush2.msra.mxu0 0.0
      %2810 = vmatprep.mubr.f32.mxu0 0.0
      %2811 = vmatmul.mubr.f32.gmra.mxu0 %v2726
      %v2812 = vpop.f32.mrf.mxu0
      %v2813 = vadd.f32 0.0, %v2812
      %v2814 = vpop.f32.mrf.mxu0
      %2815 = vmatprep.mubr.f32.mxu0 0.0
      %2816 = vmatmul.mubr.f32.gmra.mxu0 %v2729
      %v2817 = vpop.f32.mrf.mxu0
      %v2818 = vadd.f32 0.0, %v2817
      %v2819 = vpop.f32.mrf.mxu0
      %2820 = vmatprep.mubr.f32.mxu0 0.0
      %2821 = vmatmul.mubr.f32.gmra.mxu0 %v2732
      %v2822 = vpop.f32.mrf.mxu0
      %v2823 = vadd.f32 0.0, %v2822
      %v2824 = vpop.f32.mrf.mxu0
      %2825 = vmatprep.mubr.f32.mxu0 0.0
      %2826 = vmatmul.mubr.f32.gmra.mxu0 %v2735
      %v2827 = vpop.f32.mrf.mxu0
      %v2828 = vadd.f32 0.0, %v2827
      %v2829 = vpop.f32.mrf.mxu0
      %2830 = vmatprep.mubr.f32.mxu0 0.0
      %2831 = vmatmul.mubr.f32.gmra.mxu0 %v2738
      %v2832 = vpop.f32.mrf.mxu0
      %v2833 = vadd.f32 0.0, %v2832
      %v2834 = vpop.f32.mrf.mxu0
      %2835 = vmatprep.mubr.f32.mxu0 0.0
      %2836 = vmatmul.mubr.f32.gmra.mxu0 %v2741
      %v2837 = vpop.f32.mrf.mxu0
      %v2838 = vadd.f32 0.0, %v2837
      %v2839 = vpop.f32.mrf.mxu0
      %2840 = vdwg.mxu0
      %v2841 = vadd.f32 %v2711, %v2813
      %v2842 = vadd.f32 %v2712, %v2818
      %v2843 = vadd.f32 %v2713, %v2823
      %v2844 = vadd.f32 %v2714, %v2828
      %v2845 = vadd.f32 %v2715, %v2833
      %v2846 = vadd.f32 %v2716, %v2838
      %s2847 = scalar_lea.vmem %s345, %s371
      %v2848 = vld [vmem:[%s2847] sm:$0xff]
      %v2849 = vld [vmem:[%s2847 + $0x8] sm:$0xff]
      %v2850 = vld [vmem:[%s2847 + $0x10] sm:$0xff]
      %v2851 = vld [vmem:[%s2847 + $0x18] sm:$0xff]
      %v2852 = vld [vmem:[%s2847 + $0x20] sm:$0xff]
      %v2853 = vld [vmem:[%s2847 + $0x28] sm:$0xff]
      %s2854 = scalar_lea.vmem %s3, 76
      %v2855 = vld [vmem:[%s2854] sm:$0xf]
      %v2857 = vsel %vm381, %v2848, 0
      %v2860 = vsel %vm381, %v2849, 0
      %v2863 = vsel %vm381, %v2850, 0
      %v2866 = vsel %vm381, %v2851, 0
      %v2869 = vsel %vm381, %v2852, 0
      %v2872 = vsel %vm381, %v2853, 0
      %v2875 = vsel %vm400, %v2855, 0
      %2877 = vmatprep.subr.mxu0 0.0
      %2878 = vmatpush1.msra.mxu0 0.0
      %2879 = vmatprep.subr.mxu0 0.0
      %2880 = vmatpush1.msra.mxu0 0.0
      %2881 = vmatprep.subr.mxu0 0.0
      %2882 = vmatpush1.msra.mxu0 0.0
      %2883 = vmatprep.subr.mxu0 0.0
      %2884 = vmatpush1.msra.mxu0 0.0
      %2885 = vmatprep.subr.mxu0 0.0
      %2886 = vmatpush1.msra.mxu0 0.0
      %2887 = vmatprep.subr.mxu0 0.0
      %2888 = vmatpush1.msra.mxu0 0.0
      %2889 = vmatprep.subr.mxu0 0.0
      %2890 = vmatpush1.msra.mxu0 0.0
      %2891 = vmatprep.subr.mxu0 0.0
      %2892 = vmatpush1.msra.mxu0 0.0
      %2893 = vmatprep.subr.mxu0 0.0
      %2894 = vmatpush1.msra.mxu0 0.0
      %2895 = vmatprep.subr.mxu0 0.0
      %2896 = vmatpush1.msra.mxu0 0.0
      %2897 = vmatprep.subr.mxu0 0.0
      %2898 = vmatpush1.msra.mxu0 0.0
      %2899 = vmatprep.subr.mxu0 0.0
      %2900 = vmatpush1.msra.mxu0 0.0
      %2901 = vmatprep.subr.mxu0 0.0
      %2902 = vmatpush1.msra.mxu0 0.0
      %2903 = vmatprep.subr.mxu0 0.0
      %2904 = vmatpush1.msra.mxu0 0.0
      %2905 = vmatprep.subr.mxu0 0.0
      %2906 = vmatpush1.msra.mxu0 0.0
      %2907 = vmatprep.subr.mxu0 0.0
      %2908 = vmatpush1.msra.mxu0 %v2875
      %2909 = vmatprep.subr.mxu0 0.0
      %2910 = vmatpush2.msra.mxu0 0.0
      %2911 = vmatprep.subr.mxu0 0.0
      %2912 = vmatpush2.msra.mxu0 0.0
      %2913 = vmatprep.subr.mxu0 0.0
      %2914 = vmatpush2.msra.mxu0 0.0
      %2915 = vmatprep.subr.mxu0 0.0
      %2916 = vmatpush2.msra.mxu0 0.0
      %2917 = vmatprep.subr.mxu0 0.0
      %2918 = vmatpush2.msra.mxu0 0.0
      %2919 = vmatprep.subr.mxu0 0.0
      %2920 = vmatpush2.msra.mxu0 0.0
      %2921 = vmatprep.subr.mxu0 0.0
      %2922 = vmatpush2.msra.mxu0 0.0
      %2923 = vmatprep.subr.mxu0 0.0
      %2924 = vmatpush2.msra.mxu0 0.0
      %2925 = vmatprep.subr.mxu0 0.0
      %2926 = vmatpush2.msra.mxu0 0.0
      %2927 = vmatprep.subr.mxu0 0.0
      %2928 = vmatpush2.msra.mxu0 0.0
      %2929 = vmatprep.subr.mxu0 0.0
      %2930 = vmatpush2.msra.mxu0 0.0
      %2931 = vmatprep.subr.mxu0 0.0
      %2932 = vmatpush2.msra.mxu0 0.0
      %2933 = vmatprep.subr.mxu0 0.0
      %2934 = vmatpush2.msra.mxu0 0.0
      %2935 = vmatprep.subr.mxu0 0.0
      %2936 = vmatpush2.msra.mxu0 0.0
      %2937 = vmatprep.subr.mxu0 0.0
      %2938 = vmatpush2.msra.mxu0 0.0
      %2939 = vmatprep.subr.mxu0 0.0
      %2940 = vmatpush2.msra.mxu0 0.0
      %2941 = vmatprep.mubr.f32.mxu0 0.0
      %2942 = vmatmul.mubr.f32.gmra.mxu0 %v2857
      %v2943 = vpop.f32.mrf.mxu0
      %v2944 = vadd.f32 0.0, %v2943
      %v2945 = vpop.f32.mrf.mxu0
      %2946 = vmatprep.mubr.f32.mxu0 0.0
      %2947 = vmatmul.mubr.f32.gmra.mxu0 %v2860
      %v2948 = vpop.f32.mrf.mxu0
      %v2949 = vadd.f32 0.0, %v2948
      %v2950 = vpop.f32.mrf.mxu0
      %2951 = vmatprep.mubr.f32.mxu0 0.0
      %2952 = vmatmul.mubr.f32.gmra.mxu0 %v2863
      %v2953 = vpop.f32.mrf.mxu0
      %v2954 = vadd.f32 0.0, %v2953
      %v2955 = vpop.f32.mrf.mxu0
      %2956 = vmatprep.mubr.f32.mxu0 0.0
      %2957 = vmatmul.mubr.f32.gmra.mxu0 %v2866
      %v2958 = vpop.f32.mrf.mxu0
      %v2959 = vadd.f32 0.0, %v2958
      %v2960 = vpop.f32.mrf.mxu0
      %2961 = vmatprep.mubr.f32.mxu0 0.0
      %2962 = vmatmul.mubr.f32.gmra.mxu0 %v2869
      %v2963 = vpop.f32.mrf.mxu0
      %v2964 = vadd.f32 0.0, %v2963
      %v2965 = vpop.f32.mrf.mxu0
      %2966 = vmatprep.mubr.f32.mxu0 0.0
      %2967 = vmatmul.mubr.f32.gmra.mxu0 %v2872
      %v2968 = vpop.f32.mrf.mxu0
      %v2969 = vadd.f32 0.0, %v2968
      %v2970 = vpop.f32.mrf.mxu0
      %2971 = vdwg.mxu0
      %v2972 = vadd.f32 %v2841, %v2944
      %v2973 = vadd.f32 %v2842, %v2949
      %v2974 = vadd.f32 %v2843, %v2954
      %v2975 = vadd.f32 %v2844, %v2959
      %v2976 = vadd.f32 %v2845, %v2964
      %v2977 = vadd.f32 %v2846, %v2969
      %s2978 = scalar_lea.vmem %s345, %s615
      %v2979 = vld [vmem:[%s2978] sm:$0xff]
      %v2980 = vld [vmem:[%s2978 + $0x8] sm:$0xff]
      %v2981 = vld [vmem:[%s2978 + $0x10] sm:$0xff]
      %v2982 = vld [vmem:[%s2978 + $0x18] sm:$0xff]
      %v2983 = vld [vmem:[%s2978 + $0x20] sm:$0xff]
      %v2984 = vld [vmem:[%s2978 + $0x28] sm:$0xff]
      %s2985 = scalar_lea.vmem %s3, 80
      %v2986 = vld [vmem:[%s2985] sm:$0xf]
      %v2988 = vsel %vm381, %v2979, 0
      %v2991 = vsel %vm381, %v2980, 0
      %v2994 = vsel %vm381, %v2981, 0
      %v2997 = vsel %vm381, %v2982, 0
      %v3000 = vsel %vm381, %v2983, 0
      %v3003 = vsel %vm381, %v2984, 0
      %v3006 = vsel %vm400, %v2986, 0
      %3008 = vmatprep.subr.mxu0 0.0
      %3009 = vmatpush1.msra.mxu0 0.0
      %3010 = vmatprep.subr.mxu0 0.0
      %3011 = vmatpush1.msra.mxu0 0.0
      %3012 = vmatprep.subr.mxu0 0.0
      %3013 = vmatpush1.msra.mxu0 0.0
      %3014 = vmatprep.subr.mxu0 0.0
      %3015 = vmatpush1.msra.mxu0 0.0
      %3016 = vmatprep.subr.mxu0 0.0
      %3017 = vmatpush1.msra.mxu0 0.0
      %3018 = vmatprep.subr.mxu0 0.0
      %3019 = vmatpush1.msra.mxu0 0.0
      %3020 = vmatprep.subr.mxu0 0.0
      %3021 = vmatpush1.msra.mxu0 0.0
      %3022 = vmatprep.subr.mxu0 0.0
      %3023 = vmatpush1.msra.mxu0 0.0
      %3024 = vmatprep.subr.mxu0 0.0
      %3025 = vmatpush1.msra.mxu0 0.0
      %3026 = vmatprep.subr.mxu0 0.0
      %3027 = vmatpush1.msra.mxu0 0.0
      %3028 = vmatprep.subr.mxu0 0.0
      %3029 = vmatpush1.msra.mxu0 0.0
      %3030 = vmatprep.subr.mxu0 0.0
      %3031 = vmatpush1.msra.mxu0 0.0
      %3032 = vmatprep.subr.mxu0 0.0
      %3033 = vmatpush1.msra.mxu0 0.0
      %3034 = vmatprep.subr.mxu0 0.0
      %3035 = vmatpush1.msra.mxu0 0.0
      %3036 = vmatprep.subr.mxu0 0.0
      %3037 = vmatpush1.msra.mxu0 0.0
      %3038 = vmatprep.subr.mxu0 0.0
      %3039 = vmatpush1.msra.mxu0 %v3006
      %3040 = vmatprep.subr.mxu0 0.0
      %3041 = vmatpush2.msra.mxu0 0.0
      %3042 = vmatprep.subr.mxu0 0.0
      %3043 = vmatpush2.msra.mxu0 0.0
      %3044 = vmatprep.subr.mxu0 0.0
      %3045 = vmatpush2.msra.mxu0 0.0
      %3046 = vmatprep.subr.mxu0 0.0
      %3047 = vmatpush2.msra.mxu0 0.0
      %3048 = vmatprep.subr.mxu0 0.0
      %3049 = vmatpush2.msra.mxu0 0.0
      %3050 = vmatprep.subr.mxu0 0.0
      %3051 = vmatpush2.msra.mxu0 0.0
      %3052 = vmatprep.subr.mxu0 0.0
      %3053 = vmatpush2.msra.mxu0 0.0
      %3054 = vmatprep.subr.mxu0 0.0
      %3055 = vmatpush2.msra.mxu0 0.0
      %3056 = vmatprep.subr.mxu0 0.0
      %3057 = vmatpush2.msra.mxu0 0.0
      %3058 = vmatprep.subr.mxu0 0.0
      %3059 = vmatpush2.msra.mxu0 0.0
      %3060 = vmatprep.subr.mxu0 0.0
      %3061 = vmatpush2.msra.mxu0 0.0
      %3062 = vmatprep.subr.mxu0 0.0
      %3063 = vmatpush2.msra.mxu0 0.0
      %3064 = vmatprep.subr.mxu0 0.0
      %3065 = vmatpush2.msra.mxu0 0.0
      %3066 = vmatprep.subr.mxu0 0.0
      %3067 = vmatpush2.msra.mxu0 0.0
      %3068 = vmatprep.subr.mxu0 0.0
      %3069 = vmatpush2.msra.mxu0 0.0
      %3070 = vmatprep.subr.mxu0 0.0
      %3071 = vmatpush2.msra.mxu0 0.0
      %3072 = vmatprep.mubr.f32.mxu0 0.0
      %3073 = vmatmul.mubr.f32.gmra.mxu0 %v2988
      %v3074 = vpop.f32.mrf.mxu0
      %v3075 = vadd.f32 0.0, %v3074
      %v3076 = vpop.f32.mrf.mxu0
      %3077 = vmatprep.mubr.f32.mxu0 0.0
      %3078 = vmatmul.mubr.f32.gmra.mxu0 %v2991
      %v3079 = vpop.f32.mrf.mxu0
      %v3080 = vadd.f32 0.0, %v3079
      %v3081 = vpop.f32.mrf.mxu0
      %3082 = vmatprep.mubr.f32.mxu0 0.0
      %3083 = vmatmul.mubr.f32.gmra.mxu0 %v2994
      %v3084 = vpop.f32.mrf.mxu0
      %v3085 = vadd.f32 0.0, %v3084
      %v3086 = vpop.f32.mrf.mxu0
      %3087 = vmatprep.mubr.f32.mxu0 0.0
      %3088 = vmatmul.mubr.f32.gmra.mxu0 %v2997
      %v3089 = vpop.f32.mrf.mxu0
      %v3090 = vadd.f32 0.0, %v3089
      %v3091 = vpop.f32.mrf.mxu0
      %3092 = vmatprep.mubr.f32.mxu0 0.0
      %3093 = vmatmul.mubr.f32.gmra.mxu0 %v3000
      %v3094 = vpop.f32.mrf.mxu0
      %v3095 = vadd.f32 0.0, %v3094
      %v3096 = vpop.f32.mrf.mxu0
      %3097 = vmatprep.mubr.f32.mxu0 0.0
      %3098 = vmatmul.mubr.f32.gmra.mxu0 %v3003
      %v3099 = vpop.f32.mrf.mxu0
      %v3100 = vadd.f32 0.0, %v3099
      %v3101 = vpop.f32.mrf.mxu0
      %3102 = vdwg.mxu0
      %v3103 = vadd.f32 %v2972, %v3075
      %v3104 = vadd.f32 %v2973, %v3080
      %v3105 = vadd.f32 %v2974, %v3085
      %v3106 = vadd.f32 %v2975, %v3090
      %v3107 = vadd.f32 %v2976, %v3095
      %v3108 = vadd.f32 %v2977, %v3100
      %s3109 = scalar_lea.vmem %s345, %s747
      %v3110 = vld [vmem:[%s3109] sm:$0xff]
      %v3111 = vld [vmem:[%s3109 + $0x8] sm:$0xff]
      %v3112 = vld [vmem:[%s3109 + $0x10] sm:$0xff]
      %v3113 = vld [vmem:[%s3109 + $0x18] sm:$0xff]
      %v3114 = vld [vmem:[%s3109 + $0x20] sm:$0xff]
      %v3115 = vld [vmem:[%s3109 + $0x28] sm:$0xff]
      %s3116 = scalar_lea.vmem %s3, 84
      %v3117 = vld [vmem:[%s3116] sm:$0xf]
      %v3119 = vsel %vm381, %v3110, 0
      %v3122 = vsel %vm381, %v3111, 0
      %v3125 = vsel %vm381, %v3112, 0
      %v3128 = vsel %vm381, %v3113, 0
      %v3131 = vsel %vm381, %v3114, 0
      %v3134 = vsel %vm381, %v3115, 0
      %v3137 = vsel %vm400, %v3117, 0
      %3139 = vmatprep.subr.mxu0 0.0
      %3140 = vmatpush1.msra.mxu0 0.0
      %3141 = vmatprep.subr.mxu0 0.0
      %3142 = vmatpush1.msra.mxu0 0.0
      %3143 = vmatprep.subr.mxu0 0.0
      %3144 = vmatpush1.msra.mxu0 0.0
      %3145 = vmatprep.subr.mxu0 0.0
      %3146 = vmatpush1.msra.mxu0 0.0
      %3147 = vmatprep.subr.mxu0 0.0
      %3148 = vmatpush1.msra.mxu0 0.0
      %3149 = vmatprep.subr.mxu0 0.0
      %3150 = vmatpush1.msra.mxu0 0.0
      %3151 = vmatprep.subr.mxu0 0.0
      %3152 = vmatpush1.msra.mxu0 0.0
      %3153 = vmatprep.subr.mxu0 0.0
      %3154 = vmatpush1.msra.mxu0 0.0
      %3155 = vmatprep.subr.mxu0 0.0
      %3156 = vmatpush1.msra.mxu0 0.0
      %3157 = vmatprep.subr.mxu0 0.0
      %3158 = vmatpush1.msra.mxu0 0.0
      %3159 = vmatprep.subr.mxu0 0.0
      %3160 = vmatpush1.msra.mxu0 0.0
      %3161 = vmatprep.subr.mxu0 0.0
      %3162 = vmatpush1.msra.mxu0 0.0
      %3163 = vmatprep.subr.mxu0 0.0
      %3164 = vmatpush1.msra.mxu0 0.0
      %3165 = vmatprep.subr.mxu0 0.0
      %3166 = vmatpush1.msra.mxu0 0.0
      %3167 = vmatprep.subr.mxu0 0.0
      %3168 = vmatpush1.msra.mxu0 0.0
      %3169 = vmatprep.subr.mxu0 0.0
      %3170 = vmatpush1.msra.mxu0 %v3137
      %3171 = vmatprep.subr.mxu0 0.0
      %3172 = vmatpush2.msra.mxu0 0.0
      %3173 = vmatprep.subr.mxu0 0.0
      %3174 = vmatpush2.msra.mxu0 0.0
      %3175 = vmatprep.subr.mxu0 0.0
      %3176 = vmatpush2.msra.mxu0 0.0
      %3177 = vmatprep.subr.mxu0 0.0
      %3178 = vmatpush2.msra.mxu0 0.0
      %3179 = vmatprep.subr.mxu0 0.0
      %3180 = vmatpush2.msra.mxu0 0.0
      %3181 = vmatprep.subr.mxu0 0.0
      %3182 = vmatpush2.msra.mxu0 0.0
      %3183 = vmatprep.subr.mxu0 0.0
      %3184 = vmatpush2.msra.mxu0 0.0
      %3185 = vmatprep.subr.mxu0 0.0
      %3186 = vmatpush2.msra.mxu0 0.0
      %3187 = vmatprep.subr.mxu0 0.0
      %3188 = vmatpush2.msra.mxu0 0.0
      %3189 = vmatprep.subr.mxu0 0.0
      %3190 = vmatpush2.msra.mxu0 0.0
      %3191 = vmatprep.subr.mxu0 0.0
      %3192 = vmatpush2.msra.mxu0 0.0
      %3193 = vmatprep.subr.mxu0 0.0
      %3194 = vmatpush2.msra.mxu0 0.0
      %3195 = vmatprep.subr.mxu0 0.0
      %3196 = vmatpush2.msra.mxu0 0.0
      %3197 = vmatprep.subr.mxu0 0.0
      %3198 = vmatpush2.msra.mxu0 0.0
      %3199 = vmatprep.subr.mxu0 0.0
      %3200 = vmatpush2.msra.mxu0 0.0
      %3201 = vmatprep.subr.mxu0 0.0
      %3202 = vmatpush2.msra.mxu0 0.0
      %3203 = vmatprep.mubr.f32.mxu0 0.0
      %3204 = vmatmul.mubr.f32.gmra.mxu0 %v3119
      %v3205 = vpop.f32.mrf.mxu0
      %v3206 = vadd.f32 0.0, %v3205
      %v3207 = vpop.f32.mrf.mxu0
      %3208 = vmatprep.mubr.f32.mxu0 0.0
      %3209 = vmatmul.mubr.f32.gmra.mxu0 %v3122
      %v3210 = vpop.f32.mrf.mxu0
      %v3211 = vadd.f32 0.0, %v3210
      %v3212 = vpop.f32.mrf.mxu0
      %3213 = vmatprep.mubr.f32.mxu0 0.0
      %3214 = vmatmul.mubr.f32.gmra.mxu0 %v3125
      %v3215 = vpop.f32.mrf.mxu0
      %v3216 = vadd.f32 0.0, %v3215
      %v3217 = vpop.f32.mrf.mxu0
      %3218 = vmatprep.mubr.f32.mxu0 0.0
      %3219 = vmatmul.mubr.f32.gmra.mxu0 %v3128
      %v3220 = vpop.f32.mrf.mxu0
      %v3221 = vadd.f32 0.0, %v3220
      %v3222 = vpop.f32.mrf.mxu0
      %3223 = vmatprep.mubr.f32.mxu0 0.0
      %3224 = vmatmul.mubr.f32.gmra.mxu0 %v3131
      %v3225 = vpop.f32.mrf.mxu0
      %v3226 = vadd.f32 0.0, %v3225
      %v3227 = vpop.f32.mrf.mxu0
      %3228 = vmatprep.mubr.f32.mxu0 0.0
      %3229 = vmatmul.mubr.f32.gmra.mxu0 %v3134
      %v3230 = vpop.f32.mrf.mxu0
      %v3231 = vadd.f32 0.0, %v3230
      %v3232 = vpop.f32.mrf.mxu0
      %3233 = vdwg.mxu0
      %v3234 = vadd.f32 %v3103, %v3206
      %v3235 = vadd.f32 %v3104, %v3211
      %v3236 = vadd.f32 %v3105, %v3216
      %v3237 = vadd.f32 %v3106, %v3221
      %v3238 = vadd.f32 %v3107, %v3226
      %v3239 = vadd.f32 %v3108, %v3231
      %s3240 = scalar_lea.vmem %s345, %s879
      %v3241 = vld [vmem:[%s3240] sm:$0xff]
      %v3242 = vld [vmem:[%s3240 + $0x8] sm:$0xff]
      %v3243 = vld [vmem:[%s3240 + $0x10] sm:$0xff]
      %v3244 = vld [vmem:[%s3240 + $0x18] sm:$0xff]
      %v3245 = vld [vmem:[%s3240 + $0x20] sm:$0xff]
      %v3246 = vld [vmem:[%s3240 + $0x28] sm:$0xff]
      %s3247 = scalar_lea.vmem %s3, 88
      %v3248 = vld [vmem:[%s3247] sm:$0xf]
      %v3250 = vsel %vm381, %v3241, 0
      %v3253 = vsel %vm381, %v3242, 0
      %v3256 = vsel %vm381, %v3243, 0
      %v3259 = vsel %vm381, %v3244, 0
      %v3262 = vsel %vm381, %v3245, 0
      %v3265 = vsel %vm381, %v3246, 0
      %v3268 = vsel %vm400, %v3248, 0
      %3270 = vmatprep.subr.mxu0 0.0
      %3271 = vmatpush1.msra.mxu0 0.0
      %3272 = vmatprep.subr.mxu0 0.0
      %3273 = vmatpush1.msra.mxu0 0.0
      %3274 = vmatprep.subr.mxu0 0.0
      %3275 = vmatpush1.msra.mxu0 0.0
      %3276 = vmatprep.subr.mxu0 0.0
      %3277 = vmatpush1.msra.mxu0 0.0
      %3278 = vmatprep.subr.mxu0 0.0
      %3279 = vmatpush1.msra.mxu0 0.0
      %3280 = vmatprep.subr.mxu0 0.0
      %3281 = vmatpush1.msra.mxu0 0.0
      %3282 = vmatprep.subr.mxu0 0.0
      %3283 = vmatpush1.msra.mxu0 0.0
      %3284 = vmatprep.subr.mxu0 0.0
      %3285 = vmatpush1.msra.mxu0 0.0
      %3286 = vmatprep.subr.mxu0 0.0
      %3287 = vmatpush1.msra.mxu0 0.0
      %3288 = vmatprep.subr.mxu0 0.0
      %3289 = vmatpush1.msra.mxu0 0.0
      %3290 = vmatprep.subr.mxu0 0.0
      %3291 = vmatpush1.msra.mxu0 0.0
      %3292 = vmatprep.subr.mxu0 0.0
      %3293 = vmatpush1.msra.mxu0 0.0
      %3294 = vmatprep.subr.mxu0 0.0
      %3295 = vmatpush1.msra.mxu0 0.0
      %3296 = vmatprep.subr.mxu0 0.0
      %3297 = vmatpush1.msra.mxu0 0.0
      %3298 = vmatprep.subr.mxu0 0.0
      %3299 = vmatpush1.msra.mxu0 0.0
      %3300 = vmatprep.subr.mxu0 0.0
      %3301 = vmatpush1.msra.mxu0 %v3268
      %3302 = vmatprep.subr.mxu0 0.0
      %3303 = vmatpush2.msra.mxu0 0.0
      %3304 = vmatprep.subr.mxu0 0.0
      %3305 = vmatpush2.msra.mxu0 0.0
      %3306 = vmatprep.subr.mxu0 0.0
      %3307 = vmatpush2.msra.mxu0 0.0
      %3308 = vmatprep.subr.mxu0 0.0
      %3309 = vmatpush2.msra.mxu0 0.0
      %3310 = vmatprep.subr.mxu0 0.0
      %3311 = vmatpush2.msra.mxu0 0.0
      %3312 = vmatprep.subr.mxu0 0.0
      %3313 = vmatpush2.msra.mxu0 0.0
      %3314 = vmatprep.subr.mxu0 0.0
      %3315 = vmatpush2.msra.mxu0 0.0
      %3316 = vmatprep.subr.mxu0 0.0
      %3317 = vmatpush2.msra.mxu0 0.0
      %3318 = vmatprep.subr.mxu0 0.0
      %3319 = vmatpush2.msra.mxu0 0.0
      %3320 = vmatprep.subr.mxu0 0.0
      %3321 = vmatpush2.msra.mxu0 0.0
      %3322 = vmatprep.subr.mxu0 0.0
      %3323 = vmatpush2.msra.mxu0 0.0
      %3324 = vmatprep.subr.mxu0 0.0
      %3325 = vmatpush2.msra.mxu0 0.0
      %3326 = vmatprep.subr.mxu0 0.0
      %3327 = vmatpush2.msra.mxu0 0.0
      %3328 = vmatprep.subr.mxu0 0.0
      %3329 = vmatpush2.msra.mxu0 0.0
      %3330 = vmatprep.subr.mxu0 0.0
      %3331 = vmatpush2.msra.mxu0 0.0
      %3332 = vmatprep.subr.mxu0 0.0
      %3333 = vmatpush2.msra.mxu0 0.0
      %3334 = vmatprep.mubr.f32.mxu0 0.0
      %3335 = vmatmul.mubr.f32.gmra.mxu0 %v3250
      %v3336 = vpop.f32.mrf.mxu0
      %v3337 = vadd.f32 0.0, %v3336
      %v3338 = vpop.f32.mrf.mxu0
      %3339 = vmatprep.mubr.f32.mxu0 0.0
      %3340 = vmatmul.mubr.f32.gmra.mxu0 %v3253
      %v3341 = vpop.f32.mrf.mxu0
      %v3342 = vadd.f32 0.0, %v3341
      %v3343 = vpop.f32.mrf.mxu0
      %3344 = vmatprep.mubr.f32.mxu0 0.0
      %3345 = vmatmul.mubr.f32.gmra.mxu0 %v3256
      %v3346 = vpop.f32.mrf.mxu0
      %v3347 = vadd.f32 0.0, %v3346
      %v3348 = vpop.f32.mrf.mxu0
      %3349 = vmatprep.mubr.f32.mxu0 0.0
      %3350 = vmatmul.mubr.f32.gmra.mxu0 %v3259
      %v3351 = vpop.f32.mrf.mxu0
      %v3352 = vadd.f32 0.0, %v3351
      %v3353 = vpop.f32.mrf.mxu0
      %3354 = vmatprep.mubr.f32.mxu0 0.0
      %3355 = vmatmul.mubr.f32.gmra.mxu0 %v3262
      %v3356 = vpop.f32.mrf.mxu0
      %v3357 = vadd.f32 0.0, %v3356
      %v3358 = vpop.f32.mrf.mxu0
      %3359 = vmatprep.mubr.f32.mxu0 0.0
      %3360 = vmatmul.mubr.f32.gmra.mxu0 %v3265
      %v3361 = vpop.f32.mrf.mxu0
      %v3362 = vadd.f32 0.0, %v3361
      %v3363 = vpop.f32.mrf.mxu0
      %3364 = vdwg.mxu0
      %v3365 = vadd.f32 %v3234, %v3337
      %v3366 = vadd.f32 %v3235, %v3342
      %v3367 = vadd.f32 %v3236, %v3347
      %v3368 = vadd.f32 %v3237, %v3352
      %v3369 = vadd.f32 %v3238, %v3357
      %v3370 = vadd.f32 %v3239, %v3362
      %s3371 = scalar_lea.vmem %s345, %s1011
      %v3372 = vld [vmem:[%s3371] sm:$0xff]
      %v3373 = vld [vmem:[%s3371 + $0x8] sm:$0xff]
      %v3374 = vld [vmem:[%s3371 + $0x10] sm:$0xff]
      %v3375 = vld [vmem:[%s3371 + $0x18] sm:$0xff]
      %v3376 = vld [vmem:[%s3371 + $0x20] sm:$0xff]
      %v3377 = vld [vmem:[%s3371 + $0x28] sm:$0xff]
      %s3378 = scalar_lea.vmem %s3, 92
      %v3379 = vld [vmem:[%s3378] sm:$0xf]
      %v3381 = vsel %vm381, %v3372, 0
      %v3384 = vsel %vm381, %v3373, 0
      %v3387 = vsel %vm381, %v3374, 0
      %v3390 = vsel %vm381, %v3375, 0
      %v3393 = vsel %vm381, %v3376, 0
      %v3396 = vsel %vm381, %v3377, 0
      %v3399 = vsel %vm400, %v3379, 0
      %3401 = vmatprep.subr.mxu0 0.0
      %3402 = vmatpush1.msra.mxu0 0.0
      %3403 = vmatprep.subr.mxu0 0.0
      %3404 = vmatpush1.msra.mxu0 0.0
      %3405 = vmatprep.subr.mxu0 0.0
      %3406 = vmatpush1.msra.mxu0 0.0
      %3407 = vmatprep.subr.mxu0 0.0
      %3408 = vmatpush1.msra.mxu0 0.0
      %3409 = vmatprep.subr.mxu0 0.0
      %3410 = vmatpush1.msra.mxu0 0.0
      %3411 = vmatprep.subr.mxu0 0.0
      %3412 = vmatpush1.msra.mxu0 0.0
      %3413 = vmatprep.subr.mxu0 0.0
      %3414 = vmatpush1.msra.mxu0 0.0
      %3415 = vmatprep.subr.mxu0 0.0
      %3416 = vmatpush1.msra.mxu0 0.0
      %3417 = vmatprep.subr.mxu0 0.0
      %3418 = vmatpush1.msra.mxu0 0.0
      %3419 = vmatprep.subr.mxu0 0.0
      %3420 = vmatpush1.msra.mxu0 0.0
      %3421 = vmatprep.subr.mxu0 0.0
      %3422 = vmatpush1.msra.mxu0 0.0
      %3423 = vmatprep.subr.mxu0 0.0
      %3424 = vmatpush1.msra.mxu0 0.0
      %3425 = vmatprep.subr.mxu0 0.0
      %3426 = vmatpush1.msra.mxu0 0.0
      %3427 = vmatprep.subr.mxu0 0.0
      %3428 = vmatpush1.msra.mxu0 0.0
      %3429 = vmatprep.subr.mxu0 0.0
      %3430 = vmatpush1.msra.mxu0 0.0
      %3431 = vmatprep.subr.mxu0 0.0
      %3432 = vmatpush1.msra.mxu0 %v3399
      %3433 = vmatprep.subr.mxu0 0.0
      %3434 = vmatpush2.msra.mxu0 0.0
      %3435 = vmatprep.subr.mxu0 0.0
      %3436 = vmatpush2.msra.mxu0 0.0
      %3437 = vmatprep.subr.mxu0 0.0
      %3438 = vmatpush2.msra.mxu0 0.0
      %3439 = vmatprep.subr.mxu0 0.0
      %3440 = vmatpush2.msra.mxu0 0.0
      %3441 = vmatprep.subr.mxu0 0.0
      %3442 = vmatpush2.msra.mxu0 0.0
      %3443 = vmatprep.subr.mxu0 0.0
      %3444 = vmatpush2.msra.mxu0 0.0
      %3445 = vmatprep.subr.mxu0 0.0
      %3446 = vmatpush2.msra.mxu0 0.0
      %3447 = vmatprep.subr.mxu0 0.0
      %3448 = vmatpush2.msra.mxu0 0.0
      %3449 = vmatprep.subr.mxu0 0.0
      %3450 = vmatpush2.msra.mxu0 0.0
      %3451 = vmatprep.subr.mxu0 0.0
      %3452 = vmatpush2.msra.mxu0 0.0
      %3453 = vmatprep.subr.mxu0 0.0
      %3454 = vmatpush2.msra.mxu0 0.0
      %3455 = vmatprep.subr.mxu0 0.0
      %3456 = vmatpush2.msra.mxu0 0.0
      %3457 = vmatprep.subr.mxu0 0.0
      %3458 = vmatpush2.msra.mxu0 0.0
      %3459 = vmatprep.subr.mxu0 0.0
      %3460 = vmatpush2.msra.mxu0 0.0
      %3461 = vmatprep.subr.mxu0 0.0
      %3462 = vmatpush2.msra.mxu0 0.0
      %3463 = vmatprep.subr.mxu0 0.0
      %3464 = vmatpush2.msra.mxu0 0.0
      %3465 = vmatprep.mubr.f32.mxu0 0.0
      %3466 = vmatmul.mubr.f32.gmra.mxu0 %v3381
      %v3467 = vpop.f32.mrf.mxu0
      %v3468 = vadd.f32 0.0, %v3467
      %v3469 = vpop.f32.mrf.mxu0
      %3470 = vmatprep.mubr.f32.mxu0 0.0
      %3471 = vmatmul.mubr.f32.gmra.mxu0 %v3384
      %v3472 = vpop.f32.mrf.mxu0
      %v3473 = vadd.f32 0.0, %v3472
      %v3474 = vpop.f32.mrf.mxu0
      %3475 = vmatprep.mubr.f32.mxu0 0.0
      %3476 = vmatmul.mubr.f32.gmra.mxu0 %v3387
      %v3477 = vpop.f32.mrf.mxu0
      %v3478 = vadd.f32 0.0, %v3477
      %v3479 = vpop.f32.mrf.mxu0
      %3480 = vmatprep.mubr.f32.mxu0 0.0
      %3481 = vmatmul.mubr.f32.gmra.mxu0 %v3390
      %v3482 = vpop.f32.mrf.mxu0
      %v3483 = vadd.f32 0.0, %v3482
      %v3484 = vpop.f32.mrf.mxu0
      %3485 = vmatprep.mubr.f32.mxu0 0.0
      %3486 = vmatmul.mubr.f32.gmra.mxu0 %v3393
      %v3487 = vpop.f32.mrf.mxu0
      %v3488 = vadd.f32 0.0, %v3487
      %v3489 = vpop.f32.mrf.mxu0
      %3490 = vmatprep.mubr.f32.mxu0 0.0
      %3491 = vmatmul.mubr.f32.gmra.mxu0 %v3396
      %v3492 = vpop.f32.mrf.mxu0
      %v3493 = vadd.f32 0.0, %v3492
      %v3494 = vpop.f32.mrf.mxu0
      %3495 = vdwg.mxu0
      %v3496 = vadd.f32 %v3365, %v3468
      %v3497 = vadd.f32 %v3366, %v3473
      %v3498 = vadd.f32 %v3367, %v3478
      %v3499 = vadd.f32 %v3368, %v3483
      %v3500 = vadd.f32 %v3369, %v3488
      %v3501 = vadd.f32 %v3370, %v3493
      %s3502 = scalar_lea.vmem %s345, %s1143
      %v3503 = vld [vmem:[%s3502] sm:$0xff]
      %v3504 = vld [vmem:[%s3502 + $0x8] sm:$0xff]
      %v3505 = vld [vmem:[%s3502 + $0x10] sm:$0xff]
      %v3506 = vld [vmem:[%s3502 + $0x18] sm:$0xff]
      %v3507 = vld [vmem:[%s3502 + $0x20] sm:$0xff]
      %v3508 = vld [vmem:[%s3502 + $0x28] sm:$0xff]
      %s3509 = scalar_lea.vmem %s3, 96
      %v3510 = vld [vmem:[%s3509] sm:$0xf]
      %v3512 = vsel %vm381, %v3503, 0
      %v3515 = vsel %vm381, %v3504, 0
      %v3518 = vsel %vm381, %v3505, 0
      %v3521 = vsel %vm381, %v3506, 0
      %v3524 = vsel %vm381, %v3507, 0
      %v3527 = vsel %vm381, %v3508, 0
      %v3530 = vsel %vm400, %v3510, 0
      %3532 = vmatprep.subr.mxu0 0.0
      %3533 = vmatpush1.msra.mxu0 0.0
      %3534 = vmatprep.subr.mxu0 0.0
      %3535 = vmatpush1.msra.mxu0 0.0
      %3536 = vmatprep.subr.mxu0 0.0
      %3537 = vmatpush1.msra.mxu0 0.0
      %3538 = vmatprep.subr.mxu0 0.0
      %3539 = vmatpush1.msra.mxu0 0.0
      %3540 = vmatprep.subr.mxu0 0.0
      %3541 = vmatpush1.msra.mxu0 0.0
      %3542 = vmatprep.subr.mxu0 0.0
      %3543 = vmatpush1.msra.mxu0 0.0
      %3544 = vmatprep.subr.mxu0 0.0
      %3545 = vmatpush1.msra.mxu0 0.0
      %3546 = vmatprep.subr.mxu0 0.0
      %3547 = vmatpush1.msra.mxu0 0.0
      %3548 = vmatprep.subr.mxu0 0.0
      %3549 = vmatpush1.msra.mxu0 0.0
      %3550 = vmatprep.subr.mxu0 0.0
      %3551 = vmatpush1.msra.mxu0 0.0
      %3552 = vmatprep.subr.mxu0 0.0
      %3553 = vmatpush1.msra.mxu0 0.0
      %3554 = vmatprep.subr.mxu0 0.0
      %3555 = vmatpush1.msra.mxu0 0.0
      %3556 = vmatprep.subr.mxu0 0.0
      %3557 = vmatpush1.msra.mxu0 0.0
      %3558 = vmatprep.subr.mxu0 0.0
      %3559 = vmatpush1.msra.mxu0 0.0
      %3560 = vmatprep.subr.mxu0 0.0
      %3561 = vmatpush1.msra.mxu0 0.0
      %3562 = vmatprep.subr.mxu0 0.0
      %3563 = vmatpush1.msra.mxu0 %v3530
      %3564 = vmatprep.subr.mxu0 0.0
      %3565 = vmatpush2.msra.mxu0 0.0
      %3566 = vmatprep.subr.mxu0 0.0
      %3567 = vmatpush2.msra.mxu0 0.0
      %3568 = vmatprep.subr.mxu0 0.0
      %3569 = vmatpush2.msra.mxu0 0.0
      %3570 = vmatprep.subr.mxu0 0.0
      %3571 = vmatpush2.msra.mxu0 0.0
      %3572 = vmatprep.subr.mxu0 0.0
      %3573 = vmatpush2.msra.mxu0 0.0
      %3574 = vmatprep.subr.mxu0 0.0
      %3575 = vmatpush2.msra.mxu0 0.0
      %3576 = vmatprep.subr.mxu0 0.0
      %3577 = vmatpush2.msra.mxu0 0.0
      %3578 = vmatprep.subr.mxu0 0.0
      %3579 = vmatpush2.msra.mxu0 0.0
      %3580 = vmatprep.subr.mxu0 0.0
      %3581 = vmatpush2.msra.mxu0 0.0
      %3582 = vmatprep.subr.mxu0 0.0
      %3583 = vmatpush2.msra.mxu0 0.0
      %3584 = vmatprep.subr.mxu0 0.0
      %3585 = vmatpush2.msra.mxu0 0.0
      %3586 = vmatprep.subr.mxu0 0.0
      %3587 = vmatpush2.msra.mxu0 0.0
      %3588 = vmatprep.subr.mxu0 0.0
      %3589 = vmatpush2.msra.mxu0 0.0
      %3590 = vmatprep.subr.mxu0 0.0
      %3591 = vmatpush2.msra.mxu0 0.0
      %3592 = vmatprep.subr.mxu0 0.0
      %3593 = vmatpush2.msra.mxu0 0.0
      %3594 = vmatprep.subr.mxu0 0.0
      %3595 = vmatpush2.msra.mxu0 0.0
      %3596 = vmatprep.mubr.f32.mxu0 0.0
      %3597 = vmatmul.mubr.f32.gmra.mxu0 %v3512
      %v3598 = vpop.f32.mrf.mxu0
      %v3599 = vadd.f32 0.0, %v3598
      %v3600 = vpop.f32.mrf.mxu0
      %3601 = vmatprep.mubr.f32.mxu0 0.0
      %3602 = vmatmul.mubr.f32.gmra.mxu0 %v3515
      %v3603 = vpop.f32.mrf.mxu0
      %v3604 = vadd.f32 0.0, %v3603
      %v3605 = vpop.f32.mrf.mxu0
      %3606 = vmatprep.mubr.f32.mxu0 0.0
      %3607 = vmatmul.mubr.f32.gmra.mxu0 %v3518
      %v3608 = vpop.f32.mrf.mxu0
      %v3609 = vadd.f32 0.0, %v3608
      %v3610 = vpop.f32.mrf.mxu0
      %3611 = vmatprep.mubr.f32.mxu0 0.0
      %3612 = vmatmul.mubr.f32.gmra.mxu0 %v3521
      %v3613 = vpop.f32.mrf.mxu0
      %v3614 = vadd.f32 0.0, %v3613
      %v3615 = vpop.f32.mrf.mxu0
      %3616 = vmatprep.mubr.f32.mxu0 0.0
      %3617 = vmatmul.mubr.f32.gmra.mxu0 %v3524
      %v3618 = vpop.f32.mrf.mxu0
      %v3619 = vadd.f32 0.0, %v3618
      %v3620 = vpop.f32.mrf.mxu0
      %3621 = vmatprep.mubr.f32.mxu0 0.0
      %3622 = vmatmul.mubr.f32.gmra.mxu0 %v3527
      %v3623 = vpop.f32.mrf.mxu0
      %v3624 = vadd.f32 0.0, %v3623
      %v3625 = vpop.f32.mrf.mxu0
      %3626 = vdwg.mxu0
      %v3627 = vadd.f32 %v3496, %v3599
      %v3628 = vadd.f32 %v3497, %v3604
      %v3629 = vadd.f32 %v3498, %v3609
      %v3630 = vadd.f32 %v3499, %v3614
      %v3631 = vadd.f32 %v3500, %v3619
      %v3632 = vadd.f32 %v3501, %v3624
      %s3633 = scalar_lea.vmem %s345, %s1275
      %v3634 = vld [vmem:[%s3633] sm:$0xff]
      %v3635 = vld [vmem:[%s3633 + $0x8] sm:$0xff]
      %v3636 = vld [vmem:[%s3633 + $0x10] sm:$0xff]
      %v3637 = vld [vmem:[%s3633 + $0x18] sm:$0xff]
      %v3638 = vld [vmem:[%s3633 + $0x20] sm:$0xff]
      %v3639 = vld [vmem:[%s3633 + $0x28] sm:$0xff]
      %s3640 = scalar_lea.vmem %s3, 100
      %v3641 = vld [vmem:[%s3640] sm:$0xf]
      %v3643 = vsel %vm381, %v3634, 0
      %v3646 = vsel %vm381, %v3635, 0
      %v3649 = vsel %vm381, %v3636, 0
      %v3652 = vsel %vm381, %v3637, 0
      %v3655 = vsel %vm381, %v3638, 0
      %v3658 = vsel %vm381, %v3639, 0
      %v3661 = vsel %vm400, %v3641, 0
      %3663 = vmatprep.subr.mxu0 0.0
      %3664 = vmatpush1.msra.mxu0 0.0
      %3665 = vmatprep.subr.mxu0 0.0
      %3666 = vmatpush1.msra.mxu0 0.0
      %3667 = vmatprep.subr.mxu0 0.0
      %3668 = vmatpush1.msra.mxu0 0.0
      %3669 = vmatprep.subr.mxu0 0.0
      %3670 = vmatpush1.msra.mxu0 0.0
      %3671 = vmatprep.subr.mxu0 0.0
      %3672 = vmatpush1.msra.mxu0 0.0
      %3673 = vmatprep.subr.mxu0 0.0
      %3674 = vmatpush1.msra.mxu0 0.0
      %3675 = vmatprep.subr.mxu0 0.0
      %3676 = vmatpush1.msra.mxu0 0.0
      %3677 = vmatprep.subr.mxu0 0.0
      %3678 = vmatpush1.msra.mxu0 0.0
      %3679 = vmatprep.subr.mxu0 0.0
      %3680 = vmatpush1.msra.mxu0 0.0
      %3681 = vmatprep.subr.mxu0 0.0
      %3682 = vmatpush1.msra.mxu0 0.0
      %3683 = vmatprep.subr.mxu0 0.0
      %3684 = vmatpush1.msra.mxu0 0.0
      %3685 = vmatprep.subr.mxu0 0.0
      %3686 = vmatpush1.msra.mxu0 0.0
      %3687 = vmatprep.subr.mxu0 0.0
      %3688 = vmatpush1.msra.mxu0 0.0
      %3689 = vmatprep.subr.mxu0 0.0
      %3690 = vmatpush1.msra.mxu0 0.0
      %3691 = vmatprep.subr.mxu0 0.0
      %3692 = vmatpush1.msra.mxu0 0.0
      %3693 = vmatprep.subr.mxu0 0.0
      %3694 = vmatpush1.msra.mxu0 %v3661
      %3695 = vmatprep.subr.mxu0 0.0
      %3696 = vmatpush2.msra.mxu0 0.0
      %3697 = vmatprep.subr.mxu0 0.0
      %3698 = vmatpush2.msra.mxu0 0.0
      %3699 = vmatprep.subr.mxu0 0.0
      %3700 = vmatpush2.msra.mxu0 0.0
      %3701 = vmatprep.subr.mxu0 0.0
      %3702 = vmatpush2.msra.mxu0 0.0
      %3703 = vmatprep.subr.mxu0 0.0
      %3704 = vmatpush2.msra.mxu0 0.0
      %3705 = vmatprep.subr.mxu0 0.0
      %3706 = vmatpush2.msra.mxu0 0.0
      %3707 = vmatprep.subr.mxu0 0.0
      %3708 = vmatpush2.msra.mxu0 0.0
      %3709 = vmatprep.subr.mxu0 0.0
      %3710 = vmatpush2.msra.mxu0 0.0
      %3711 = vmatprep.subr.mxu0 0.0
      %3712 = vmatpush2.msra.mxu0 0.0
      %3713 = vmatprep.subr.mxu0 0.0
      %3714 = vmatpush2.msra.mxu0 0.0
      %3715 = vmatprep.subr.mxu0 0.0
      %3716 = vmatpush2.msra.mxu0 0.0
      %3717 = vmatprep.subr.mxu0 0.0
      %3718 = vmatpush2.msra.mxu0 0.0
      %3719 = vmatprep.subr.mxu0 0.0
      %3720 = vmatpush2.msra.mxu0 0.0
      %3721 = vmatprep.subr.mxu0 0.0
      %3722 = vmatpush2.msra.mxu0 0.0
      %3723 = vmatprep.subr.mxu0 0.0
      %3724 = vmatpush2.msra.mxu0 0.0
      %3725 = vmatprep.subr.mxu0 0.0
      %3726 = vmatpush2.msra.mxu0 0.0
      %3727 = vmatprep.mubr.f32.mxu0 0.0
      %3728 = vmatmul.mubr.f32.gmra.mxu0 %v3643
      %v3729 = vpop.f32.mrf.mxu0
      %v3730 = vadd.f32 0.0, %v3729
      %v3731 = vpop.f32.mrf.mxu0
      %3732 = vmatprep.mubr.f32.mxu0 0.0
      %3733 = vmatmul.mubr.f32.gmra.mxu0 %v3646
      %v3734 = vpop.f32.mrf.mxu0
      %v3735 = vadd.f32 0.0, %v3734
      %v3736 = vpop.f32.mrf.mxu0
      %3737 = vmatprep.mubr.f32.mxu0 0.0
      %3738 = vmatmul.mubr.f32.gmra.mxu0 %v3649
      %v3739 = vpop.f32.mrf.mxu0
      %v3740 = vadd.f32 0.0, %v3739
      %v3741 = vpop.f32.mrf.mxu0
      %3742 = vmatprep.mubr.f32.mxu0 0.0
      %3743 = vmatmul.mubr.f32.gmra.mxu0 %v3652
      %v3744 = vpop.f32.mrf.mxu0
      %v3745 = vadd.f32 0.0, %v3744
      %v3746 = vpop.f32.mrf.mxu0
      %3747 = vmatprep.mubr.f32.mxu0 0.0
      %3748 = vmatmul.mubr.f32.gmra.mxu0 %v3655
      %v3749 = vpop.f32.mrf.mxu0
      %v3750 = vadd.f32 0.0, %v3749
      %v3751 = vpop.f32.mrf.mxu0
      %3752 = vmatprep.mubr.f32.mxu0 0.0
      %3753 = vmatmul.mubr.f32.gmra.mxu0 %v3658
      %v3754 = vpop.f32.mrf.mxu0
      %v3755 = vadd.f32 0.0, %v3754
      %v3756 = vpop.f32.mrf.mxu0
      %3757 = vdwg.mxu0
      %v3758 = vadd.f32 %v3627, %v3730
      %v3759 = vadd.f32 %v3628, %v3735
      %v3760 = vadd.f32 %v3629, %v3740
      %v3761 = vadd.f32 %v3630, %v3745
      %v3762 = vadd.f32 %v3631, %v3750
      %v3763 = vadd.f32 %v3632, %v3755
      %s3764 = scalar_lea.vmem %s345, %s1407
      %v3765 = vld [vmem:[%s3764] sm:$0xff]
      %v3766 = vld [vmem:[%s3764 + $0x8] sm:$0xff]
      %v3767 = vld [vmem:[%s3764 + $0x10] sm:$0xff]
      %v3768 = vld [vmem:[%s3764 + $0x18] sm:$0xff]
      %v3769 = vld [vmem:[%s3764 + $0x20] sm:$0xff]
      %v3770 = vld [vmem:[%s3764 + $0x28] sm:$0xff]
      %s3771 = scalar_lea.vmem %s3, 104
      %v3772 = vld [vmem:[%s3771] sm:$0xf]
      %v3774 = vsel %vm381, %v3765, 0
      %v3777 = vsel %vm381, %v3766, 0
      %v3780 = vsel %vm381, %v3767, 0
      %v3783 = vsel %vm381, %v3768, 0
      %v3786 = vsel %vm381, %v3769, 0
      %v3789 = vsel %vm381, %v3770, 0
      %v3792 = vsel %vm400, %v3772, 0
      %3794 = vmatprep.subr.mxu0 0.0
      %3795 = vmatpush1.msra.mxu0 0.0
      %3796 = vmatprep.subr.mxu0 0.0
      %3797 = vmatpush1.msra.mxu0 0.0
      %3798 = vmatprep.subr.mxu0 0.0
      %3799 = vmatpush1.msra.mxu0 0.0
      %3800 = vmatprep.subr.mxu0 0.0
      %3801 = vmatpush1.msra.mxu0 0.0
      %3802 = vmatprep.subr.mxu0 0.0
      %3803 = vmatpush1.msra.mxu0 0.0
      %3804 = vmatprep.subr.mxu0 0.0
      %3805 = vmatpush1.msra.mxu0 0.0
      %3806 = vmatprep.subr.mxu0 0.0
      %3807 = vmatpush1.msra.mxu0 0.0
      %3808 = vmatprep.subr.mxu0 0.0
      %3809 = vmatpush1.msra.mxu0 0.0
      %3810 = vmatprep.subr.mxu0 0.0
      %3811 = vmatpush1.msra.mxu0 0.0
      %3812 = vmatprep.subr.mxu0 0.0
      %3813 = vmatpush1.msra.mxu0 0.0
      %3814 = vmatprep.subr.mxu0 0.0
      %3815 = vmatpush1.msra.mxu0 0.0
      %3816 = vmatprep.subr.mxu0 0.0
      %3817 = vmatpush1.msra.mxu0 0.0
      %3818 = vmatprep.subr.mxu0 0.0
      %3819 = vmatpush1.msra.mxu0 0.0
      %3820 = vmatprep.subr.mxu0 0.0
      %3821 = vmatpush1.msra.mxu0 0.0
      %3822 = vmatprep.subr.mxu0 0.0
      %3823 = vmatpush1.msra.mxu0 0.0
      %3824 = vmatprep.subr.mxu0 0.0
      %3825 = vmatpush1.msra.mxu0 %v3792
      %3826 = vmatprep.subr.mxu0 0.0
      %3827 = vmatpush2.msra.mxu0 0.0
      %3828 = vmatprep.subr.mxu0 0.0
      %3829 = vmatpush2.msra.mxu0 0.0
      %3830 = vmatprep.subr.mxu0 0.0
      %3831 = vmatpush2.msra.mxu0 0.0
      %3832 = vmatprep.subr.mxu0 0.0
      %3833 = vmatpush2.msra.mxu0 0.0
      %3834 = vmatprep.subr.mxu0 0.0
      %3835 = vmatpush2.msra.mxu0 0.0
      %3836 = vmatprep.subr.mxu0 0.0
      %3837 = vmatpush2.msra.mxu0 0.0
      %3838 = vmatprep.subr.mxu0 0.0
      %3839 = vmatpush2.msra.mxu0 0.0
      %3840 = vmatprep.subr.mxu0 0.0
      %3841 = vmatpush2.msra.mxu0 0.0
      %3842 = vmatprep.subr.mxu0 0.0
      %3843 = vmatpush2.msra.mxu0 0.0
      %3844 = vmatprep.subr.mxu0 0.0
      %3845 = vmatpush2.msra.mxu0 0.0
      %3846 = vmatprep.subr.mxu0 0.0
      %3847 = vmatpush2.msra.mxu0 0.0
      %3848 = vmatprep.subr.mxu0 0.0
      %3849 = vmatpush2.msra.mxu0 0.0
      %3850 = vmatprep.subr.mxu0 0.0
      %3851 = vmatpush2.msra.mxu0 0.0
      %3852 = vmatprep.subr.mxu0 0.0
      %3853 = vmatpush2.msra.mxu0 0.0
      %3854 = vmatprep.subr.mxu0 0.0
      %3855 = vmatpush2.msra.mxu0 0.0
      %3856 = vmatprep.subr.mxu0 0.0
      %3857 = vmatpush2.msra.mxu0 0.0
      %3858 = vmatprep.mubr.f32.mxu0 0.0
      %3859 = vmatmul.mubr.f32.gmra.mxu0 %v3774
      %v3860 = vpop.f32.mrf.mxu0
      %v3861 = vadd.f32 0.0, %v3860
      %v3862 = vpop.f32.mrf.mxu0
      %3863 = vmatprep.mubr.f32.mxu0 0.0
      %3864 = vmatmul.mubr.f32.gmra.mxu0 %v3777
      %v3865 = vpop.f32.mrf.mxu0
      %v3866 = vadd.f32 0.0, %v3865
      %v3867 = vpop.f32.mrf.mxu0
      %3868 = vmatprep.mubr.f32.mxu0 0.0
      %3869 = vmatmul.mubr.f32.gmra.mxu0 %v3780
      %v3870 = vpop.f32.mrf.mxu0
      %v3871 = vadd.f32 0.0, %v3870
      %v3872 = vpop.f32.mrf.mxu0
      %3873 = vmatprep.mubr.f32.mxu0 0.0
      %3874 = vmatmul.mubr.f32.gmra.mxu0 %v3783
      %v3875 = vpop.f32.mrf.mxu0
      %v3876 = vadd.f32 0.0, %v3875
      %v3877 = vpop.f32.mrf.mxu0
      %3878 = vmatprep.mubr.f32.mxu0 0.0
      %3879 = vmatmul.mubr.f32.gmra.mxu0 %v3786
      %v3880 = vpop.f32.mrf.mxu0
      %v3881 = vadd.f32 0.0, %v3880
      %v3882 = vpop.f32.mrf.mxu0
      %3883 = vmatprep.mubr.f32.mxu0 0.0
      %3884 = vmatmul.mubr.f32.gmra.mxu0 %v3789
      %v3885 = vpop.f32.mrf.mxu0
      %v3886 = vadd.f32 0.0, %v3885
      %v3887 = vpop.f32.mrf.mxu0
      %3888 = vdwg.mxu0
      %v3889 = vadd.f32 %v3758, %v3861
      %v3890 = vadd.f32 %v3759, %v3866
      %v3891 = vadd.f32 %v3760, %v3871
      %v3892 = vadd.f32 %v3761, %v3876
      %v3893 = vadd.f32 %v3762, %v3881
      %v3894 = vadd.f32 %v3763, %v3886
      %v3895 = vlaneseq
      %v3896 = vshrl.u32 %v3895, 7
      %v3897 = vadd.s32 %v3896, 8
      %v3898 = vadd.s32 %v3896, 16
      %v3899 = vadd.s32 %v3896, 24
      %v3900 = vadd.s32 %v3896, 32
      %v3901 = vadd.s32 %v3896, 40
      %v3902 = vstv 0
      %v3903 = vadd.s32 %v3902, %v3896
      %v3904 = vadd.s32 %v3902, %v3897
      %v3905 = vadd.s32 %v3902, %v3898
      %v3906 = vadd.s32 %v3902, %v3899
      %v3907 = vadd.s32 %v3902, %v3900
      %v3908 = vadd.s32 %v3902, %v3901
      %vm3909 = vcmp.lt.s32.totalorder %v3903, 48
      %vm3910 = vcmp.lt.s32.totalorder %v3904, 48
      %vm3911 = vcmp.lt.s32.totalorder %v3905, 48
      %vm3912 = vcmp.lt.s32.totalorder %v3906, 48
      %vm3913 = vcmp.lt.s32.totalorder %v3907, 48
      %vm3914 = vcmp.lt.s32.totalorder %v3908, 48
      %vm3915 = vcmp.lt.s32.totalorder %v3903, 0
      %v3916 = vsub.s32 0, %v3903
      %v3917 = vsel %vm3915, %v3916, %v3903
      %v3918 = vshrl.u32 %v3917, 3
      %v3919 = vand.u32 %v3917, 7
      %v3920 = vsub.s32 0, %v3919
      %v3921 = vsel %vm3915, %v3920, %v3919
      %vm3922 = vcmp.lt.s32.totalorder %v3904, 0
      %v3923 = vsub.s32 0, %v3904
      %v3924 = vsel %vm3922, %v3923, %v3904
      %v3925 = vshrl.u32 %v3924, 3
      %v3926 = vand.u32 %v3924, 7
      %v3927 = vsub.s32 0, %v3926
      %v3928 = vsel %vm3922, %v3927, %v3926
      %vm3929 = vcmp.lt.s32.totalorder %v3905, 0
      %v3930 = vsub.s32 0, %v3905
      %v3931 = vsel %vm3929, %v3930, %v3905
      %v3932 = vshrl.u32 %v3931, 3
      %v3933 = vand.u32 %v3931, 7
      %v3934 = vsub.s32 0, %v3933
      %v3935 = vsel %vm3929, %v3934, %v3933
      %vm3936 = vcmp.lt.s32.totalorder %v3906, 0
      %v3937 = vsub.s32 0, %v3906
      %v3938 = vsel %vm3936, %v3937, %v3906
      %v3939 = vshrl.u32 %v3938, 3
      %v3940 = vand.u32 %v3938, 7
      %v3941 = vsub.s32 0, %v3940
      %v3942 = vsel %vm3936, %v3941, %v3940
      %vm3943 = vcmp.lt.s32.totalorder %v3907, 0
      %v3944 = vsub.s32 0, %v3907
      %v3945 = vsel %vm3943, %v3944, %v3907
      %v3946 = vshrl.u32 %v3945, 3
      %v3947 = vand.u32 %v3945, 7
      %v3948 = vsub.s32 0, %v3947
      %v3949 = vsel %vm3943, %v3948, %v3947
      %vm3950 = vcmp.lt.s32.totalorder %v3908, 0
      %v3951 = vsub.s32 0, %v3908
      %v3952 = vsel %vm3950, %v3951, %v3908
      %v3953 = vshrl.u32 %v3952, 3
      %v3954 = vand.u32 %v3952, 7
      %v3955 = vsub.s32 0, %v3954
      %v3956 = vsel %vm3950, %v3955, %v3954
      %vm3957 = vcmp.ne.s32.totalorder %v3921, 0
      %vm3958 = vcmp.ne.s32.totalorder %v3928, 0
      %vm3959 = vcmp.ne.s32.totalorder %v3935, 0
      %vm3960 = vcmp.ne.s32.totalorder %v3942, 0
      %vm3961 = vcmp.ne.s32.totalorder %v3949, 0
      %vm3962 = vcmp.ne.s32.totalorder %v3956, 0
      %vm3963 = vcmp.lt.s32.totalorder %v3921, 0
      %vm3964 = vcmp.lt.s32.totalorder %v3928, 0
      %vm3965 = vcmp.lt.s32.totalorder %v3935, 0
      %vm3966 = vcmp.lt.s32.totalorder %v3942, 0
      %vm3967 = vcmp.lt.s32.totalorder %v3949, 0
      %vm3968 = vcmp.lt.s32.totalorder %v3956, 0
      %vm3969 = vmand %vm3963, %vm3957
      %vm3970 = vmand %vm3964, %vm3958
      %vm3971 = vmand %vm3965, %vm3959
      %vm3972 = vmand %vm3966, %vm3960
      %vm3973 = vmand %vm3967, %vm3961
      %vm3974 = vmand %vm3968, %vm3962
      %v3975 = vadd.s32 %v3921, 8
      %v3976 = vadd.s32 %v3928, 8
      %v3977 = vadd.s32 %v3935, 8
      %v3978 = vadd.s32 %v3942, 8
      %v3979 = vadd.s32 %v3949, 8
      %v3980 = vadd.s32 %v3956, 8
      %v3981 = vsel %vm3969, %v3975, %v3921
      %v3982 = vsel %vm3970, %v3976, %v3928
      %v3983 = vsel %vm3971, %v3977, %v3935
      %v3984 = vsel %vm3972, %v3978, %v3942
      %v3985 = vsel %vm3973, %v3979, %v3949
      %v3986 = vsel %vm3974, %v3980, %v3956
      %vm3987 = vcmp.lt.s32.totalorder %v3981, 6
      %vm3988 = vcmp.lt.s32.totalorder %v3982, 6
      %vm3989 = vcmp.lt.s32.totalorder %v3983, 6
      %vm3990 = vcmp.lt.s32.totalorder %v3984, 6
      %vm3991 = vcmp.lt.s32.totalorder %v3985, 6
      %vm3992 = vcmp.lt.s32.totalorder %v3986, 6
      %vm3993 = vmand %vm3909, %vm3987
      %vm3994 = vmand %vm3910, %vm3988
      %vm3995 = vmand %vm3911, %vm3989
      %vm3996 = vmand %vm3912, %vm3990
      %vm3997 = vmand %vm3913, %vm3991
      %vm3998 = vmand %vm3914, %vm3992
      %v3999 = vsel %vm3993, 1, 0
      %v4000 = vsel %vm3994, 1, 0
      %v4001 = vsel %vm3995, 1, 0
      %v4002 = vsel %vm3996, 1, 0
      %v4003 = vsel %vm3997, 1, 0
      %v4004 = vsel %vm3998, 1, 0
      %vm4005 = vcmp.eq.s32.totalorder %v3999, 1
      %vm4006 = vcmp.eq.s32.totalorder %v4000, 1
      %vm4007 = vcmp.eq.s32.totalorder %v4001, 1
      %vm4008 = vcmp.eq.s32.totalorder %v4002, 1
      %vm4009 = vcmp.eq.s32.totalorder %v4003, 1
      %vm4010 = vcmp.eq.s32.totalorder %v4004, 1
      %v4011 = vsel %vm4005, %v3889, 0.0
      %v4012 = vsel %vm4006, %v3890, 0.0
      %v4013 = vsel %vm4007, %v3891, 0.0
      %v4014 = vsel %vm4008, %v3892, 0.0
      %v4015 = vsel %vm4009, %v3893, 0.0
      %v4016 = vsel %vm4010, %v3894, 0.0
      %vm4017 = vcmask 64512
      %v4018 = vsel %vm4017, %v4011, 0.0
      %v4019 = vsel %vm4017, %v4012, 0.0
      %v4020 = vadd.f32 %v4018, %v4019
      %v4021 = vsel %vm4017, %v4013, 0.0
      %v4022 = vadd.f32 %v4020, %v4021
      %v4023 = vsel %vm4017, %v4014, 0.0
      %v4024 = vadd.f32 %v4022, %v4023
      %v4025 = vsel %vm4017, %v4015, 0.0
      %v4026 = vadd.f32 %v4024, %v4025
      %v4027 = vsel %vm4017, %v4016, 0.0
      %v4028 = vadd.f32 %v4026, %v4027
      %v4029 = vrot.slane %v4028, 4
      %v4030 = vadd.f32 %v4028, %v4029
      %v4031 = vrot.slane %v4030, 2
      %v4032 = vadd.f32 %v4030, %v4031
      %v4033 = vrot.slane %v4032, 1
      %v4034 = vadd.f32 %v4032, %v4033
      %v4035 = vadd.f32 %v4034, 0.0
      %v4036 = vmul.f32 %v4011, %v4011
      %v4037 = vmul.f32 %v4012, %v4012
      %v4038 = vmul.f32 %v4013, %v4013
      %v4039 = vmul.f32 %v4014, %v4014
      %v4040 = vmul.f32 %v4015, %v4015
      %v4041 = vmul.f32 %v4016, %v4016
      %v4042 = vsel %vm4017, %v4036, 0.0
      %v4043 = vsel %vm4017, %v4037, 0.0
      %v4044 = vadd.f32 %v4042, %v4043
      %v4045 = vsel %vm4017, %v4038, 0.0
      %v4046 = vadd.f32 %v4044, %v4045
      %v4047 = vsel %vm4017, %v4039, 0.0
      %v4048 = vadd.f32 %v4046, %v4047
      %v4049 = vsel %vm4017, %v4040, 0.0
      %v4050 = vadd.f32 %v4048, %v4049
      %v4051 = vsel %vm4017, %v4041, 0.0
      %v4052 = vadd.f32 %v4050, %v4051
      %v4053 = vrot.slane %v4052, 4
      %v4054 = vadd.f32 %v4052, %v4053
      %v4055 = vrot.slane %v4054, 2
      %v4056 = vadd.f32 %v4054, %v4055
      %v4057 = vrot.slane %v4056, 1
      %v4058 = vadd.f32 %v4056, %v4057
      %v4059 = vadd.f32 %v4058, 0.0
      %4060 = vst.msk [vmem:[%s355] sm:$0xff] %vm4017, %v3889
      %4061 = vst.msk [vmem:[%s355 + $0x8] sm:$0xff] %vm4017, %v3890
      %4062 = vst.msk [vmem:[%s355 + $0x10] sm:$0xff] %vm4017, %v3891
      %4063 = vst.msk [vmem:[%s355 + $0x18] sm:$0xff] %vm4017, %v3892
      %4064 = vst.msk [vmem:[%s355 + $0x20] sm:$0xff] %vm4017, %v3893
      %4065 = vst.msk [vmem:[%s355 + $0x28] sm:$0xff] %vm4017, %v3894
      %vm4066 = vcmask 1040384
      %v4067 = vsel %vm4066, %v4035, %v4059
      %vm4068 = vcmask 58368
      %4069 = vst.msk [vmem:[%s363] sm:$0x3] %vm4068, %v4067
      %p4070 = scmp.lt.s32.totalorder %s21, 1
      %s4071 = scalar_select %p4070, %s21, 1
      %p4072 = scmp.lt.s32.totalorder %s22, 5
      %s4073 = scalar_select %p4072, %s22, 5
      %s4074 = smul.addr %s4073, 6
      %s4075 = smul.addr %s4071, 36
      %s4076 = sadd.s32 %s4074, %s4075
      %s4077 = smul.addr %s4076, 8
      %s4078 = scalar_lea.vmem %s4, %s4077
      %p4079 = scmp.lt.s32.totalorder %s21, 1
      %s4080 = scalar_select %p4079, %s21, 1
      %p4081 = scmp.lt.s32.totalorder %s22, 5
      %s4082 = scalar_select %p4081, %s22, 5
      %s4083 = smul.addr %s4080, 6
      %s4084 = sadd.s32 %s4082, %s4083
      %s4085 = smul.addr %s4084, 2
      %s4086 = scalar_lea.vmem %s5, %s4085
      // Predicated region
      $region37: #{conv3_block.2} parent=35 // pred_check
        %p4087 = pneg %p158
      $region38: #{conv3_block.2} parent=35 // pred_check_branch
        %4089 = sbr.rel (%p4087) target = $region40
      $region39: #{conv3_block.2} parent=35 // pred_region
        _
      $region40: #{conv3_block.2} parent=35 // pred_fallthru
        _
      // Predicated region
      $region41: #{conv3_block.2} parent=35 // pred_check
        %p4090 = pneg %p186
      $region42: #{conv3_block.2} parent=35 // pred_check_branch
        %4092 = sbr.rel (%p4090) target = $region44
      $region43: #{conv3_block.2} parent=35 // pred_region
        _
      $region44: #{conv3_block.2} parent=35 // pred_fallthru
        _
    $region36: #{conv3_block.2} parent=5 // pred_fallthru
      _
    %p4093 = scmp.le.s32.totalorder 2, %s12
    // Predicated region
    $region45: #{conv3_block.2} parent=5 // pred_check
      %p4094 = pneg %p4093
    $region46: #{conv3_block.2} parent=5 // pred_check_branch
      %4096 = sbr.rel (%p4094) target = $region48
    $region47: #{conv3_block.2} parent=5 // pred_region
      %s4097 = ssub.s32 %s12, 2
      // Predicated region
      $region49: #{conv3_block.2} parent=47 // pred_check
        %p4098 = pneg %p164
      $region50: #{conv3_block.2} parent=47 // pred_check_branch
        %4100 = sbr.rel (%p4098) target = $region52
      $region51: #{conv3_block.2} parent=47 // pred_region
        %p4101 = scmp.lt.s32.totalorder %s23, 1
        %s4102 = scalar_select %p4101, %s23, 1
        %p4103 = scmp.lt.s32.totalorder %s24, 5
        %s4104 = scalar_select %p4103, %s24, 5
        %s4105 = smul.addr %s4104, 6
        %s4106 = smul.addr %s4102, 36
        %s4107 = sadd.s32 %s4105, %s4106
        %s4108 = smul.addr %s4107, 8
        %s4109 = scalar_lea.vmem %s4, %s4108
      $region52: #{conv3_block.2} parent=47 // pred_fallthru
        _
      // Predicated region
      $region53: #{conv3_block.2} parent=47 // pred_check
        %p4110 = pneg %p192
      $region54: #{conv3_block.2} parent=47 // pred_check_branch
        %4112 = sbr.rel (%p4110) target = $region56
      $region55: #{conv3_block.2} parent=47 // pred_region
        %p4113 = scmp.lt.s32.totalorder %s23, 1
        %s4114 = scalar_select %p4113, %s23, 1
        %p4115 = scmp.lt.s32.totalorder %s24, 5
        %s4116 = scalar_select %p4115, %s24, 5
        %s4117 = smul.addr %s4114, 6
        %s4118 = sadd.s32 %s4116, %s4117
        %s4119 = smul.addr %s4118, 2
        %s4120 = scalar_lea.vmem %s5, %s4119
      $region56: #{conv3_block.2} parent=47 // pred_fallthru
        _
    $region48: #{conv3_block.2} parent=5 // pred_fallthru
      _
  $region6: #{conv3_block.2} parent=0 // loop_footer
    %s16 = sadd.s32 1, %s12
  $region7: #{conv3_block.2} parent=0 // loop_footer_branch
    %11 = sbr.rel target = $region3
  $region8: #{conv3_block.2} parent=0 // loop_exit
    _

</llo_original>
